<compile_context>
chip_gen: v7x
topology: tpu7x:2x2x1
jax: 0.10.0
libtpu: 0.0.40
codegen_flags: <defaults>
</compile_context>

<pallas_src>
import functools

import jax
import jax.numpy as jnp
from jax import lax
from jax.experimental import pallas as pl
from jax.experimental.pallas import tpu as pltpu


# ---------------------------------------------------------------------------
# Pallas kernel
# ---------------------------------------------------------------------------
def _i2ed_kernel(
    # sequence inputs (time-major, flattened, lane-dense 2-D)
    seqs_ref,       # (T*B, D)   row t*B+b == seqs[b, t, :]
    mask_bt_ref,    # (B, T)     1.0 = valid, 0.0 = padded
    mask_col_ref,   # (T*B, 1)   same mask, time-major column
    allys_ref,      # (T*B, 1)   target history, time-major column
    # encoder-1 GRU + attention params
    e1_wih, e1_whh, e1_bih_f, e1_bhn_f,   # (D,3H) (H,3H) (1,3H) (1,3H)
    wa_bd, va_bd,                         # (T*H,T*H) (T*H,T)  block-diagonal
    # encoder-2 GRU params
    e2_wih, e2_whh, e2_bih_f, e2_bhn_f,   # (1,3H) (H,3H) (1,3H) (1,3H)
    # batchnorm
    bn_g, bn_b,                           # (1,H) (1,H)
    # decoder (head folded into recurrence, feedback half tile-aligned at lane PAD)
    w_dec,          # (H, PAD+3H) = [W_hh | 0 | W_out @ W_ih]
    d_gi0,          # (1, 3H) input-gate preactivation for the x_0 = 0 start token
    d_gif,          # (1, 3H) bias for the folded feedback input preactivation
    d_bhn_f,        # (1, 3H) n-gate hidden bias, zeros in r/z positions
    wo_bd, d_bo,    # (W*H, W) block-diagonal output head, (1,1) bias
    # output
    out_ref,        # (B, OUT_LANES)  [preds | e | att | zero pad]
    *, T, B, D, H, W, PAD, OUT_LANES,
):
    f32 = jnp.float32
    H3 = 3 * H

    def gru_step(gi, h, whh_ref, bhn_f_ref):
        # gi already contains W_ih x + b_ih (+ folded b_hr, b_hz); bhn_f is the n-gate hidden
        # bias padded to full 3H width (zeros at r/z) so it adds to gh with no lane offset.
        gh = jnp.dot(h, whh_ref[...], preferred_element_type=f32) + bhn_f_ref[...]   # (B, 3H)
        r = jax.nn.sigmoid(gi[:, 0:H] + gh[:, 0:H])
        z = jax.nn.sigmoid(gi[:, H:2 * H] + gh[:, H:2 * H])
        n = jnp.tanh(gi[:, 2 * H:H3] + r * gh[:, 2 * H:H3])
        return (1.0 - z) * n + z * h

    mask_bt = mask_bt_ref[...]
    mask_col = mask_col_ref[...]

    # ---------------- encoder 1: GRU + additive attention ------------------
    # Hoisted input projection: one (T*B,D)x(D,3H) matmul with bias folded in.
    gi1_all = (jnp.dot(seqs_ref[...], e1_wih[...], preferred_element_type=f32)
               + e1_bih_f[...])                                            # (T*B, 3H)

    h = jnp.zeros((B, H), f32)
    h_list = []
    for t in range(T):                       # static unroll (T small)
        lo = t * B
        h_new = gru_step(gi1_all[lo:lo + B, :], h, e1_whh, e1_bhn_f)
        m = mask_col[lo:lo + B, :]
        h = m * h_new + (1.0 - m) * h        # freeze state on padded steps
        h_list.append(h)                     # keep in registers (no masked scratch stores)

    # Lane-stacked hidden states: one concat after the loop, off the serial chain.
    hs_wide = jnp.concatenate(h_list, axis=1)                              # (B, T*H)

    # Attention energies with TWO batched matmuls total (block-diagonal wa / va), result lands
    # directly in (B, T) layout — no per-step matvecs, no width-1 concats, no transpose.
    z_wide = jnp.tanh(jnp.dot(hs_wide, wa_bd[...], preferred_element_type=f32))
    e_bt = jnp.dot(z_wide, va_bd[...], preferred_element_type=f32)         # (B, T)

    # masked softmax over time (exact reciprocal; denominator guarded for fully-padded rows)
    valid = (mask_bt > 0.0).astype(f32)
    e_masked = jnp.where(mask_bt > 0.0, e_bt, jnp.float32(-1e30))
    e_max = jnp.max(e_masked, axis=1, keepdims=True)
    p = jnp.exp(e_masked - e_max) * valid
    denom = jnp.maximum(jnp.sum(p, axis=1, keepdims=True), jnp.float32(1e-30))
    att = p * pl.reciprocal(denom, approx=False)

    # context vector: T cheap VPU mul-adds, off the MXU path
    c1 = jnp.zeros((B, H), f32)
    for t in range(T):
        c1 = c1 + att[:, t:t + 1] * h_list[t]

    # ---------------- encoder 2: plain GRU over allys ----------------------
    # dim_seq_in == 1  =>  input projection is a single VPU broadcast for all T steps.
    gi2_all = allys_ref[...] * e2_wih[...] + e2_bih_f[...]                 # (T*B, 3H)
    h2 = jnp.zeros((B, H), f32)
    for t in range(T):
        lo = t * B
        h_new = gru_step(gi2_all[lo:lo + B, :], h2, e2_whh, e2_bhn_f)
        m = mask_col[lo:lo + B, :]
        h2 = m * h_new + (1.0 - m) * h2

    # ---------------- add + BatchNorm1d (training-mode batch stats) --------
    s = c1 + h2
    mu = jnp.mean(s, axis=0, keepdims=True)
    d = s - mu
    var = jnp.mean(d * d, axis=0, keepdims=True)                           # biased
    sum_vec = d * lax.rsqrt(var + 1e-5) * bn_g[...] + bn_b[...]
    # TODO(synk): BatchNorm1d running-mean/var updates (training side effect) are not replicated.

    # ---------------- decoder: folded-head autoregressive GRU --------------
    # One (B,H)x(H,PAD+3H) matmul per step yields this step's hidden-gate preactivations
    # (lanes [0,3H)) and the next step's folded input-gate preactivations, which start exactly
    # at the 128-lane tile boundary PAD so the slice is relayout-free.
    hd = sum_vec
    hd_list = []
    for k in range(W):
        comb = jnp.dot(hd, w_dec[...], preferred_element_type=f32)         # (B, PAD+3H)
        gh = comb[:, 0:H3] + d_bhn_f[...]
        gi = d_gi0[...] if k == 0 else comb[:, PAD:PAD + H3] + d_gif[...]
        r = jax.nn.sigmoid(gi[:, 0:H] + gh[:, 0:H])
        z = jax.nn.sigmoid(gi[:, H:2 * H] + gh[:, H:2 * H])
        n = jnp.tanh(gi[:, 2 * H:H3] + r * gh[:, 2 * H:H3])
        hd = (1.0 - z) * n + z * hd
        hd_list.append(hd)

    # Prediction head: ONE (B,W*H)@(W*H,W) matmul against block-diagonal W_out.
    hd_wide = jnp.concatenate(hd_list, axis=1)                             # (B, W*H)
    preds_bw = (jnp.dot(hd_wide, wo_bd[...], preferred_element_type=f32)
                + d_bo[...])                                               # (B, W)

    # Single lane-dense output slab: [preds | e | att | zero pad] -> one unmasked-lane store.
    parts = [preds_bw, e_bt, att]
    pad_w = OUT_LANES - (W + 2 * T)
    if pad_w > 0:
        parts.append(jnp.zeros((B, pad_w), f32))
    out_ref[...] = jnp.concatenate(parts, axis=1)


# ---------------------------------------------------------------------------
# Parameter construction (deterministic, PyTorch-style uniform init)
# ---------------------------------------------------------------------------
def init_params(key, n_signals, rnn_dim):
    H = rnn_dim
    k = 1.0 / jnp.sqrt(jnp.float32(H))

    def u(key, shape):
        return jax.random.uniform(key, shape, jnp.float32, -k, k)

    keys = jax.random.split(key, 16)
    return {
        # encoder1 GRU (input dim = n_signals)
        "e1_wih": u(keys[0], (3 * H, n_signals)), "e1_whh": u(keys[1], (3 * H, H)),
        "e1_bih": u(keys[2], (3 * H,)),           "e1_bhh": u(keys[3], (3 * H,)),
        # attention
        "wa": u(keys[4], (H, H)),                 "va": u(keys[5], (H,)),
        # encoder2 GRU (input dim = 1)
        "e2_wih": u(keys[6], (3 * H, 1)),         "e2_whh": u(keys[7], (3 * H, H)),
        "e2_bih": u(keys[8], (3 * H,)),           "e2_bhh": u(keys[9], (3 * H,)),
        # batchnorm (affine=True default init)
        "bn_g": jnp.ones((H,), jnp.float32),      "bn_b": jnp.zeros((H,), jnp.float32),
        # decoder GRU (input dim = 1) + linear head (H -> 1)
        "d_wih": u(keys[10], (3 * H, 1)),         "d_whh": u(keys[11], (3 * H, H)),
        "d_bih": u(keys[12], (3 * H,)),           "d_bhh": u(keys[13], (3 * H,)),
        "d_wo": u(keys[14], (1, H)),              "d_bo": u(keys[15], (1,)),
    }


# ---------------------------------------------------------------------------
# Wrapper: layout / constant folding + pallas_call
# ---------------------------------------------------------------------------
def input2encoderdecoder_forward(params, seqs, mask_seqs, allys, wk_ahead):
    """seqs: (B, T, D) f32, mask_seqs: (B, T) f32, allys: (B, T) f32."""
    B, T, D = seqs.shape
    H = params["e1_whh"].shape[1]
    W = wk_ahead
    H3 = 3 * H
    f32 = jnp.float32

    PAD = ((H3 + 127) // 128) * 128                 # feedback-half lane offset in w_dec
    OUT_LANES = max(128, ((W + 2 * T + 127) // 128) * 128)

    # Lane-dense 2-D time-major layouts (row t*B + b == timestep t, batch b).
    seqs_flat = jnp.transpose(seqs, (1, 0, 2)).reshape(T * B, D).astype(f32)
    allys_col = jnp.transpose(allys, (1, 0)).reshape(T * B, 1).astype(f32)
    mask_bt = mask_seqs.astype(f32)
    mask_col = jnp.transpose(mask_seqs, (1, 0)).reshape(T * B, 1).astype(f32)

    tr = lambda m: jnp.transpose(m).astype(f32)      # weight -> (in, out)
    r2 = lambda v: v.reshape(1, -1).astype(f32)      # bias   -> (1, N)

    def fold_biases(bih, bhh):
        # r/z hidden biases folded into the input bias; n-gate hidden bias kept full-width
        # (zeros in r/z positions) so the in-kernel add needs no lane offset.
        bih = bih.astype(f32)
        bhh = bhh.astype(f32)
        bih_f = jnp.concatenate([bih[0:H] + bhh[0:H],
                                 bih[H:2 * H] + bhh[H:2 * H],
                                 bih[2 * H:H3]]).reshape(1, H3)
        bhn_f = jnp.concatenate([jnp.zeros((2 * H,), f32),
                                 bhh[2 * H:H3]]).reshape(1, H3)
        return bih_f, bhn_f

    e1_bih_f, e1_bhn_f = fold_biases(params["e1_bih"], params["e1_bhh"])
    e2_bih_f, e2_bhn_f = fold_biases(params["e2_bih"], params["e2_bhh"])
    d_bih_f, d_bhn_f = fold_biases(params["d_bih"], params["d_bhh"])

    # Block-diagonal attention / head weights so the kernel gets e and preds in (B, T)/(B, W)
    # layout from ONE batched matmul each (no per-step matvecs, no in-kernel transposes).
    eye_t = jnp.eye(T, dtype=f32)
    wa_bd = jnp.kron(eye_t, tr(params["wa"]))                            # (T*H, T*H)
    va_bd = jnp.kron(eye_t, params["va"].reshape(H, 1).astype(f32))      # (T*H, T)
    d_wo_t = tr(params["d_wo"])                                          # (H, 1)
    wo_bd = jnp.kron(jnp.eye(W, dtype=f32), d_wo_t)                      # (W*H, W)

    # Decoder head fold: gi_{k+1} = y_k*W_ih + b  with  y_k = hd_k@W_out + b_out
    #                  => gi_{k+1} = hd_k @ (W_out @ W_ih) + (b_out*W_ih + b).
    # Feedback half placed at lane PAD (vreg-tile aligned) to avoid cross-tile slicing.
    d_wih_t = tr(params["d_wih"])                    # (1, 3H)
    d_bo = params["d_bo"].reshape(1, 1).astype(f32)  # (1, 1)
    w_fold = jnp.dot(d_wo_t, d_wih_t)                # (H, 3H)
    w_dec = jnp.concatenate(
        [tr(params["d_whh"]), jnp.zeros((H, PAD - H3), f32), w_fold], axis=1)   # (H, PAD+3H)
    d_gi0 = d_bih_f                                  # start token x_0 = 0
    d_gif = d_bo * d_wih_t + d_bih_f                 # (1, 3H)

    kernel_inputs = [
        seqs_flat, mask_bt, mask_col, allys_col,
        tr(params["e1_wih"]), tr(params["e1_whh"]), e1_bih_f, e1_bhn_f,
        wa_bd, va_bd,
        tr(params["e2_wih"]), tr(params["e2_whh"]), e2_bih_f, e2_bhn_f,
        r2(params["bn_g"]), r2(params["bn_b"]),
        w_dec, d_gi0, d_gif, d_bhn_f, wo_bd, d_bo,
    ]

    vmem = pl.BlockSpec(memory_space=pltpu.MemorySpace.VMEM)
    kernel = functools.partial(_i2ed_kernel, T=T, B=B, D=D, H=H, W=W,
                               PAD=PAD, OUT_LANES=OUT_LANES)

    # Grid-less single-TensorCore kernel: working set is <1 MiB and fully VMEM-resident,
    # so no vmem_limit override is reserved (keeps v7x 64-MiB headroom free).
    # TODO(synk): for production batch sizes, add a "parallel" batch grid axis (v7x dual-TC)
    # with a split-statistics pass for the training-mode BatchNorm, which couples batch rows.
    out_slab = pl.pallas_call(
        kernel,
        out_shape=jax.ShapeDtypeStruct((B, OUT_LANES), f32),
        in_specs=[vmem] * len(kernel_inputs),
        out_specs=vmem,
    )(*kernel_inputs)

    preds = out_slab[:, 0:W]
    e_vals = out_slab[:, W:W + T]
    att_vals = out_slab[:, W + T:W + 2 * T]
    return preds, e_vals, att_vals


# ---------------------------------------------------------------------------
# Pure-JAX reference (straightforward, unfused) for correctness checking
# ---------------------------------------------------------------------------
def _reference_forward(params, seqs, mask_seqs, allys, wk_ahead):
    f32 = jnp.float32
    B, T, _ = seqs.shape
    H = params["e1_whh"].shape[1]

    def gru_cell(x, h, wih, whh, bih, bhh):
        gi = x @ wih.T + bih
        gh = h @ whh.T + bhh
        r = jax.nn.sigmoid(gi[:, 0:H] + gh[:, 0:H])
        z = jax.nn.sigmoid(gi[:, H:2 * H] + gh[:, H:2 * H])
        n = jnp.tanh(gi[:, 2 * H:] + r * gh[:, 2 * H:])
        return (1.0 - z) * n + z * h

    mask = mask_seqs.astype(f32)
    h = jnp.zeros((B, H), f32)
    hs, es = [], []
    for t in range(T):
        m = mask[:, t:t + 1]
        h_new = gru_cell(seqs[:, t, :], h, params["e1_wih"], params["e1_whh"],
                         params["e1_bih"], params["e1_bhh"])
        h = m * h_new + (1.0 - m) * h
        hs.append(h)
        es.append(jnp.tanh(h @ params["wa"].T) @ params["va"].reshape(H, 1))
    e_vals = jnp.concatenate(es, axis=1)
    valid = (mask > 0.0).astype(f32)
    e_m = jnp.where(mask > 0.0, e_vals, -1e30)
    p = jnp.exp(e_m - e_m.max(axis=1, keepdims=True)) * valid
    att = p / p.sum(axis=1, keepdims=True)
    c1 = sum(att[:, t:t + 1] * hs[t] for t in range(T))

    h2 = jnp.zeros((B, H), f32)
    for t in range(T):
        m = mask[:, t:t + 1]
        h_new = gru_cell(allys[:, t:t + 1], h2, params["e2_wih"], params["e2_whh"],
                         params["e2_bih"], params["e2_bhh"])
        h2 = m * h_new + (1.0 - m) * h2

    s = c1 + h2
    mu = s.mean(axis=0, keepdims=True)
    var = ((s - mu) ** 2).mean(axis=0, keepdims=True)
    sum_vec = (s - mu) / jnp.sqrt(var + 1e-5) * params["bn_g"] + params["bn_b"]

    hd = sum_vec
    x = jnp.zeros((B, 1), f32)
    preds = []
    for _ in range(wk_ahead):
        hd = gru_cell(x, hd, params["d_wih"], params["d_whh"],
                      params["d_bih"], params["d_bhh"])
        y = hd @ params["d_wo"].T + params["d_bo"]
        preds.append(y)
        x = y
    return jnp.concatenate(preds, axis=1), e_vals, att


# ---------------------------------------------------------------------------
if __name__ == "__main__":
    # Small shapes consistent with the module's forward:
    #   seqs: (B, size_seq, n_signals), mask_seqs: (B, size_seq), allys: (B, size_seq)
    B, size_seq, n_signals, rnn_dim, wk_ahead = 2, 8, 4, 32, 4

    root = jax.random.PRNGKey(0)
    k_par, k_seq, k_ally = jax.random.split(root, 3)

    params = init_params(k_par, n_signals, rnn_dim)
    seqs = jax.random.normal(k_seq, (B, size_seq, n_signals), jnp.float32)
    allys = jax.random.normal(k_ally, (B, size_seq), jnp.float32)
    mask_seqs = jnp.ones((B, size_seq), jnp.float32)

    preds, e_vals, att_vals = input2encoderdecoder_forward(
        params, seqs, mask_seqs, allys, wk_ahead)
    jax.block_until_ready((preds, e_vals, att_vals))

    assert preds.shape == (B, wk_ahead)
    assert e_vals.shape == (B, size_seq)
    assert att_vals.shape == (B, size_seq)
    assert bool(jnp.all(jnp.isfinite(preds)))
    assert bool(jnp.all(jnp.abs(jnp.sum(att_vals, axis=1) - 1.0) < 1e-3))

    # pure-JAX reference checks (exact softmax now — no attention override needed)
    ref_preds, ref_e, ref_att = _reference_forward(params, seqs, mask_seqs, allys, wk_ahead)
    assert bool(jnp.allclose(e_vals, ref_e, atol=1e-3, rtol=1e-3))
    assert bool(jnp.allclose(att_vals, ref_att, atol=2e-3, rtol=2e-3))
    assert bool(jnp.allclose(preds, ref_preds, atol=5e-3, rtol=5e-3))

    print("KERNEL_OK")
</pallas_src>

<mosaic_0001>
module attributes {stable_mosaic.version = 11 : i64} {
  func.func @_i2ed_kernel(%arg0: memref<16x4xf32, #tpu.memory_space<vmem>>, %arg1: memref<2x8xf32, #tpu.memory_space<vmem>>, %arg2: memref<16x1xf32, #tpu.memory_space<vmem>>, %arg3: memref<16x1xf32, #tpu.memory_space<vmem>>, %arg4: memref<4x96xf32, #tpu.memory_space<vmem>>, %arg5: memref<32x96xf32, #tpu.memory_space<vmem>>, %arg6: memref<1x96xf32, #tpu.memory_space<vmem>>, %arg7: memref<1x96xf32, #tpu.memory_space<vmem>>, %arg8: memref<256x256xf32, #tpu.memory_space<vmem>>, %arg9: memref<256x8xf32, #tpu.memory_space<vmem>>, %arg10: memref<1x96xf32, #tpu.memory_space<vmem>>, %arg11: memref<32x96xf32, #tpu.memory_space<vmem>>, %arg12: memref<1x96xf32, #tpu.memory_space<vmem>>, %arg13: memref<1x96xf32, #tpu.memory_space<vmem>>, %arg14: memref<1x32xf32, #tpu.memory_space<vmem>>, %arg15: memref<1x32xf32, #tpu.memory_space<vmem>>, %arg16: memref<32x224xf32, #tpu.memory_space<vmem>>, %arg17: memref<1x96xf32, #tpu.memory_space<vmem>>, %arg18: memref<1x96xf32, #tpu.memory_space<vmem>>, %arg19: memref<1x96xf32, #tpu.memory_space<vmem>>, %arg20: memref<128x4xf32, #tpu.memory_space<vmem>>, %arg21: memref<1x1xf32, #tpu.memory_space<vmem>>, %arg22: memref<2x128xf32, #tpu.memory_space<vmem>>) attributes {dimension_semantics = [], scalar_prefetch = 0 : i64, scratch_operands = 0 : i64, tpu.core_type = #tpu.core_type<tc>} {
    %c0 = arith.constant 0 : index
    %c0_0 = arith.constant 0 : index
    %0 = vector.load %arg1[%c0, %c0_0] : memref<2x8xf32, #tpu.memory_space<vmem>>, vector<2x8xf32>
    %c0_1 = arith.constant 0 : index
    %c0_2 = arith.constant 0 : index
    %1 = vector.load %arg2[%c0_1, %c0_2] : memref<16x1xf32, #tpu.memory_space<vmem>>, vector<16x1xf32>
    %c0_3 = arith.constant 0 : index
    %c0_4 = arith.constant 0 : index
    %2 = vector.load %arg0[%c0_3, %c0_4] : memref<16x4xf32, #tpu.memory_space<vmem>>, vector<16x4xf32>
    %c0_5 = arith.constant 0 : index
    %c0_6 = arith.constant 0 : index
    %3 = vector.load %arg4[%c0_5, %c0_6] : memref<4x96xf32, #tpu.memory_space<vmem>>, vector<4x96xf32>
    %cst = arith.constant dense<0.000000e+00> : vector<16x96xf32>
    %4 = tpu.matmul %2, %3, %cst {dimension_numbers = #tpu.dot_dimension_numbers<[1], [0], [0], [1], [0, 0, 1, 1], [], []>} : vector<16x4xf32>, vector<4x96xf32>, vector<16x96xf32> -> vector<16x96xf32>
    %c0_7 = arith.constant 0 : index
    %c0_8 = arith.constant 0 : index
    %5 = vector.load %arg6[%c0_7, %c0_8] : memref<1x96xf32, #tpu.memory_space<vmem>>, vector<1x96xf32>
    %6 = vector.broadcast %5 : vector<1x96xf32> to vector<16x96xf32>
    %7 = arith.addf %4, %6 : vector<16x96xf32>
    %cst_9 = arith.constant 0.000000e+00 : f32
    %8 = vector.broadcast %cst_9 : f32 to vector<2x32xf32>
    %9 = vector.extract_strided_slice %7 {offsets = [0, 0], sizes = [2, 96], strides = [1, 1]} : vector<16x96xf32> to vector<2x96xf32>
    %c0_10 = arith.constant 0 : index
    %c0_11 = arith.constant 0 : index
    %10 = vector.load %arg5[%c0_10, %c0_11] : memref<32x96xf32, #tpu.memory_space<vmem>>, vector<32x96xf32>
    %cst_12 = arith.constant dense<0.000000e+00> : vector<2x96xf32>
    %11 = tpu.matmul %8, %10, %cst_12 {dimension_numbers = #tpu.dot_dimension_numbers<[1], [0], [0], [1], [0, 0, 1, 1], [], []>} : vector<2x32xf32>, vector<32x96xf32>, vector<2x96xf32> -> vector<2x96xf32>
    %c0_13 = arith.constant 0 : index
    %c0_14 = arith.constant 0 : index
    %12 = vector.load %arg7[%c0_13, %c0_14] : memref<1x96xf32, #tpu.memory_space<vmem>>, vector<1x96xf32>
    %13 = vector.broadcast %12 : vector<1x96xf32> to vector<2x96xf32>
    %14 = arith.addf %11, %13 : vector<2x96xf32>
    %15 = vector.extract_strided_slice %9 {offsets = [0, 0], sizes = [2, 32], strides = [1, 1]} : vector<2x96xf32> to vector<2x32xf32>
    %16 = vector.extract_strided_slice %14 {offsets = [0, 0], sizes = [2, 32], strides = [1, 1]} : vector<2x96xf32> to vector<2x32xf32>
    %17 = arith.addf %15, %16 : vector<2x32xf32>
    %18 = arith.negf %17 : vector<2x32xf32>
    %19 = math.exp %18 : vector<2x32xf32>
    %cst_15 = arith.constant 1.000000e+00 : f32
    %20 = vector.broadcast %cst_15 : f32 to vector<2x32xf32>
    %21 = arith.addf %20, %19 : vector<2x32xf32>
    %22 = arith.divf %20, %21 : vector<2x32xf32>
    %23 = vector.extract_strided_slice %9 {offsets = [0, 32], sizes = [2, 32], strides = [1, 1]} : vector<2x96xf32> to vector<2x32xf32>
    %24 = vector.extract_strided_slice %14 {offsets = [0, 32], sizes = [2, 32], strides = [1, 1]} : vector<2x96xf32> to vector<2x32xf32>
    %25 = arith.addf %23, %24 : vector<2x32xf32>
    %26 = arith.negf %25 : vector<2x32xf32>
    %27 = math.exp %26 : vector<2x32xf32>
    %cst_16 = arith.constant 1.000000e+00 : f32
    %28 = vector.broadcast %cst_16 : f32 to vector<2x32xf32>
    %29 = arith.addf %28, %27 : vector<2x32xf32>
    %30 = arith.divf %28, %29 : vector<2x32xf32>
    %31 = vector.extract_strided_slice %9 {offsets = [0, 64], sizes = [2, 32], strides = [1, 1]} : vector<2x96xf32> to vector<2x32xf32>
    %32 = vector.extract_strided_slice %14 {offsets = [0, 64], sizes = [2, 32], strides = [1, 1]} : vector<2x96xf32> to vector<2x32xf32>
    %33 = arith.mulf %22, %32 : vector<2x32xf32>
    %34 = arith.addf %31, %33 : vector<2x32xf32>
    %35 = math.tanh %34 : vector<2x32xf32>
    %cst_17 = arith.constant 1.000000e+00 : f32
    %36 = vector.broadcast %cst_17 : f32 to vector<2x32xf32>
    %37 = arith.subf %36, %30 : vector<2x32xf32>
    %38 = arith.mulf %37, %35 : vector<2x32xf32>
    %39 = arith.mulf %30, %8 : vector<2x32xf32>
    %40 = arith.addf %38, %39 : vector<2x32xf32>
    %41 = vector.extract_strided_slice %1 {offsets = [0, 0], sizes = [2, 1], strides = [1, 1]} : vector<16x1xf32> to vector<2x1xf32>
    %42 = vector.broadcast %41 : vector<2x1xf32> to vector<2x32xf32>
    %43 = arith.mulf %42, %40 : vector<2x32xf32>
    %cst_18 = arith.constant 1.000000e+00 : f32
    %44 = vector.broadcast %cst_18 : f32 to vector<2x1xf32>
    %45 = arith.subf %44, %41 : vector<2x1xf32>
    %46 = vector.broadcast %45 : vector<2x1xf32> to vector<2x32xf32>
    %47 = arith.mulf %46, %8 : vector<2x32xf32>
    %48 = arith.addf %43, %47 : vector<2x32xf32>
    %49 = vector.extract_strided_slice %7 {offsets = [2, 0], sizes = [2, 96], strides = [1, 1]} : vector<16x96xf32> to vector<2x96xf32>
    %c0_19 = arith.constant 0 : index
    %c0_20 = arith.constant 0 : index
    %50 = vector.load %arg5[%c0_19, %c0_20] : memref<32x96xf32, #tpu.memory_space<vmem>>, vector<32x96xf32>
    %cst_21 = arith.constant dense<0.000000e+00> : vector<2x96xf32>
    %51 = tpu.matmul %48, %50, %cst_21 {dimension_numbers = #tpu.dot_dimension_numbers<[1], [0], [0], [1], [0, 0, 1, 1], [], []>} : vector<2x32xf32>, vector<32x96xf32>, vector<2x96xf32> -> vector<2x96xf32>
    %c0_22 = arith.constant 0 : index
    %c0_23 = arith.constant 0 : index
    %52 = vector.load %arg7[%c0_22, %c0_23] : memref<1x96xf32, #tpu.memory_space<vmem>>, vector<1x96xf32>
    %53 = vector.broadcast %52 : vector<1x96xf32> to vector<2x96xf32>
    %54 = arith.addf %51, %53 : vector<2x96xf32>
    %55 = vector.extract_strided_slice %49 {offsets = [0, 0], sizes = [2, 32], strides = [1, 1]} : vector<2x96xf32> to vector<2x32xf32>
    %56 = vector.extract_strided_slice %54 {offsets = [0, 0], sizes = [2, 32], strides = [1, 1]} : vector<2x96xf32> to vector<2x32xf32>
    %57 = arith.addf %55, %56 : vector<2x32xf32>
    %58 = arith.negf %57 : vector<2x32xf32>
    %59 = math.exp %58 : vector<2x32xf32>
    %cst_24 = arith.constant 1.000000e+00 : f32
    %60 = vector.broadcast %cst_24 : f32 to vector<2x32xf32>
    %61 = arith.addf %60, %59 : vector<2x32xf32>
    %62 = arith.divf %60, %61 : vector<2x32xf32>
    %63 = vector.extract_strided_slice %49 {offsets = [0, 32], sizes = [2, 32], strides = [1, 1]} : vector<2x96xf32> to vector<2x32xf32>
    %64 = vector.extract_strided_slice %54 {offsets = [0, 32], sizes = [2, 32], strides = [1, 1]} : vector<2x96xf32> to vector<2x32xf32>
    %65 = arith.addf %63, %64 : vector<2x32xf32>
    %66 = arith.negf %65 : vector<2x32xf32>
    %67 = math.exp %66 : vector<2x32xf32>
    %cst_25 = arith.constant 1.000000e+00 : f32
    %68 = vector.broadcast %cst_25 : f32 to vector<2x32xf32>
    %69 = arith.addf %68, %67 : vector<2x32xf32>
    %70 = arith.divf %68, %69 : vector<2x32xf32>
    %71 = vector.extract_strided_slice %49 {offsets = [0, 64], sizes = [2, 32], strides = [1, 1]} : vector<2x96xf32> to vector<2x32xf32>
    %72 = vector.extract_strided_slice %54 {offsets = [0, 64], sizes = [2, 32], strides = [1, 1]} : vector<2x96xf32> to vector<2x32xf32>
    %73 = arith.mulf %62, %72 : vector<2x32xf32>
    %74 = arith.addf %71, %73 : vector<2x32xf32>
    %75 = math.tanh %74 : vector<2x32xf32>
    %cst_26 = arith.constant 1.000000e+00 : f32
    %76 = vector.broadcast %cst_26 : f32 to vector<2x32xf32>
    %77 = arith.subf %76, %70 : vector<2x32xf32>
    %78 = arith.mulf %77, %75 : vector<2x32xf32>
    %79 = arith.mulf %70, %48 : vector<2x32xf32>
    %80 = arith.addf %78, %79 : vector<2x32xf32>
    %81 = vector.extract_strided_slice %1 {offsets = [2, 0], sizes = [2, 1], strides = [1, 1]} : vector<16x1xf32> to vector<2x1xf32>
    %82 = vector.broadcast %81 : vector<2x1xf32> to vector<2x32xf32>
    %83 = arith.mulf %82, %80 : vector<2x32xf32>
    %cst_27 = arith.constant 1.000000e+00 : f32
    %84 = vector.broadcast %cst_27 : f32 to vector<2x1xf32>
    %85 = arith.subf %84, %81 : vector<2x1xf32>
    %86 = vector.broadcast %85 : vector<2x1xf32> to vector<2x32xf32>
    %87 = arith.mulf %86, %48 : vector<2x32xf32>
    %88 = arith.addf %83, %87 : vector<2x32xf32>
    %89 = vector.extract_strided_slice %7 {offsets = [4, 0], sizes = [2, 96], strides = [1, 1]} : vector<16x96xf32> to vector<2x96xf32>
    %c0_28 = arith.constant 0 : index
    %c0_29 = arith.constant 0 : index
    %90 = vector.load %arg5[%c0_28, %c0_29] : memref<32x96xf32, #tpu.memory_space<vmem>>, vector<32x96xf32>
    %cst_30 = arith.constant dense<0.000000e+00> : vector<2x96xf32>
    %91 = tpu.matmul %88, %90, %cst_30 {dimension_numbers = #tpu.dot_dimension_numbers<[1], [0], [0], [1], [0, 0, 1, 1], [], []>} : vector<2x32xf32>, vector<32x96xf32>, vector<2x96xf32> -> vector<2x96xf32>
    %c0_31 = arith.constant 0 : index
    %c0_32 = arith.constant 0 : index
    %92 = vector.load %arg7[%c0_31, %c0_32] : memref<1x96xf32, #tpu.memory_space<vmem>>, vector<1x96xf32>
    %93 = vector.broadcast %92 : vector<1x96xf32> to vector<2x96xf32>
    %94 = arith.addf %91, %93 : vector<2x96xf32>
    %95 = vector.extract_strided_slice %89 {offsets = [0, 0], sizes = [2, 32], strides = [1, 1]} : vector<2x96xf32> to vector<2x32xf32>
    %96 = vector.extract_strided_slice %94 {offsets = [0, 0], sizes = [2, 32], strides = [1, 1]} : vector<2x96xf32> to vector<2x32xf32>
    %97 = arith.addf %95, %96 : vector<2x32xf32>
    %98 = arith.negf %97 : vector<2x32xf32>
    %99 = math.exp %98 : vector<2x32xf32>
    %cst_33 = arith.constant 1.000000e+00 : f32
    %100 = vector.broadcast %cst_33 : f32 to vector<2x32xf32>
    %101 = arith.addf %100, %99 : vector<2x32xf32>
    %102 = arith.divf %100, %101 : vector<2x32xf32>
    %103 = vector.extract_strided_slice %89 {offsets = [0, 32], sizes = [2, 32], strides = [1, 1]} : vector<2x96xf32> to vector<2x32xf32>
    %104 = vector.extract_strided_slice %94 {offsets = [0, 32], sizes = [2, 32], strides = [1, 1]} : vector<2x96xf32> to vector<2x32xf32>
    %105 = arith.addf %103, %104 : vector<2x32xf32>
    %106 = arith.negf %105 : vector<2x32xf32>
    %107 = math.exp %106 : vector<2x32xf32>
    %cst_34 = arith.constant 1.000000e+00 : f32
    %108 = vector.broadcast %cst_34 : f32 to vector<2x32xf32>
    %109 = arith.addf %108, %107 : vector<2x32xf32>
    %110 = arith.divf %108, %109 : vector<2x32xf32>
    %111 = vector.extract_strided_slice %89 {offsets = [0, 64], sizes = [2, 32], strides = [1, 1]} : vector<2x96xf32> to vector<2x32xf32>
    %112 = vector.extract_strided_slice %94 {offsets = [0, 64], sizes = [2, 32], strides = [1, 1]} : vector<2x96xf32> to vector<2x32xf32>
    %113 = arith.mulf %102, %112 : vector<2x32xf32>
    %114 = arith.addf %111, %113 : vector<2x32xf32>
    %115 = math.tanh %114 : vector<2x32xf32>
    %cst_35 = arith.constant 1.000000e+00 : f32
    %116 = vector.broadcast %cst_35 : f32 to vector<2x32xf32>
    %117 = arith.subf %116, %110 : vector<2x32xf32>
    %118 = arith.mulf %117, %115 : vector<2x32xf32>
    %119 = arith.mulf %110, %88 : vector<2x32xf32>
    %120 = arith.addf %118, %119 : vector<2x32xf32>
    %121 = vector.extract_strided_slice %1 {offsets = [4, 0], sizes = [2, 1], strides = [1, 1]} : vector<16x1xf32> to vector<2x1xf32>
    %122 = vector.broadcast %121 : vector<2x1xf32> to vector<2x32xf32>
    %123 = arith.mulf %122, %120 : vector<2x32xf32>
    %cst_36 = arith.constant 1.000000e+00 : f32
    %124 = vector.broadcast %cst_36 : f32 to vector<2x1xf32>
    %125 = arith.subf %124, %121 : vector<2x1xf32>
    %126 = vector.broadcast %125 : vector<2x1xf32> to vector<2x32xf32>
    %127 = arith.mulf %126, %88 : vector<2x32xf32>
    %128 = arith.addf %123, %127 : vector<2x32xf32>
    %129 = vector.extract_strided_slice %7 {offsets = [6, 0], sizes = [2, 96], strides = [1, 1]} : vector<16x96xf32> to vector<2x96xf32>
    %c0_37 = arith.constant 0 : index
    %c0_38 = arith.constant 0 : index
    %130 = vector.load %arg5[%c0_37, %c0_38] : memref<32x96xf32, #tpu.memory_space<vmem>>, vector<32x96xf32>
    %cst_39 = arith.constant dense<0.000000e+00> : vector<2x96xf32>
    %131 = tpu.matmul %128, %130, %cst_39 {dimension_numbers = #tpu.dot_dimension_numbers<[1], [0], [0], [1], [0, 0, 1, 1], [], []>} : vector<2x32xf32>, vector<32x96xf32>, vector<2x96xf32> -> vector<2x96xf32>
    %c0_40 = arith.constant 0 : index
    %c0_41 = arith.constant 0 : index
    %132 = vector.load %arg7[%c0_40, %c0_41] : memref<1x96xf32, #tpu.memory_space<vmem>>, vector<1x96xf32>
    %133 = vector.broadcast %132 : vector<1x96xf32> to vector<2x96xf32>
    %134 = arith.addf %131, %133 : vector<2x96xf32>
    %135 = vector.extract_strided_slice %129 {offsets = [0, 0], sizes = [2, 32], strides = [1, 1]} : vector<2x96xf32> to vector<2x32xf32>
    %136 = vector.extract_strided_slice %134 {offsets = [0, 0], sizes = [2, 32], strides = [1, 1]} : vector<2x96xf32> to vector<2x32xf32>
    %137 = arith.addf %135, %136 : vector<2x32xf32>
    %138 = arith.negf %137 : vector<2x32xf32>
    %139 = math.exp %138 : vector<2x32xf32>
    %cst_42 = arith.constant 1.000000e+00 : f32
    %140 = vector.broadcast %cst_42 : f32 to vector<2x32xf32>
    %141 = arith.addf %140, %139 : vector<2x32xf32>
    %142 = arith.divf %140, %141 : vector<2x32xf32>
    %143 = vector.extract_strided_slice %129 {offsets = [0, 32], sizes = [2, 32], strides = [1, 1]} : vector<2x96xf32> to vector<2x32xf32>
    %144 = vector.extract_strided_slice %134 {offsets = [0, 32], sizes = [2, 32], strides = [1, 1]} : vector<2x96xf32> to vector<2x32xf32>
    %145 = arith.addf %143, %144 : vector<2x32xf32>
    %146 = arith.negf %145 : vector<2x32xf32>
    %147 = math.exp %146 : vector<2x32xf32>
    %cst_43 = arith.constant 1.000000e+00 : f32
    %148 = vector.broadcast %cst_43 : f32 to vector<2x32xf32>
    %149 = arith.addf %148, %147 : vector<2x32xf32>
    %150 = arith.divf %148, %149 : vector<2x32xf32>
    %151 = vector.extract_strided_slice %129 {offsets = [0, 64], sizes = [2, 32], strides = [1, 1]} : vector<2x96xf32> to vector<2x32xf32>
    %152 = vector.extract_strided_slice %134 {offsets = [0, 64], sizes = [2, 32], strides = [1, 1]} : vector<2x96xf32> to vector<2x32xf32>
    %153 = arith.mulf %142, %152 : vector<2x32xf32>
    %154 = arith.addf %151, %153 : vector<2x32xf32>
    %155 = math.tanh %154 : vector<2x32xf32>
    %cst_44 = arith.constant 1.000000e+00 : f32
    %156 = vector.broadcast %cst_44 : f32 to vector<2x32xf32>
    %157 = arith.subf %156, %150 : vector<2x32xf32>
    %158 = arith.mulf %157, %155 : vector<2x32xf32>
    %159 = arith.mulf %150, %128 : vector<2x32xf32>
    %160 = arith.addf %158, %159 : vector<2x32xf32>
    %161 = vector.extract_strided_slice %1 {offsets = [6, 0], sizes = [2, 1], strides = [1, 1]} : vector<16x1xf32> to vector<2x1xf32>
    %162 = vector.broadcast %161 : vector<2x1xf32> to vector<2x32xf32>
    %163 = arith.mulf %162, %160 : vector<2x32xf32>
    %cst_45 = arith.constant 1.000000e+00 : f32
    %164 = vector.broadcast %cst_45 : f32 to vector<2x1xf32>
    %165 = arith.subf %164, %161 : vector<2x1xf32>
    %166 = vector.broadcast %165 : vector<2x1xf32> to vector<2x32xf32>
    %167 = arith.mulf %166, %128 : vector<2x32xf32>
    %168 = arith.addf %163, %167 : vector<2x32xf32>
    %169 = vector.extract_strided_slice %7 {offsets = [8, 0], sizes = [2, 96], strides = [1, 1]} : vector<16x96xf32> to vector<2x96xf32>
    %c0_46 = arith.constant 0 : index
    %c0_47 = arith.constant 0 : index
    %170 = vector.load %arg5[%c0_46, %c0_47] : memref<32x96xf32, #tpu.memory_space<vmem>>, vector<32x96xf32>
    %cst_48 = arith.constant dense<0.000000e+00> : vector<2x96xf32>
    %171 = tpu.matmul %168, %170, %cst_48 {dimension_numbers = #tpu.dot_dimension_numbers<[1], [0], [0], [1], [0, 0, 1, 1], [], []>} : vector<2x32xf32>, vector<32x96xf32>, vector<2x96xf32> -> vector<2x96xf32>
    %c0_49 = arith.constant 0 : index
    %c0_50 = arith.constant 0 : index
    %172 = vector.load %arg7[%c0_49, %c0_50] : memref<1x96xf32, #tpu.memory_space<vmem>>, vector<1x96xf32>
    %173 = vector.broadcast %172 : vector<1x96xf32> to vector<2x96xf32>
    %174 = arith.addf %171, %173 : vector<2x96xf32>
    %175 = vector.extract_strided_slice %169 {offsets = [0, 0], sizes = [2, 32], strides = [1, 1]} : vector<2x96xf32> to vector<2x32xf32>
    %176 = vector.extract_strided_slice %174 {offsets = [0, 0], sizes = [2, 32], strides = [1, 1]} : vector<2x96xf32> to vector<2x32xf32>
    %177 = arith.addf %175, %176 : vector<2x32xf32>
    %178 = arith.negf %177 : vector<2x32xf32>
    %179 = math.exp %178 : vector<2x32xf32>
    %cst_51 = arith.constant 1.000000e+00 : f32
    %180 = vector.broadcast %cst_51 : f32 to vector<2x32xf32>
    %181 = arith.addf %180, %179 : vector<2x32xf32>
    %182 = arith.divf %180, %181 : vector<2x32xf32>
    %183 = vector.extract_strided_slice %169 {offsets = [0, 32], sizes = [2, 32], strides = [1, 1]} : vector<2x96xf32> to vector<2x32xf32>
    %184 = vector.extract_strided_slice %174 {offsets = [0, 32], sizes = [2, 32], strides = [1, 1]} : vector<2x96xf32> to vector<2x32xf32>
    %185 = arith.addf %183, %184 : vector<2x32xf32>
    %186 = arith.negf %185 : vector<2x32xf32>
    %187 = math.exp %186 : vector<2x32xf32>
    %cst_52 = arith.constant 1.000000e+00 : f32
    %188 = vector.broadcast %cst_52 : f32 to vector<2x32xf32>
    %189 = arith.addf %188, %187 : vector<2x32xf32>
    %190 = arith.divf %188, %189 : vector<2x32xf32>
    %191 = vector.extract_strided_slice %169 {offsets = [0, 64], sizes = [2, 32], strides = [1, 1]} : vector<2x96xf32> to vector<2x32xf32>
    %192 = vector.extract_strided_slice %174 {offsets = [0, 64], sizes = [2, 32], strides = [1, 1]} : vector<2x96xf32> to vector<2x32xf32>
    %193 = arith.mulf %182, %192 : vector<2x32xf32>
    %194 = arith.addf %191, %193 : vector<2x32xf32>
    %195 = math.tanh %194 : vector<2x32xf32>
    %cst_53 = arith.constant 1.000000e+00 : f32
    %196 = vector.broadcast %cst_53 : f32 to vector<2x32xf32>
    %197 = arith.subf %196, %190 : vector<2x32xf32>
    %198 = arith.mulf %197, %195 : vector<2x32xf32>
    %199 = arith.mulf %190, %168 : vector<2x32xf32>
    %200 = arith.addf %198, %199 : vector<2x32xf32>
    %201 = vector.extract_strided_slice %1 {offsets = [8, 0], sizes = [2, 1], strides = [1, 1]} : vector<16x1xf32> to vector<2x1xf32>
    %202 = vector.broadcast %201 : vector<2x1xf32> to vector<2x32xf32>
    %203 = arith.mulf %202, %200 : vector<2x32xf32>
    %cst_54 = arith.constant 1.000000e+00 : f32
    %204 = vector.broadcast %cst_54 : f32 to vector<2x1xf32>
    %205 = arith.subf %204, %201 : vector<2x1xf32>
    %206 = vector.broadcast %205 : vector<2x1xf32> to vector<2x32xf32>
    %207 = arith.mulf %206, %168 : vector<2x32xf32>
    %208 = arith.addf %203, %207 : vector<2x32xf32>
    %209 = vector.extract_strided_slice %7 {offsets = [10, 0], sizes = [2, 96], strides = [1, 1]} : vector<16x96xf32> to vector<2x96xf32>
    %c0_55 = arith.constant 0 : index
    %c0_56 = arith.constant 0 : index
    %210 = vector.load %arg5[%c0_55, %c0_56] : memref<32x96xf32, #tpu.memory_space<vmem>>, vector<32x96xf32>
    %cst_57 = arith.constant dense<0.000000e+00> : vector<2x96xf32>
    %211 = tpu.matmul %208, %210, %cst_57 {dimension_numbers = #tpu.dot_dimension_numbers<[1], [0], [0], [1], [0, 0, 1, 1], [], []>} : vector<2x32xf32>, vector<32x96xf32>, vector<2x96xf32> -> vector<2x96xf32>
    %c0_58 = arith.constant 0 : index
    %c0_59 = arith.constant 0 : index
    %212 = vector.load %arg7[%c0_58, %c0_59] : memref<1x96xf32, #tpu.memory_space<vmem>>, vector<1x96xf32>
    %213 = vector.broadcast %212 : vector<1x96xf32> to vector<2x96xf32>
    %214 = arith.addf %211, %213 : vector<2x96xf32>
    %215 = vector.extract_strided_slice %209 {offsets = [0, 0], sizes = [2, 32], strides = [1, 1]} : vector<2x96xf32> to vector<2x32xf32>
    %216 = vector.extract_strided_slice %214 {offsets = [0, 0], sizes = [2, 32], strides = [1, 1]} : vector<2x96xf32> to vector<2x32xf32>
    %217 = arith.addf %215, %216 : vector<2x32xf32>
    %218 = arith.negf %217 : vector<2x32xf32>
    %219 = math.exp %218 : vector<2x32xf32>
    %cst_60 = arith.constant 1.000000e+00 : f32
    %220 = vector.broadcast %cst_60 : f32 to vector<2x32xf32>
    %221 = arith.addf %220, %219 : vector<2x32xf32>
    %222 = arith.divf %220, %221 : vector<2x32xf32>
    %223 = vector.extract_strided_slice %209 {offsets = [0, 32], sizes = [2, 32], strides = [1, 1]} : vector<2x96xf32> to vector<2x32xf32>
    %224 = vector.extract_strided_slice %214 {offsets = [0, 32], sizes = [2, 32], strides = [1, 1]} : vector<2x96xf32> to vector<2x32xf32>
    %225 = arith.addf %223, %224 : vector<2x32xf32>
    %226 = arith.negf %225 : vector<2x32xf32>
    %227 = math.exp %226 : vector<2x32xf32>
    %cst_61 = arith.constant 1.000000e+00 : f32
    %228 = vector.broadcast %cst_61 : f32 to vector<2x32xf32>
    %229 = arith.addf %228, %227 : vector<2x32xf32>
    %230 = arith.divf %228, %229 : vector<2x32xf32>
    %231 = vector.extract_strided_slice %209 {offsets = [0, 64], sizes = [2, 32], strides = [1, 1]} : vector<2x96xf32> to vector<2x32xf32>
    %232 = vector.extract_strided_slice %214 {offsets = [0, 64], sizes = [2, 32], strides = [1, 1]} : vector<2x96xf32> to vector<2x32xf32>
    %233 = arith.mulf %222, %232 : vector<2x32xf32>
    %234 = arith.addf %231, %233 : vector<2x32xf32>
    %235 = math.tanh %234 : vector<2x32xf32>
    %cst_62 = arith.constant 1.000000e+00 : f32
    %236 = vector.broadcast %cst_62 : f32 to vector<2x32xf32>
    %237 = arith.subf %236, %230 : vector<2x32xf32>
    %238 = arith.mulf %237, %235 : vector<2x32xf32>
    %239 = arith.mulf %230, %208 : vector<2x32xf32>
    %240 = arith.addf %238, %239 : vector<2x32xf32>
    %241 = vector.extract_strided_slice %1 {offsets = [10, 0], sizes = [2, 1], strides = [1, 1]} : vector<16x1xf32> to vector<2x1xf32>
    %242 = vector.broadcast %241 : vector<2x1xf32> to vector<2x32xf32>
    %243 = arith.mulf %242, %240 : vector<2x32xf32>
    %cst_63 = arith.constant 1.000000e+00 : f32
    %244 = vector.broadcast %cst_63 : f32 to vector<2x1xf32>
    %245 = arith.subf %244, %241 : vector<2x1xf32>
    %246 = vector.broadcast %245 : vector<2x1xf32> to vector<2x32xf32>
    %247 = arith.mulf %246, %208 : vector<2x32xf32>
    %248 = arith.addf %243, %247 : vector<2x32xf32>
    %249 = vector.extract_strided_slice %7 {offsets = [12, 0], sizes = [2, 96], strides = [1, 1]} : vector<16x96xf32> to vector<2x96xf32>
    %c0_64 = arith.constant 0 : index
    %c0_65 = arith.constant 0 : index
    %250 = vector.load %arg5[%c0_64, %c0_65] : memref<32x96xf32, #tpu.memory_space<vmem>>, vector<32x96xf32>
    %cst_66 = arith.constant dense<0.000000e+00> : vector<2x96xf32>
    %251 = tpu.matmul %248, %250, %cst_66 {dimension_numbers = #tpu.dot_dimension_numbers<[1], [0], [0], [1], [0, 0, 1, 1], [], []>} : vector<2x32xf32>, vector<32x96xf32>, vector<2x96xf32> -> vector<2x96xf32>
    %c0_67 = arith.constant 0 : index
    %c0_68 = arith.constant 0 : index
    %252 = vector.load %arg7[%c0_67, %c0_68] : memref<1x96xf32, #tpu.memory_space<vmem>>, vector<1x96xf32>
    %253 = vector.broadcast %252 : vector<1x96xf32> to vector<2x96xf32>
    %254 = arith.addf %251, %253 : vector<2x96xf32>
    %255 = vector.extract_strided_slice %249 {offsets = [0, 0], sizes = [2, 32], strides = [1, 1]} : vector<2x96xf32> to vector<2x32xf32>
    %256 = vector.extract_strided_slice %254 {offsets = [0, 0], sizes = [2, 32], strides = [1, 1]} : vector<2x96xf32> to vector<2x32xf32>
    %257 = arith.addf %255, %256 : vector<2x32xf32>
    %258 = arith.negf %257 : vector<2x32xf32>
    %259 = math.exp %258 : vector<2x32xf32>
    %cst_69 = arith.constant 1.000000e+00 : f32
    %260 = vector.broadcast %cst_69 : f32 to vector<2x32xf32>
    %261 = arith.addf %260, %259 : vector<2x32xf32>
    %262 = arith.divf %260, %261 : vector<2x32xf32>
    %263 = vector.extract_strided_slice %249 {offsets = [0, 32], sizes = [2, 32], strides = [1, 1]} : vector<2x96xf32> to vector<2x32xf32>
    %264 = vector.extract_strided_slice %254 {offsets = [0, 32], sizes = [2, 32], strides = [1, 1]} : vector<2x96xf32> to vector<2x32xf32>
    %265 = arith.addf %263, %264 : vector<2x32xf32>
    %266 = arith.negf %265 : vector<2x32xf32>
    %267 = math.exp %266 : vector<2x32xf32>
    %cst_70 = arith.constant 1.000000e+00 : f32
    %268 = vector.broadcast %cst_70 : f32 to vector<2x32xf32>
    %269 = arith.addf %268, %267 : vector<2x32xf32>
    %270 = arith.divf %268, %269 : vector<2x32xf32>
    %271 = vector.extract_strided_slice %249 {offsets = [0, 64], sizes = [2, 32], strides = [1, 1]} : vector<2x96xf32> to vector<2x32xf32>
    %272 = vector.extract_strided_slice %254 {offsets = [0, 64], sizes = [2, 32], strides = [1, 1]} : vector<2x96xf32> to vector<2x32xf32>
    %273 = arith.mulf %262, %272 : vector<2x32xf32>
    %274 = arith.addf %271, %273 : vector<2x32xf32>
    %275 = math.tanh %274 : vector<2x32xf32>
    %cst_71 = arith.constant 1.000000e+00 : f32
    %276 = vector.broadcast %cst_71 : f32 to vector<2x32xf32>
    %277 = arith.subf %276, %270 : vector<2x32xf32>
    %278 = arith.mulf %277, %275 : vector<2x32xf32>
    %279 = arith.mulf %270, %248 : vector<2x32xf32>
    %280 = arith.addf %278, %279 : vector<2x32xf32>
    %281 = vector.extract_strided_slice %1 {offsets = [12, 0], sizes = [2, 1], strides = [1, 1]} : vector<16x1xf32> to vector<2x1xf32>
    %282 = vector.broadcast %281 : vector<2x1xf32> to vector<2x32xf32>
    %283 = arith.mulf %282, %280 : vector<2x32xf32>
    %cst_72 = arith.constant 1.000000e+00 : f32
    %284 = vector.broadcast %cst_72 : f32 to vector<2x1xf32>
    %285 = arith.subf %284, %281 : vector<2x1xf32>
    %286 = vector.broadcast %285 : vector<2x1xf32> to vector<2x32xf32>
    %287 = arith.mulf %286, %248 : vector<2x32xf32>
    %288 = arith.addf %283, %287 : vector<2x32xf32>
    %289 = vector.extract_strided_slice %7 {offsets = [14, 0], sizes = [2, 96], strides = [1, 1]} : vector<16x96xf32> to vector<2x96xf32>
    %c0_73 = arith.constant 0 : index
    %c0_74 = arith.constant 0 : index
    %290 = vector.load %arg5[%c0_73, %c0_74] : memref<32x96xf32, #tpu.memory_space<vmem>>, vector<32x96xf32>
    %cst_75 = arith.constant dense<0.000000e+00> : vector<2x96xf32>
    %291 = tpu.matmul %288, %290, %cst_75 {dimension_numbers = #tpu.dot_dimension_numbers<[1], [0], [0], [1], [0, 0, 1, 1], [], []>} : vector<2x32xf32>, vector<32x96xf32>, vector<2x96xf32> -> vector<2x96xf32>
    %c0_76 = arith.constant 0 : index
    %c0_77 = arith.constant 0 : index
    %292 = vector.load %arg7[%c0_76, %c0_77] : memref<1x96xf32, #tpu.memory_space<vmem>>, vector<1x96xf32>
    %293 = vector.broadcast %292 : vector<1x96xf32> to vector<2x96xf32>
    %294 = arith.addf %291, %293 : vector<2x96xf32>
    %295 = vector.extract_strided_slice %289 {offsets = [0, 0], sizes = [2, 32], strides = [1, 1]} : vector<2x96xf32> to vector<2x32xf32>
    %296 = vector.extract_strided_slice %294 {offsets = [0, 0], sizes = [2, 32], strides = [1, 1]} : vector<2x96xf32> to vector<2x32xf32>
    %297 = arith.addf %295, %296 : vector<2x32xf32>
    %298 = arith.negf %297 : vector<2x32xf32>
    %299 = math.exp %298 : vector<2x32xf32>
    %cst_78 = arith.constant 1.000000e+00 : f32
    %300 = vector.broadcast %cst_78 : f32 to vector<2x32xf32>
    %301 = arith.addf %300, %299 : vector<2x32xf32>
    %302 = arith.divf %300, %301 : vector<2x32xf32>
    %303 = vector.extract_strided_slice %289 {offsets = [0, 32], sizes = [2, 32], strides = [1, 1]} : vector<2x96xf32> to vector<2x32xf32>
    %304 = vector.extract_strided_slice %294 {offsets = [0, 32], sizes = [2, 32], strides = [1, 1]} : vector<2x96xf32> to vector<2x32xf32>
    %305 = arith.addf %303, %304 : vector<2x32xf32>
    %306 = arith.negf %305 : vector<2x32xf32>
    %307 = math.exp %306 : vector<2x32xf32>
    %cst_79 = arith.constant 1.000000e+00 : f32
    %308 = vector.broadcast %cst_79 : f32 to vector<2x32xf32>
    %309 = arith.addf %308, %307 : vector<2x32xf32>
    %310 = arith.divf %308, %309 : vector<2x32xf32>
    %311 = vector.extract_strided_slice %289 {offsets = [0, 64], sizes = [2, 32], strides = [1, 1]} : vector<2x96xf32> to vector<2x32xf32>
    %312 = vector.extract_strided_slice %294 {offsets = [0, 64], sizes = [2, 32], strides = [1, 1]} : vector<2x96xf32> to vector<2x32xf32>
    %313 = arith.mulf %302, %312 : vector<2x32xf32>
    %314 = arith.addf %311, %313 : vector<2x32xf32>
    %315 = math.tanh %314 : vector<2x32xf32>
    %cst_80 = arith.constant 1.000000e+00 : f32
    %316 = vector.broadcast %cst_80 : f32 to vector<2x32xf32>
    %317 = arith.subf %316, %310 : vector<2x32xf32>
    %318 = arith.mulf %317, %315 : vector<2x32xf32>
    %319 = arith.mulf %310, %288 : vector<2x32xf32>
    %320 = arith.addf %318, %319 : vector<2x32xf32>
    %321 = vector.extract_strided_slice %1 {offsets = [14, 0], sizes = [2, 1], strides = [1, 1]} : vector<16x1xf32> to vector<2x1xf32>
    %322 = vector.broadcast %321 : vector<2x1xf32> to vector<2x32xf32>
    %323 = arith.mulf %322, %320 : vector<2x32xf32>
    %cst_81 = arith.constant 1.000000e+00 : f32
    %324 = vector.broadcast %cst_81 : f32 to vector<2x1xf32>
    %325 = arith.subf %324, %321 : vector<2x1xf32>
    %326 = vector.broadcast %325 : vector<2x1xf32> to vector<2x32xf32>
    %327 = arith.mulf %326, %288 : vector<2x32xf32>
    %328 = arith.addf %323, %327 : vector<2x32xf32>
    %329 = tpu.concatenate %48, %88, %128, %168, %208, %248, %288, %328 in 1 : vector<2x32xf32>, vector<2x32xf32>, vector<2x32xf32>, vector<2x32xf32>, vector<2x32xf32>, vector<2x32xf32>, vector<2x32xf32>, vector<2x32xf32> -> vector<2x256xf32>
    %c0_82 = arith.constant 0 : index
    %c0_83 = arith.constant 0 : index
    %330 = vector.load %arg8[%c0_82, %c0_83] : memref<256x256xf32, #tpu.memory_space<vmem>>, vector<256x256xf32>
    %cst_84 = arith.constant dense<0.000000e+00> : vector<2x256xf32>
    %331 = tpu.matmul %329, %330, %cst_84 {dimension_numbers = #tpu.dot_dimension_numbers<[1], [0], [0], [1], [0, 0, 1, 1], [], []>} : vector<2x256xf32>, vector<256x256xf32>, vector<2x256xf32> -> vector<2x256xf32>
    %332 = math.tanh %331 : vector<2x256xf32>
    %c0_85 = arith.constant 0 : index
    %c0_86 = arith.constant 0 : index
    %333 = vector.load %arg9[%c0_85, %c0_86] : memref<256x8xf32, #tpu.memory_space<vmem>>, vector<256x8xf32>
    %cst_87 = arith.constant dense<0.000000e+00> : vector<2x8xf32>
    %334 = tpu.matmul %332, %333, %cst_87 {dimension_numbers = #tpu.dot_dimension_numbers<[1], [0], [0], [1], [0, 0, 1, 1], [], []>} : vector<2x256xf32>, vector<256x8xf32>, vector<2x8xf32> -> vector<2x8xf32>
    %cst_88 = arith.constant 0.000000e+00 : f32
    %335 = vector.broadcast %cst_88 : f32 to vector<2x8xf32>
    %336 = arith.cmpf ogt, %0, %335 : vector<2x8xf32>
    %337 = arith.extui %336 : vector<2x8xi1> to vector<2x8xi32>
    %338 = arith.sitofp %337 : vector<2x8xi32> to vector<2x8xf32>
    %cst_89 = arith.constant 0.000000e+00 : f32
    %339 = vector.broadcast %cst_89 : f32 to vector<2x8xf32>
    %340 = arith.cmpf ogt, %0, %339 : vector<2x8xf32>
    %cst_90 = arith.constant -1.000000e+30 : f32
    %341 = vector.broadcast %cst_90 : f32 to vector<2x8xf32>
    %342 = arith.select %340, %334, %341 : vector<2x8xi1>, vector<2x8xf32>
    %cst_91 = arith.constant dense<0xFF800000> : vector<2xf32>
    %343 = vector.multi_reduction <maximumf>, %342, %cst_91 [1] : vector<2x8xf32> to vector<2xf32>
    %344 = vector.shape_cast %343 : vector<2xf32> to vector<2x1xf32>
    %345 = vector.broadcast %344 : vector<2x1xf32> to vector<2x8xf32>
    %346 = arith.subf %342, %345 : vector<2x8xf32>
    %347 = math.exp %346 : vector<2x8xf32>
    %348 = arith.mulf %347, %338 : vector<2x8xf32>
    %cst_92 = arith.constant dense<0.000000e+00> : vector<2xf32>
    %349 = vector.multi_reduction <add>, %348, %cst_92 [1] : vector<2x8xf32> to vector<2xf32>
    %350 = vector.shape_cast %349 : vector<2xf32> to vector<2x1xf32>
    %cst_93 = arith.constant 1.000000e-30 : f32
    %351 = vector.broadcast %cst_93 : f32 to vector<2x1xf32>
    %352 = arith.maximumf %350, %351 : vector<2x1xf32>
    %353 = tpu.reciprocal %352 : vector<2x1xf32> -> vector<2x1xf32>
    %354 = vector.broadcast %353 : vector<2x1xf32> to vector<2x8xf32>
    %355 = arith.mulf %348, %354 : vector<2x8xf32>
    %cst_94 = arith.constant 0.000000e+00 : f32
    %356 = vector.broadcast %cst_94 : f32 to vector<2x32xf32>
    %357 = vector.extract_strided_slice %355 {offsets = [0, 0], sizes = [2, 1], strides = [1, 1]} : vector<2x8xf32> to vector<2x1xf32>
    %358 = vector.broadcast %357 : vector<2x1xf32> to vector<2x32xf32>
    %359 = arith.mulf %358, %48 : vector<2x32xf32>
    %360 = arith.addf %356, %359 : vector<2x32xf32>
    %361 = vector.extract_strided_slice %355 {offsets = [0, 1], sizes = [2, 1], strides = [1, 1]} : vector<2x8xf32> to vector<2x1xf32>
    %362 = vector.broadcast %361 : vector<2x1xf32> to vector<2x32xf32>
    %363 = arith.mulf %362, %88 : vector<2x32xf32>
    %364 = arith.addf %360, %363 : vector<2x32xf32>
    %365 = vector.extract_strided_slice %355 {offsets = [0, 2], sizes = [2, 1], strides = [1, 1]} : vector<2x8xf32> to vector<2x1xf32>
    %366 = vector.broadcast %365 : vector<2x1xf32> to vector<2x32xf32>
    %367 = arith.mulf %366, %128 : vector<2x32xf32>
    %368 = arith.addf %364, %367 : vector<2x32xf32>
    %369 = vector.extract_strided_slice %355 {offsets = [0, 3], sizes = [2, 1], strides = [1, 1]} : vector<2x8xf32> to vector<2x1xf32>
    %370 = vector.broadcast %369 : vector<2x1xf32> to vector<2x32xf32>
    %371 = arith.mulf %370, %168 : vector<2x32xf32>
    %372 = arith.addf %368, %371 : vector<2x32xf32>
    %373 = vector.extract_strided_slice %355 {offsets = [0, 4], sizes = [2, 1], strides = [1, 1]} : vector<2x8xf32> to vector<2x1xf32>
    %374 = vector.broadcast %373 : vector<2x1xf32> to vector<2x32xf32>
    %375 = arith.mulf %374, %208 : vector<2x32xf32>
    %376 = arith.addf %372, %375 : vector<2x32xf32>
    %377 = vector.extract_strided_slice %355 {offsets = [0, 5], sizes = [2, 1], strides = [1, 1]} : vector<2x8xf32> to vector<2x1xf32>
    %378 = vector.broadcast %377 : vector<2x1xf32> to vector<2x32xf32>
    %379 = arith.mulf %378, %248 : vector<2x32xf32>
    %380 = arith.addf %376, %379 : vector<2x32xf32>
    %381 = vector.extract_strided_slice %355 {offsets = [0, 6], sizes = [2, 1], strides = [1, 1]} : vector<2x8xf32> to vector<2x1xf32>
    %382 = vector.broadcast %381 : vector<2x1xf32> to vector<2x32xf32>
    %383 = arith.mulf %382, %288 : vector<2x32xf32>
    %384 = arith.addf %380, %383 : vector<2x32xf32>
    %385 = vector.extract_strided_slice %355 {offsets = [0, 7], sizes = [2, 1], strides = [1, 1]} : vector<2x8xf32> to vector<2x1xf32>
    %386 = vector.broadcast %385 : vector<2x1xf32> to vector<2x32xf32>
    %387 = arith.mulf %386, %328 : vector<2x32xf32>
    %388 = arith.addf %384, %387 : vector<2x32xf32>
    %c0_95 = arith.constant 0 : index
    %c0_96 = arith.constant 0 : index
    %389 = vector.load %arg3[%c0_95, %c0_96] : memref<16x1xf32, #tpu.memory_space<vmem>>, vector<16x1xf32>
    %c0_97 = arith.constant 0 : index
    %c0_98 = arith.constant 0 : index
    %390 = vector.load %arg10[%c0_97, %c0_98] : memref<1x96xf32, #tpu.memory_space<vmem>>, vector<1x96xf32>
    %391 = vector.broadcast %389 : vector<16x1xf32> to vector<16x96xf32>
    %392 = vector.broadcast %390 : vector<1x96xf32> to vector<16x96xf32>
    %393 = arith.mulf %391, %392 : vector<16x96xf32>
    %c0_99 = arith.constant 0 : index
    %c0_100 = arith.constant 0 : index
    %394 = vector.load %arg12[%c0_99, %c0_100] : memref<1x96xf32, #tpu.memory_space<vmem>>, vector<1x96xf32>
    %395 = vector.broadcast %394 : vector<1x96xf32> to vector<16x96xf32>
    %396 = arith.addf %393, %395 : vector<16x96xf32>
    %cst_101 = arith.constant 0.000000e+00 : f32
    %397 = vector.broadcast %cst_101 : f32 to vector<2x32xf32>
    %398 = vector.extract_strided_slice %396 {offsets = [0, 0], sizes = [2, 96], strides = [1, 1]} : vector<16x96xf32> to vector<2x96xf32>
    %c0_102 = arith.constant 0 : index
    %c0_103 = arith.constant 0 : index
    %399 = vector.load %arg11[%c0_102, %c0_103] : memref<32x96xf32, #tpu.memory_space<vmem>>, vector<32x96xf32>
    %cst_104 = arith.constant dense<0.000000e+00> : vector<2x96xf32>
    %400 = tpu.matmul %397, %399, %cst_104 {dimension_numbers = #tpu.dot_dimension_numbers<[1], [0], [0], [1], [0, 0, 1, 1], [], []>} : vector<2x32xf32>, vector<32x96xf32>, vector<2x96xf32> -> vector<2x96xf32>
    %c0_105 = arith.constant 0 : index
    %c0_106 = arith.constant 0 : index
    %401 = vector.load %arg13[%c0_105, %c0_106] : memref<1x96xf32, #tpu.memory_space<vmem>>, vector<1x96xf32>
    %402 = vector.broadcast %401 : vector<1x96xf32> to vector<2x96xf32>
    %403 = arith.addf %400, %402 : vector<2x96xf32>
    %404 = vector.extract_strided_slice %398 {offsets = [0, 0], sizes = [2, 32], strides = [1, 1]} : vector<2x96xf32> to vector<2x32xf32>
    %405 = vector.extract_strided_slice %403 {offsets = [0, 0], sizes = [2, 32], strides = [1, 1]} : vector<2x96xf32> to vector<2x32xf32>
    %406 = arith.addf %404, %405 : vector<2x32xf32>
    %407 = arith.negf %406 : vector<2x32xf32>
    %408 = math.exp %407 : vector<2x32xf32>
    %cst_107 = arith.constant 1.000000e+00 : f32
    %409 = vector.broadcast %cst_107 : f32 to vector<2x32xf32>
    %410 = arith.addf %409, %408 : vector<2x32xf32>
    %411 = arith.divf %409, %410 : vector<2x32xf32>
    %412 = vector.extract_strided_slice %398 {offsets = [0, 32], sizes = [2, 32], strides = [1, 1]} : vector<2x96xf32> to vector<2x32xf32>
    %413 = vector.extract_strided_slice %403 {offsets = [0, 32], sizes = [2, 32], strides = [1, 1]} : vector<2x96xf32> to vector<2x32xf32>
    %414 = arith.addf %412, %413 : vector<2x32xf32>
    %415 = arith.negf %414 : vector<2x32xf32>
    %416 = math.exp %415 : vector<2x32xf32>
    %cst_108 = arith.constant 1.000000e+00 : f32
    %417 = vector.broadcast %cst_108 : f32 to vector<2x32xf32>
    %418 = arith.addf %417, %416 : vector<2x32xf32>
    %419 = arith.divf %417, %418 : vector<2x32xf32>
    %420 = vector.extract_strided_slice %398 {offsets = [0, 64], sizes = [2, 32], strides = [1, 1]} : vector<2x96xf32> to vector<2x32xf32>
    %421 = vector.extract_strided_slice %403 {offsets = [0, 64], sizes = [2, 32], strides = [1, 1]} : vector<2x96xf32> to vector<2x32xf32>
    %422 = arith.mulf %411, %421 : vector<2x32xf32>
    %423 = arith.addf %420, %422 : vector<2x32xf32>
    %424 = math.tanh %423 : vector<2x32xf32>
    %cst_109 = arith.constant 1.000000e+00 : f32
    %425 = vector.broadcast %cst_109 : f32 to vector<2x32xf32>
    %426 = arith.subf %425, %419 : vector<2x32xf32>
    %427 = arith.mulf %426, %424 : vector<2x32xf32>
    %428 = arith.mulf %419, %397 : vector<2x32xf32>
    %429 = arith.addf %427, %428 : vector<2x32xf32>
    %430 = vector.extract_strided_slice %1 {offsets = [0, 0], sizes = [2, 1], strides = [1, 1]} : vector<16x1xf32> to vector<2x1xf32>
    %431 = vector.broadcast %430 : vector<2x1xf32> to vector<2x32xf32>
    %432 = arith.mulf %431, %429 : vector<2x32xf32>
    %cst_110 = arith.constant 1.000000e+00 : f32
    %433 = vector.broadcast %cst_110 : f32 to vector<2x1xf32>
    %434 = arith.subf %433, %430 : vector<2x1xf32>
    %435 = vector.broadcast %434 : vector<2x1xf32> to vector<2x32xf32>
    %436 = arith.mulf %435, %397 : vector<2x32xf32>
    %437 = arith.addf %432, %436 : vector<2x32xf32>
    %438 = vector.extract_strided_slice %396 {offsets = [2, 0], sizes = [2, 96], strides = [1, 1]} : vector<16x96xf32> to vector<2x96xf32>
    %c0_111 = arith.constant 0 : index
    %c0_112 = arith.constant 0 : index
    %439 = vector.load %arg11[%c0_111, %c0_112] : memref<32x96xf32, #tpu.memory_space<vmem>>, vector<32x96xf32>
    %cst_113 = arith.constant dense<0.000000e+00> : vector<2x96xf32>
    %440 = tpu.matmul %437, %439, %cst_113 {dimension_numbers = #tpu.dot_dimension_numbers<[1], [0], [0], [1], [0, 0, 1, 1], [], []>} : vector<2x32xf32>, vector<32x96xf32>, vector<2x96xf32> -> vector<2x96xf32>
    %c0_114 = arith.constant 0 : index
    %c0_115 = arith.constant 0 : index
    %441 = vector.load %arg13[%c0_114, %c0_115] : memref<1x96xf32, #tpu.memory_space<vmem>>, vector<1x96xf32>
    %442 = vector.broadcast %441 : vector<1x96xf32> to vector<2x96xf32>
    %443 = arith.addf %440, %442 : vector<2x96xf32>
    %444 = vector.extract_strided_slice %438 {offsets = [0, 0], sizes = [2, 32], strides = [1, 1]} : vector<2x96xf32> to vector<2x32xf32>
    %445 = vector.extract_strided_slice %443 {offsets = [0, 0], sizes = [2, 32], strides = [1, 1]} : vector<2x96xf32> to vector<2x32xf32>
    %446 = arith.addf %444, %445 : vector<2x32xf32>
    %447 = arith.negf %446 : vector<2x32xf32>
    %448 = math.exp %447 : vector<2x32xf32>
    %cst_116 = arith.constant 1.000000e+00 : f32
    %449 = vector.broadcast %cst_116 : f32 to vector<2x32xf32>
    %450 = arith.addf %449, %448 : vector<2x32xf32>
    %451 = arith.divf %449, %450 : vector<2x32xf32>
    %452 = vector.extract_strided_slice %438 {offsets = [0, 32], sizes = [2, 32], strides = [1, 1]} : vector<2x96xf32> to vector<2x32xf32>
    %453 = vector.extract_strided_slice %443 {offsets = [0, 32], sizes = [2, 32], strides = [1, 1]} : vector<2x96xf32> to vector<2x32xf32>
    %454 = arith.addf %452, %453 : vector<2x32xf32>
    %455 = arith.negf %454 : vector<2x32xf32>
    %456 = math.exp %455 : vector<2x32xf32>
    %cst_117 = arith.constant 1.000000e+00 : f32
    %457 = vector.broadcast %cst_117 : f32 to vector<2x32xf32>
    %458 = arith.addf %457, %456 : vector<2x32xf32>
    %459 = arith.divf %457, %458 : vector<2x32xf32>
    %460 = vector.extract_strided_slice %438 {offsets = [0, 64], sizes = [2, 32], strides = [1, 1]} : vector<2x96xf32> to vector<2x32xf32>
    %461 = vector.extract_strided_slice %443 {offsets = [0, 64], sizes = [2, 32], strides = [1, 1]} : vector<2x96xf32> to vector<2x32xf32>
    %462 = arith.mulf %451, %461 : vector<2x32xf32>
    %463 = arith.addf %460, %462 : vector<2x32xf32>
    %464 = math.tanh %463 : vector<2x32xf32>
    %cst_118 = arith.constant 1.000000e+00 : f32
    %465 = vector.broadcast %cst_118 : f32 to vector<2x32xf32>
    %466 = arith.subf %465, %459 : vector<2x32xf32>
    %467 = arith.mulf %466, %464 : vector<2x32xf32>
    %468 = arith.mulf %459, %437 : vector<2x32xf32>
    %469 = arith.addf %467, %468 : vector<2x32xf32>
    %470 = vector.extract_strided_slice %1 {offsets = [2, 0], sizes = [2, 1], strides = [1, 1]} : vector<16x1xf32> to vector<2x1xf32>
    %471 = vector.broadcast %470 : vector<2x1xf32> to vector<2x32xf32>
    %472 = arith.mulf %471, %469 : vector<2x32xf32>
    %cst_119 = arith.constant 1.000000e+00 : f32
    %473 = vector.broadcast %cst_119 : f32 to vector<2x1xf32>
    %474 = arith.subf %473, %470 : vector<2x1xf32>
    %475 = vector.broadcast %474 : vector<2x1xf32> to vector<2x32xf32>
    %476 = arith.mulf %475, %437 : vector<2x32xf32>
    %477 = arith.addf %472, %476 : vector<2x32xf32>
    %478 = vector.extract_strided_slice %396 {offsets = [4, 0], sizes = [2, 96], strides = [1, 1]} : vector<16x96xf32> to vector<2x96xf32>
    %c0_120 = arith.constant 0 : index
    %c0_121 = arith.constant 0 : index
    %479 = vector.load %arg11[%c0_120, %c0_121] : memref<32x96xf32, #tpu.memory_space<vmem>>, vector<32x96xf32>
    %cst_122 = arith.constant dense<0.000000e+00> : vector<2x96xf32>
    %480 = tpu.matmul %477, %479, %cst_122 {dimension_numbers = #tpu.dot_dimension_numbers<[1], [0], [0], [1], [0, 0, 1, 1], [], []>} : vector<2x32xf32>, vector<32x96xf32>, vector<2x96xf32> -> vector<2x96xf32>
    %c0_123 = arith.constant 0 : index
    %c0_124 = arith.constant 0 : index
    %481 = vector.load %arg13[%c0_123, %c0_124] : memref<1x96xf32, #tpu.memory_space<vmem>>, vector<1x96xf32>
    %482 = vector.broadcast %481 : vector<1x96xf32> to vector<2x96xf32>
    %483 = arith.addf %480, %482 : vector<2x96xf32>
    %484 = vector.extract_strided_slice %478 {offsets = [0, 0], sizes = [2, 32], strides = [1, 1]} : vector<2x96xf32> to vector<2x32xf32>
    %485 = vector.extract_strided_slice %483 {offsets = [0, 0], sizes = [2, 32], strides = [1, 1]} : vector<2x96xf32> to vector<2x32xf32>
    %486 = arith.addf %484, %485 : vector<2x32xf32>
    %487 = arith.negf %486 : vector<2x32xf32>
    %488 = math.exp %487 : vector<2x32xf32>
    %cst_125 = arith.constant 1.000000e+00 : f32
    %489 = vector.broadcast %cst_125 : f32 to vector<2x32xf32>
    %490 = arith.addf %489, %488 : vector<2x32xf32>
    %491 = arith.divf %489, %490 : vector<2x32xf32>
    %492 = vector.extract_strided_slice %478 {offsets = [0, 32], sizes = [2, 32], strides = [1, 1]} : vector<2x96xf32> to vector<2x32xf32>
    %493 = vector.extract_strided_slice %483 {offsets = [0, 32], sizes = [2, 32], strides = [1, 1]} : vector<2x96xf32> to vector<2x32xf32>
    %494 = arith.addf %492, %493 : vector<2x32xf32>
    %495 = arith.negf %494 : vector<2x32xf32>
    %496 = math.exp %495 : vector<2x32xf32>
    %cst_126 = arith.constant 1.000000e+00 : f32
    %497 = vector.broadcast %cst_126 : f32 to vector<2x32xf32>
    %498 = arith.addf %497, %496 : vector<2x32xf32>
    %499 = arith.divf %497, %498 : vector<2x32xf32>
    %500 = vector.extract_strided_slice %478 {offsets = [0, 64], sizes = [2, 32], strides = [1, 1]} : vector<2x96xf32> to vector<2x32xf32>
    %501 = vector.extract_strided_slice %483 {offsets = [0, 64], sizes = [2, 32], strides = [1, 1]} : vector<2x96xf32> to vector<2x32xf32>
    %502 = arith.mulf %491, %501 : vector<2x32xf32>
    %503 = arith.addf %500, %502 : vector<2x32xf32>
    %504 = math.tanh %503 : vector<2x32xf32>
    %cst_127 = arith.constant 1.000000e+00 : f32
    %505 = vector.broadcast %cst_127 : f32 to vector<2x32xf32>
    %506 = arith.subf %505, %499 : vector<2x32xf32>
    %507 = arith.mulf %506, %504 : vector<2x32xf32>
    %508 = arith.mulf %499, %477 : vector<2x32xf32>
    %509 = arith.addf %507, %508 : vector<2x32xf32>
    %510 = vector.extract_strided_slice %1 {offsets = [4, 0], sizes = [2, 1], strides = [1, 1]} : vector<16x1xf32> to vector<2x1xf32>
    %511 = vector.broadcast %510 : vector<2x1xf32> to vector<2x32xf32>
    %512 = arith.mulf %511, %509 : vector<2x32xf32>
    %cst_128 = arith.constant 1.000000e+00 : f32
    %513 = vector.broadcast %cst_128 : f32 to vector<2x1xf32>
    %514 = arith.subf %513, %510 : vector<2x1xf32>
    %515 = vector.broadcast %514 : vector<2x1xf32> to vector<2x32xf32>
    %516 = arith.mulf %515, %477 : vector<2x32xf32>
    %517 = arith.addf %512, %516 : vector<2x32xf32>
    %518 = vector.extract_strided_slice %396 {offsets = [6, 0], sizes = [2, 96], strides = [1, 1]} : vector<16x96xf32> to vector<2x96xf32>
    %c0_129 = arith.constant 0 : index
    %c0_130 = arith.constant 0 : index
    %519 = vector.load %arg11[%c0_129, %c0_130] : memref<32x96xf32, #tpu.memory_space<vmem>>, vector<32x96xf32>
    %cst_131 = arith.constant dense<0.000000e+00> : vector<2x96xf32>
    %520 = tpu.matmul %517, %519, %cst_131 {dimension_numbers = #tpu.dot_dimension_numbers<[1], [0], [0], [1], [0, 0, 1, 1], [], []>} : vector<2x32xf32>, vector<32x96xf32>, vector<2x96xf32> -> vector<2x96xf32>
    %c0_132 = arith.constant 0 : index
    %c0_133 = arith.constant 0 : index
    %521 = vector.load %arg13[%c0_132, %c0_133] : memref<1x96xf32, #tpu.memory_space<vmem>>, vector<1x96xf32>
    %522 = vector.broadcast %521 : vector<1x96xf32> to vector<2x96xf32>
    %523 = arith.addf %520, %522 : vector<2x96xf32>
    %524 = vector.extract_strided_slice %518 {offsets = [0, 0], sizes = [2, 32], strides = [1, 1]} : vector<2x96xf32> to vector<2x32xf32>
    %525 = vector.extract_strided_slice %523 {offsets = [0, 0], sizes = [2, 32], strides = [1, 1]} : vector<2x96xf32> to vector<2x32xf32>
    %526 = arith.addf %524, %525 : vector<2x32xf32>
    %527 = arith.negf %526 : vector<2x32xf32>
    %528 = math.exp %527 : vector<2x32xf32>
    %cst_134 = arith.constant 1.000000e+00 : f32
    %529 = vector.broadcast %cst_134 : f32 to vector<2x32xf32>
    %530 = arith.addf %529, %528 : vector<2x32xf32>
    %531 = arith.divf %529, %530 : vector<2x32xf32>
    %532 = vector.extract_strided_slice %518 {offsets = [0, 32], sizes = [2, 32], strides = [1, 1]} : vector<2x96xf32> to vector<2x32xf32>
    %533 = vector.extract_strided_slice %523 {offsets = [0, 32], sizes = [2, 32], strides = [1, 1]} : vector<2x96xf32> to vector<2x32xf32>
    %534 = arith.addf %532, %533 : vector<2x32xf32>
    %535 = arith.negf %534 : vector<2x32xf32>
    %536 = math.exp %535 : vector<2x32xf32>
    %cst_135 = arith.constant 1.000000e+00 : f32
    %537 = vector.broadcast %cst_135 : f32 to vector<2x32xf32>
    %538 = arith.addf %537, %536 : vector<2x32xf32>
    %539 = arith.divf %537, %538 : vector<2x32xf32>
    %540 = vector.extract_strided_slice %518 {offsets = [0, 64], sizes = [2, 32], strides = [1, 1]} : vector<2x96xf32> to vector<2x32xf32>
    %541 = vector.extract_strided_slice %523 {offsets = [0, 64], sizes = [2, 32], strides = [1, 1]} : vector<2x96xf32> to vector<2x32xf32>
    %542 = arith.mulf %531, %541 : vector<2x32xf32>
    %543 = arith.addf %540, %542 : vector<2x32xf32>
    %544 = math.tanh %543 : vector<2x32xf32>
    %cst_136 = arith.constant 1.000000e+00 : f32
    %545 = vector.broadcast %cst_136 : f32 to vector<2x32xf32>
    %546 = arith.subf %545, %539 : vector<2x32xf32>
    %547 = arith.mulf %546, %544 : vector<2x32xf32>
    %548 = arith.mulf %539, %517 : vector<2x32xf32>
    %549 = arith.addf %547, %548 : vector<2x32xf32>
    %550 = vector.extract_strided_slice %1 {offsets = [6, 0], sizes = [2, 1], strides = [1, 1]} : vector<16x1xf32> to vector<2x1xf32>
    %551 = vector.broadcast %550 : vector<2x1xf32> to vector<2x32xf32>
    %552 = arith.mulf %551, %549 : vector<2x32xf32>
    %cst_137 = arith.constant 1.000000e+00 : f32
    %553 = vector.broadcast %cst_137 : f32 to vector<2x1xf32>
    %554 = arith.subf %553, %550 : vector<2x1xf32>
    %555 = vector.broadcast %554 : vector<2x1xf32> to vector<2x32xf32>
    %556 = arith.mulf %555, %517 : vector<2x32xf32>
    %557 = arith.addf %552, %556 : vector<2x32xf32>
    %558 = vector.extract_strided_slice %396 {offsets = [8, 0], sizes = [2, 96], strides = [1, 1]} : vector<16x96xf32> to vector<2x96xf32>
    %c0_138 = arith.constant 0 : index
    %c0_139 = arith.constant 0 : index
    %559 = vector.load %arg11[%c0_138, %c0_139] : memref<32x96xf32, #tpu.memory_space<vmem>>, vector<32x96xf32>
    %cst_140 = arith.constant dense<0.000000e+00> : vector<2x96xf32>
    %560 = tpu.matmul %557, %559, %cst_140 {dimension_numbers = #tpu.dot_dimension_numbers<[1], [0], [0], [1], [0, 0, 1, 1], [], []>} : vector<2x32xf32>, vector<32x96xf32>, vector<2x96xf32> -> vector<2x96xf32>
    %c0_141 = arith.constant 0 : index
    %c0_142 = arith.constant 0 : index
    %561 = vector.load %arg13[%c0_141, %c0_142] : memref<1x96xf32, #tpu.memory_space<vmem>>, vector<1x96xf32>
    %562 = vector.broadcast %561 : vector<1x96xf32> to vector<2x96xf32>
    %563 = arith.addf %560, %562 : vector<2x96xf32>
    %564 = vector.extract_strided_slice %558 {offsets = [0, 0], sizes = [2, 32], strides = [1, 1]} : vector<2x96xf32> to vector<2x32xf32>
    %565 = vector.extract_strided_slice %563 {offsets = [0, 0], sizes = [2, 32], strides = [1, 1]} : vector<2x96xf32> to vector<2x32xf32>
    %566 = arith.addf %564, %565 : vector<2x32xf32>
    %567 = arith.negf %566 : vector<2x32xf32>
    %568 = math.exp %567 : vector<2x32xf32>
    %cst_143 = arith.constant 1.000000e+00 : f32
    %569 = vector.broadcast %cst_143 : f32 to vector<2x32xf32>
    %570 = arith.addf %569, %568 : vector<2x32xf32>
    %571 = arith.divf %569, %570 : vector<2x32xf32>
    %572 = vector.extract_strided_slice %558 {offsets = [0, 32], sizes = [2, 32], strides = [1, 1]} : vector<2x96xf32> to vector<2x32xf32>
    %573 = vector.extract_strided_slice %563 {offsets = [0, 32], sizes = [2, 32], strides = [1, 1]} : vector<2x96xf32> to vector<2x32xf32>
    %574 = arith.addf %572, %573 : vector<2x32xf32>
    %575 = arith.negf %574 : vector<2x32xf32>
    %576 = math.exp %575 : vector<2x32xf32>
    %cst_144 = arith.constant 1.000000e+00 : f32
    %577 = vector.broadcast %cst_144 : f32 to vector<2x32xf32>
    %578 = arith.addf %577, %576 : vector<2x32xf32>
    %579 = arith.divf %577, %578 : vector<2x32xf32>
    %580 = vector.extract_strided_slice %558 {offsets = [0, 64], sizes = [2, 32], strides = [1, 1]} : vector<2x96xf32> to vector<2x32xf32>
    %581 = vector.extract_strided_slice %563 {offsets = [0, 64], sizes = [2, 32], strides = [1, 1]} : vector<2x96xf32> to vector<2x32xf32>
    %582 = arith.mulf %571, %581 : vector<2x32xf32>
    %583 = arith.addf %580, %582 : vector<2x32xf32>
    %584 = math.tanh %583 : vector<2x32xf32>
    %cst_145 = arith.constant 1.000000e+00 : f32
    %585 = vector.broadcast %cst_145 : f32 to vector<2x32xf32>
    %586 = arith.subf %585, %579 : vector<2x32xf32>
    %587 = arith.mulf %586, %584 : vector<2x32xf32>
    %588 = arith.mulf %579, %557 : vector<2x32xf32>
    %589 = arith.addf %587, %588 : vector<2x32xf32>
    %590 = vector.extract_strided_slice %1 {offsets = [8, 0], sizes = [2, 1], strides = [1, 1]} : vector<16x1xf32> to vector<2x1xf32>
    %591 = vector.broadcast %590 : vector<2x1xf32> to vector<2x32xf32>
    %592 = arith.mulf %591, %589 : vector<2x32xf32>
    %cst_146 = arith.constant 1.000000e+00 : f32
    %593 = vector.broadcast %cst_146 : f32 to vector<2x1xf32>
    %594 = arith.subf %593, %590 : vector<2x1xf32>
    %595 = vector.broadcast %594 : vector<2x1xf32> to vector<2x32xf32>
    %596 = arith.mulf %595, %557 : vector<2x32xf32>
    %597 = arith.addf %592, %596 : vector<2x32xf32>
    %598 = vector.extract_strided_slice %396 {offsets = [10, 0], sizes = [2, 96], strides = [1, 1]} : vector<16x96xf32> to vector<2x96xf32>
    %c0_147 = arith.constant 0 : index
    %c0_148 = arith.constant 0 : index
    %599 = vector.load %arg11[%c0_147, %c0_148] : memref<32x96xf32, #tpu.memory_space<vmem>>, vector<32x96xf32>
    %cst_149 = arith.constant dense<0.000000e+00> : vector<2x96xf32>
    %600 = tpu.matmul %597, %599, %cst_149 {dimension_numbers = #tpu.dot_dimension_numbers<[1], [0], [0], [1], [0, 0, 1, 1], [], []>} : vector<2x32xf32>, vector<32x96xf32>, vector<2x96xf32> -> vector<2x96xf32>
    %c0_150 = arith.constant 0 : index
    %c0_151 = arith.constant 0 : index
    %601 = vector.load %arg13[%c0_150, %c0_151] : memref<1x96xf32, #tpu.memory_space<vmem>>, vector<1x96xf32>
    %602 = vector.broadcast %601 : vector<1x96xf32> to vector<2x96xf32>
    %603 = arith.addf %600, %602 : vector<2x96xf32>
    %604 = vector.extract_strided_slice %598 {offsets = [0, 0], sizes = [2, 32], strides = [1, 1]} : vector<2x96xf32> to vector<2x32xf32>
    %605 = vector.extract_strided_slice %603 {offsets = [0, 0], sizes = [2, 32], strides = [1, 1]} : vector<2x96xf32> to vector<2x32xf32>
    %606 = arith.addf %604, %605 : vector<2x32xf32>
    %607 = arith.negf %606 : vector<2x32xf32>
    %608 = math.exp %607 : vector<2x32xf32>
    %cst_152 = arith.constant 1.000000e+00 : f32
    %609 = vector.broadcast %cst_152 : f32 to vector<2x32xf32>
    %610 = arith.addf %609, %608 : vector<2x32xf32>
    %611 = arith.divf %609, %610 : vector<2x32xf32>
    %612 = vector.extract_strided_slice %598 {offsets = [0, 32], sizes = [2, 32], strides = [1, 1]} : vector<2x96xf32> to vector<2x32xf32>
    %613 = vector.extract_strided_slice %603 {offsets = [0, 32], sizes = [2, 32], strides = [1, 1]} : vector<2x96xf32> to vector<2x32xf32>
    %614 = arith.addf %612, %613 : vector<2x32xf32>
    %615 = arith.negf %614 : vector<2x32xf32>
    %616 = math.exp %615 : vector<2x32xf32>
    %cst_153 = arith.constant 1.000000e+00 : f32
    %617 = vector.broadcast %cst_153 : f32 to vector<2x32xf32>
    %618 = arith.addf %617, %616 : vector<2x32xf32>
    %619 = arith.divf %617, %618 : vector<2x32xf32>
    %620 = vector.extract_strided_slice %598 {offsets = [0, 64], sizes = [2, 32], strides = [1, 1]} : vector<2x96xf32> to vector<2x32xf32>
    %621 = vector.extract_strided_slice %603 {offsets = [0, 64], sizes = [2, 32], strides = [1, 1]} : vector<2x96xf32> to vector<2x32xf32>
    %622 = arith.mulf %611, %621 : vector<2x32xf32>
    %623 = arith.addf %620, %622 : vector<2x32xf32>
    %624 = math.tanh %623 : vector<2x32xf32>
    %cst_154 = arith.constant 1.000000e+00 : f32
    %625 = vector.broadcast %cst_154 : f32 to vector<2x32xf32>
    %626 = arith.subf %625, %619 : vector<2x32xf32>
    %627 = arith.mulf %626, %624 : vector<2x32xf32>
    %628 = arith.mulf %619, %597 : vector<2x32xf32>
    %629 = arith.addf %627, %628 : vector<2x32xf32>
    %630 = vector.extract_strided_slice %1 {offsets = [10, 0], sizes = [2, 1], strides = [1, 1]} : vector<16x1xf32> to vector<2x1xf32>
    %631 = vector.broadcast %630 : vector<2x1xf32> to vector<2x32xf32>
    %632 = arith.mulf %631, %629 : vector<2x32xf32>
    %cst_155 = arith.constant 1.000000e+00 : f32
    %633 = vector.broadcast %cst_155 : f32 to vector<2x1xf32>
    %634 = arith.subf %633, %630 : vector<2x1xf32>
    %635 = vector.broadcast %634 : vector<2x1xf32> to vector<2x32xf32>
    %636 = arith.mulf %635, %597 : vector<2x32xf32>
    %637 = arith.addf %632, %636 : vector<2x32xf32>
    %638 = vector.extract_strided_slice %396 {offsets = [12, 0], sizes = [2, 96], strides = [1, 1]} : vector<16x96xf32> to vector<2x96xf32>
    %c0_156 = arith.constant 0 : index
    %c0_157 = arith.constant 0 : index
    %639 = vector.load %arg11[%c0_156, %c0_157] : memref<32x96xf32, #tpu.memory_space<vmem>>, vector<32x96xf32>
    %cst_158 = arith.constant dense<0.000000e+00> : vector<2x96xf32>
    %640 = tpu.matmul %637, %639, %cst_158 {dimension_numbers = #tpu.dot_dimension_numbers<[1], [0], [0], [1], [0, 0, 1, 1], [], []>} : vector<2x32xf32>, vector<32x96xf32>, vector<2x96xf32> -> vector<2x96xf32>
    %c0_159 = arith.constant 0 : index
    %c0_160 = arith.constant 0 : index
    %641 = vector.load %arg13[%c0_159, %c0_160] : memref<1x96xf32, #tpu.memory_space<vmem>>, vector<1x96xf32>
    %642 = vector.broadcast %641 : vector<1x96xf32> to vector<2x96xf32>
    %643 = arith.addf %640, %642 : vector<2x96xf32>
    %644 = vector.extract_strided_slice %638 {offsets = [0, 0], sizes = [2, 32], strides = [1, 1]} : vector<2x96xf32> to vector<2x32xf32>
    %645 = vector.extract_strided_slice %643 {offsets = [0, 0], sizes = [2, 32], strides = [1, 1]} : vector<2x96xf32> to vector<2x32xf32>
    %646 = arith.addf %644, %645 : vector<2x32xf32>
    %647 = arith.negf %646 : vector<2x32xf32>
    %648 = math.exp %647 : vector<2x32xf32>
    %cst_161 = arith.constant 1.000000e+00 : f32
    %649 = vector.broadcast %cst_161 : f32 to vector<2x32xf32>
    %650 = arith.addf %649, %648 : vector<2x32xf32>
    %651 = arith.divf %649, %650 : vector<2x32xf32>
    %652 = vector.extract_strided_slice %638 {offsets = [0, 32], sizes = [2, 32], strides = [1, 1]} : vector<2x96xf32> to vector<2x32xf32>
    %653 = vector.extract_strided_slice %643 {offsets = [0, 32], sizes = [2, 32], strides = [1, 1]} : vector<2x96xf32> to vector<2x32xf32>
    %654 = arith.addf %652, %653 : vector<2x32xf32>
    %655 = arith.negf %654 : vector<2x32xf32>
    %656 = math.exp %655 : vector<2x32xf32>
    %cst_162 = arith.constant 1.000000e+00 : f32
    %657 = vector.broadcast %cst_162 : f32 to vector<2x32xf32>
    %658 = arith.addf %657, %656 : vector<2x32xf32>
    %659 = arith.divf %657, %658 : vector<2x32xf32>
    %660 = vector.extract_strided_slice %638 {offsets = [0, 64], sizes = [2, 32], strides = [1, 1]} : vector<2x96xf32> to vector<2x32xf32>
    %661 = vector.extract_strided_slice %643 {offsets = [0, 64], sizes = [2, 32], strides = [1, 1]} : vector<2x96xf32> to vector<2x32xf32>
    %662 = arith.mulf %651, %661 : vector<2x32xf32>
    %663 = arith.addf %660, %662 : vector<2x32xf32>
    %664 = math.tanh %663 : vector<2x32xf32>
    %cst_163 = arith.constant 1.000000e+00 : f32
    %665 = vector.broadcast %cst_163 : f32 to vector<2x32xf32>
    %666 = arith.subf %665, %659 : vector<2x32xf32>
    %667 = arith.mulf %666, %664 : vector<2x32xf32>
    %668 = arith.mulf %659, %637 : vector<2x32xf32>
    %669 = arith.addf %667, %668 : vector<2x32xf32>
    %670 = vector.extract_strided_slice %1 {offsets = [12, 0], sizes = [2, 1], strides = [1, 1]} : vector<16x1xf32> to vector<2x1xf32>
    %671 = vector.broadcast %670 : vector<2x1xf32> to vector<2x32xf32>
    %672 = arith.mulf %671, %669 : vector<2x32xf32>
    %cst_164 = arith.constant 1.000000e+00 : f32
    %673 = vector.broadcast %cst_164 : f32 to vector<2x1xf32>
    %674 = arith.subf %673, %670 : vector<2x1xf32>
    %675 = vector.broadcast %674 : vector<2x1xf32> to vector<2x32xf32>
    %676 = arith.mulf %675, %637 : vector<2x32xf32>
    %677 = arith.addf %672, %676 : vector<2x32xf32>
    %678 = vector.extract_strided_slice %396 {offsets = [14, 0], sizes = [2, 96], strides = [1, 1]} : vector<16x96xf32> to vector<2x96xf32>
    %c0_165 = arith.constant 0 : index
    %c0_166 = arith.constant 0 : index
    %679 = vector.load %arg11[%c0_165, %c0_166] : memref<32x96xf32, #tpu.memory_space<vmem>>, vector<32x96xf32>
    %cst_167 = arith.constant dense<0.000000e+00> : vector<2x96xf32>
    %680 = tpu.matmul %677, %679, %cst_167 {dimension_numbers = #tpu.dot_dimension_numbers<[1], [0], [0], [1], [0, 0, 1, 1], [], []>} : vector<2x32xf32>, vector<32x96xf32>, vector<2x96xf32> -> vector<2x96xf32>
    %c0_168 = arith.constant 0 : index
    %c0_169 = arith.constant 0 : index
    %681 = vector.load %arg13[%c0_168, %c0_169] : memref<1x96xf32, #tpu.memory_space<vmem>>, vector<1x96xf32>
    %682 = vector.broadcast %681 : vector<1x96xf32> to vector<2x96xf32>
    %683 = arith.addf %680, %682 : vector<2x96xf32>
    %684 = vector.extract_strided_slice %678 {offsets = [0, 0], sizes = [2, 32], strides = [1, 1]} : vector<2x96xf32> to vector<2x32xf32>
    %685 = vector.extract_strided_slice %683 {offsets = [0, 0], sizes = [2, 32], strides = [1, 1]} : vector<2x96xf32> to vector<2x32xf32>
    %686 = arith.addf %684, %685 : vector<2x32xf32>
    %687 = arith.negf %686 : vector<2x32xf32>
    %688 = math.exp %687 : vector<2x32xf32>
    %cst_170 = arith.constant 1.000000e+00 : f32
    %689 = vector.broadcast %cst_170 : f32 to vector<2x32xf32>
    %690 = arith.addf %689, %688 : vector<2x32xf32>
    %691 = arith.divf %689, %690 : vector<2x32xf32>
    %692 = vector.extract_strided_slice %678 {offsets = [0, 32], sizes = [2, 32], strides = [1, 1]} : vector<2x96xf32> to vector<2x32xf32>
    %693 = vector.extract_strided_slice %683 {offsets = [0, 32], sizes = [2, 32], strides = [1, 1]} : vector<2x96xf32> to vector<2x32xf32>
    %694 = arith.addf %692, %693 : vector<2x32xf32>
    %695 = arith.negf %694 : vector<2x32xf32>
    %696 = math.exp %695 : vector<2x32xf32>
    %cst_171 = arith.constant 1.000000e+00 : f32
    %697 = vector.broadcast %cst_171 : f32 to vector<2x32xf32>
    %698 = arith.addf %697, %696 : vector<2x32xf32>
    %699 = arith.divf %697, %698 : vector<2x32xf32>
    %700 = vector.extract_strided_slice %678 {offsets = [0, 64], sizes = [2, 32], strides = [1, 1]} : vector<2x96xf32> to vector<2x32xf32>
    %701 = vector.extract_strided_slice %683 {offsets = [0, 64], sizes = [2, 32], strides = [1, 1]} : vector<2x96xf32> to vector<2x32xf32>
    %702 = arith.mulf %691, %701 : vector<2x32xf32>
    %703 = arith.addf %700, %702 : vector<2x32xf32>
    %704 = math.tanh %703 : vector<2x32xf32>
    %cst_172 = arith.constant 1.000000e+00 : f32
    %705 = vector.broadcast %cst_172 : f32 to vector<2x32xf32>
    %706 = arith.subf %705, %699 : vector<2x32xf32>
    %707 = arith.mulf %706, %704 : vector<2x32xf32>
    %708 = arith.mulf %699, %677 : vector<2x32xf32>
    %709 = arith.addf %707, %708 : vector<2x32xf32>
    %710 = vector.extract_strided_slice %1 {offsets = [14, 0], sizes = [2, 1], strides = [1, 1]} : vector<16x1xf32> to vector<2x1xf32>
    %711 = vector.broadcast %710 : vector<2x1xf32> to vector<2x32xf32>
    %712 = arith.mulf %711, %709 : vector<2x32xf32>
    %cst_173 = arith.constant 1.000000e+00 : f32
    %713 = vector.broadcast %cst_173 : f32 to vector<2x1xf32>
    %714 = arith.subf %713, %710 : vector<2x1xf32>
    %715 = vector.broadcast %714 : vector<2x1xf32> to vector<2x32xf32>
    %716 = arith.mulf %715, %677 : vector<2x32xf32>
    %717 = arith.addf %712, %716 : vector<2x32xf32>
    %718 = arith.addf %388, %717 : vector<2x32xf32>
    %cst_174 = arith.constant dense<0.000000e+00> : vector<32xf32>
    %719 = vector.multi_reduction <add>, %718, %cst_174 [0] : vector<2x32xf32> to vector<32xf32>
    %720 = vector.shape_cast %719 : vector<32xf32> to vector<1x32xf32>
    %cst_175 = arith.constant 2.000000e+00 : f32
    %721 = vector.broadcast %cst_175 : f32 to vector<1x32xf32>
    %722 = arith.divf %720, %721 : vector<1x32xf32>
    %723 = vector.broadcast %722 : vector<1x32xf32> to vector<2x32xf32>
    %724 = arith.subf %718, %723 : vector<2x32xf32>
    %725 = arith.mulf %724, %724 : vector<2x32xf32>
    %cst_176 = arith.constant dense<0.000000e+00> : vector<32xf32>
    %726 = vector.multi_reduction <add>, %725, %cst_176 [0] : vector<2x32xf32> to vector<32xf32>
    %727 = vector.shape_cast %726 : vector<32xf32> to vector<1x32xf32>
    %cst_177 = arith.constant 2.000000e+00 : f32
    %728 = vector.broadcast %cst_177 : f32 to vector<1x32xf32>
    %729 = arith.divf %727, %728 : vector<1x32xf32>
    %cst_178 = arith.constant 9.99999974E-6 : f32
    %730 = vector.broadcast %cst_178 : f32 to vector<1x32xf32>
    %731 = arith.addf %729, %730 : vector<1x32xf32>
    %732 = math.rsqrt %731 : vector<1x32xf32>
    %733 = vector.broadcast %732 : vector<1x32xf32> to vector<2x32xf32>
    %734 = arith.mulf %724, %733 : vector<2x32xf32>
    %c0_179 = arith.constant 0 : index
    %c0_180 = arith.constant 0 : index
    %735 = vector.load %arg14[%c0_179, %c0_180] : memref<1x32xf32, #tpu.memory_space<vmem>>, vector<1x32xf32>
    %736 = vector.broadcast %735 : vector<1x32xf32> to vector<2x32xf32>
    %737 = arith.mulf %734, %736 : vector<2x32xf32>
    %c0_181 = arith.constant 0 : index
    %c0_182 = arith.constant 0 : index
    %738 = vector.load %arg15[%c0_181, %c0_182] : memref<1x32xf32, #tpu.memory_space<vmem>>, vector<1x32xf32>
    %739 = vector.broadcast %738 : vector<1x32xf32> to vector<2x32xf32>
    %740 = arith.addf %737, %739 : vector<2x32xf32>
    %c0_183 = arith.constant 0 : index
    %c0_184 = arith.constant 0 : index
    %741 = vector.load %arg16[%c0_183, %c0_184] : memref<32x224xf32, #tpu.memory_space<vmem>>, vector<32x224xf32>
    %cst_185 = arith.constant dense<0.000000e+00> : vector<2x224xf32>
    %742 = tpu.matmul %740, %741, %cst_185 {dimension_numbers = #tpu.dot_dimension_numbers<[1], [0], [0], [1], [0, 0, 1, 1], [], []>} : vector<2x32xf32>, vector<32x224xf32>, vector<2x224xf32> -> vector<2x224xf32>
    %743 = vector.extract_strided_slice %742 {offsets = [0, 0], sizes = [2, 96], strides = [1, 1]} : vector<2x224xf32> to vector<2x96xf32>
    %c0_186 = arith.constant 0 : index
    %c0_187 = arith.constant 0 : index
    %744 = vector.load %arg19[%c0_186, %c0_187] : memref<1x96xf32, #tpu.memory_space<vmem>>, vector<1x96xf32>
    %745 = vector.broadcast %744 : vector<1x96xf32> to vector<2x96xf32>
    %746 = arith.addf %743, %745 : vector<2x96xf32>
    %c0_188 = arith.constant 0 : index
    %c0_189 = arith.constant 0 : index
    %747 = vector.load %arg17[%c0_188, %c0_189] : memref<1x96xf32, #tpu.memory_space<vmem>>, vector<1x96xf32>
    %748 = vector.extract_strided_slice %747 {offsets = [0, 0], sizes = [1, 32], strides = [1, 1]} : vector<1x96xf32> to vector<1x32xf32>
    %749 = vector.extract_strided_slice %746 {offsets = [0, 0], sizes = [2, 32], strides = [1, 1]} : vector<2x96xf32> to vector<2x32xf32>
    %750 = vector.broadcast %748 : vector<1x32xf32> to vector<2x32xf32>
    %751 = arith.addf %750, %749 : vector<2x32xf32>
    %752 = arith.negf %751 : vector<2x32xf32>
    %753 = math.exp %752 : vector<2x32xf32>
    %cst_190 = arith.constant 1.000000e+00 : f32
    %754 = vector.broadcast %cst_190 : f32 to vector<2x32xf32>
    %755 = arith.addf %754, %753 : vector<2x32xf32>
    %756 = arith.divf %754, %755 : vector<2x32xf32>
    %757 = vector.extract_strided_slice %747 {offsets = [0, 32], sizes = [1, 32], strides = [1, 1]} : vector<1x96xf32> to vector<1x32xf32>
    %758 = vector.extract_strided_slice %746 {offsets = [0, 32], sizes = [2, 32], strides = [1, 1]} : vector<2x96xf32> to vector<2x32xf32>
    %759 = vector.broadcast %757 : vector<1x32xf32> to vector<2x32xf32>
    %760 = arith.addf %759, %758 : vector<2x32xf32>
    %761 = arith.negf %760 : vector<2x32xf32>
    %762 = math.exp %761 : vector<2x32xf32>
    %cst_191 = arith.constant 1.000000e+00 : f32
    %763 = vector.broadcast %cst_191 : f32 to vector<2x32xf32>
    %764 = arith.addf %763, %762 : vector<2x32xf32>
    %765 = arith.divf %763, %764 : vector<2x32xf32>
    %766 = vector.extract_strided_slice %747 {offsets = [0, 64], sizes = [1, 32], strides = [1, 1]} : vector<1x96xf32> to vector<1x32xf32>
    %767 = vector.extract_strided_slice %746 {offsets = [0, 64], sizes = [2, 32], strides = [1, 1]} : vector<2x96xf32> to vector<2x32xf32>
    %768 = arith.mulf %756, %767 : vector<2x32xf32>
    %769 = vector.broadcast %766 : vector<1x32xf32> to vector<2x32xf32>
    %770 = arith.addf %769, %768 : vector<2x32xf32>
    %771 = math.tanh %770 : vector<2x32xf32>
    %cst_192 = arith.constant 1.000000e+00 : f32
    %772 = vector.broadcast %cst_192 : f32 to vector<2x32xf32>
    %773 = arith.subf %772, %765 : vector<2x32xf32>
    %774 = arith.mulf %773, %771 : vector<2x32xf32>
    %775 = arith.mulf %765, %740 : vector<2x32xf32>
    %776 = arith.addf %774, %775 : vector<2x32xf32>
    %c0_193 = arith.constant 0 : index
    %c0_194 = arith.constant 0 : index
    %777 = vector.load %arg16[%c0_193, %c0_194] : memref<32x224xf32, #tpu.memory_space<vmem>>, vector<32x224xf32>
    %cst_195 = arith.constant dense<0.000000e+00> : vector<2x224xf32>
    %778 = tpu.matmul %776, %777, %cst_195 {dimension_numbers = #tpu.dot_dimension_numbers<[1], [0], [0], [1], [0, 0, 1, 1], [], []>} : vector<2x32xf32>, vector<32x224xf32>, vector<2x224xf32> -> vector<2x224xf32>
    %779 = vector.extract_strided_slice %778 {offsets = [0, 0], sizes = [2, 96], strides = [1, 1]} : vector<2x224xf32> to vector<2x96xf32>
    %c0_196 = arith.constant 0 : index
    %c0_197 = arith.constant 0 : index
    %780 = vector.load %arg19[%c0_196, %c0_197] : memref<1x96xf32, #tpu.memory_space<vmem>>, vector<1x96xf32>
    %781 = vector.broadcast %780 : vector<1x96xf32> to vector<2x96xf32>
    %782 = arith.addf %779, %781 : vector<2x96xf32>
    %783 = vector.extract_strided_slice %778 {offsets = [0, 128], sizes = [2, 96], strides = [1, 1]} : vector<2x224xf32> to vector<2x96xf32>
    %c0_198 = arith.constant 0 : index
    %c0_199 = arith.constant 0 : index
    %784 = vector.load %arg18[%c0_198, %c0_199] : memref<1x96xf32, #tpu.memory_space<vmem>>, vector<1x96xf32>
    %785 = vector.broadcast %784 : vector<1x96xf32> to vector<2x96xf32>
    %786 = arith.addf %783, %785 : vector<2x96xf32>
    %787 = vector.extract_strided_slice %786 {offsets = [0, 0], sizes = [2, 32], strides = [1, 1]} : vector<2x96xf32> to vector<2x32xf32>
    %788 = vector.extract_strided_slice %782 {offsets = [0, 0], sizes = [2, 32], strides = [1, 1]} : vector<2x96xf32> to vector<2x32xf32>
    %789 = arith.addf %787, %788 : vector<2x32xf32>
    %790 = arith.negf %789 : vector<2x32xf32>
    %791 = math.exp %790 : vector<2x32xf32>
    %cst_200 = arith.constant 1.000000e+00 : f32
    %792 = vector.broadcast %cst_200 : f32 to vector<2x32xf32>
    %793 = arith.addf %792, %791 : vector<2x32xf32>
    %794 = arith.divf %792, %793 : vector<2x32xf32>
    %795 = vector.extract_strided_slice %786 {offsets = [0, 32], sizes = [2, 32], strides = [1, 1]} : vector<2x96xf32> to vector<2x32xf32>
    %796 = vector.extract_strided_slice %782 {offsets = [0, 32], sizes = [2, 32], strides = [1, 1]} : vector<2x96xf32> to vector<2x32xf32>
    %797 = arith.addf %795, %796 : vector<2x32xf32>
    %798 = arith.negf %797 : vector<2x32xf32>
    %799 = math.exp %798 : vector<2x32xf32>
    %cst_201 = arith.constant 1.000000e+00 : f32
    %800 = vector.broadcast %cst_201 : f32 to vector<2x32xf32>
    %801 = arith.addf %800, %799 : vector<2x32xf32>
    %802 = arith.divf %800, %801 : vector<2x32xf32>
    %803 = vector.extract_strided_slice %786 {offsets = [0, 64], sizes = [2, 32], strides = [1, 1]} : vector<2x96xf32> to vector<2x32xf32>
    %804 = vector.extract_strided_slice %782 {offsets = [0, 64], sizes = [2, 32], strides = [1, 1]} : vector<2x96xf32> to vector<2x32xf32>
    %805 = arith.mulf %794, %804 : vector<2x32xf32>
    %806 = arith.addf %803, %805 : vector<2x32xf32>
    %807 = math.tanh %806 : vector<2x32xf32>
    %cst_202 = arith.constant 1.000000e+00 : f32
    %808 = vector.broadcast %cst_202 : f32 to vector<2x32xf32>
    %809 = arith.subf %808, %802 : vector<2x32xf32>
    %810 = arith.mulf %809, %807 : vector<2x32xf32>
    %811 = arith.mulf %802, %776 : vector<2x32xf32>
    %812 = arith.addf %810, %811 : vector<2x32xf32>
    %c0_203 = arith.constant 0 : index
    %c0_204 = arith.constant 0 : index
    %813 = vector.load %arg16[%c0_203, %c0_204] : memref<32x224xf32, #tpu.memory_space<vmem>>, vector<32x224xf32>
    %cst_205 = arith.constant dense<0.000000e+00> : vector<2x224xf32>
    %814 = tpu.matmul %812, %813, %cst_205 {dimension_numbers = #tpu.dot_dimension_numbers<[1], [0], [0], [1], [0, 0, 1, 1], [], []>} : vector<2x32xf32>, vector<32x224xf32>, vector<2x224xf32> -> vector<2x224xf32>
    %815 = vector.extract_strided_slice %814 {offsets = [0, 0], sizes = [2, 96], strides = [1, 1]} : vector<2x224xf32> to vector<2x96xf32>
    %c0_206 = arith.constant 0 : index
    %c0_207 = arith.constant 0 : index
    %816 = vector.load %arg19[%c0_206, %c0_207] : memref<1x96xf32, #tpu.memory_space<vmem>>, vector<1x96xf32>
    %817 = vector.broadcast %816 : vector<1x96xf32> to vector<2x96xf32>
    %818 = arith.addf %815, %817 : vector<2x96xf32>
    %819 = vector.extract_strided_slice %814 {offsets = [0, 128], sizes = [2, 96], strides = [1, 1]} : vector<2x224xf32> to vector<2x96xf32>
    %c0_208 = arith.constant 0 : index
    %c0_209 = arith.constant 0 : index
    %820 = vector.load %arg18[%c0_208, %c0_209] : memref<1x96xf32, #tpu.memory_space<vmem>>, vector<1x96xf32>
    %821 = vector.broadcast %820 : vector<1x96xf32> to vector<2x96xf32>
    %822 = arith.addf %819, %821 : vector<2x96xf32>
    %823 = vector.extract_strided_slice %822 {offsets = [0, 0], sizes = [2, 32], strides = [1, 1]} : vector<2x96xf32> to vector<2x32xf32>
    %824 = vector.extract_strided_slice %818 {offsets = [0, 0], sizes = [2, 32], strides = [1, 1]} : vector<2x96xf32> to vector<2x32xf32>
    %825 = arith.addf %823, %824 : vector<2x32xf32>
    %826 = arith.negf %825 : vector<2x32xf32>
    %827 = math.exp %826 : vector<2x32xf32>
    %cst_210 = arith.constant 1.000000e+00 : f32
    %828 = vector.broadcast %cst_210 : f32 to vector<2x32xf32>
    %829 = arith.addf %828, %827 : vector<2x32xf32>
    %830 = arith.divf %828, %829 : vector<2x32xf32>
    %831 = vector.extract_strided_slice %822 {offsets = [0, 32], sizes = [2, 32], strides = [1, 1]} : vector<2x96xf32> to vector<2x32xf32>
    %832 = vector.extract_strided_slice %818 {offsets = [0, 32], sizes = [2, 32], strides = [1, 1]} : vector<2x96xf32> to vector<2x32xf32>
    %833 = arith.addf %831, %832 : vector<2x32xf32>
    %834 = arith.negf %833 : vector<2x32xf32>
    %835 = math.exp %834 : vector<2x32xf32>
    %cst_211 = arith.constant 1.000000e+00 : f32
    %836 = vector.broadcast %cst_211 : f32 to vector<2x32xf32>
    %837 = arith.addf %836, %835 : vector<2x32xf32>
    %838 = arith.divf %836, %837 : vector<2x32xf32>
    %839 = vector.extract_strided_slice %822 {offsets = [0, 64], sizes = [2, 32], strides = [1, 1]} : vector<2x96xf32> to vector<2x32xf32>
    %840 = vector.extract_strided_slice %818 {offsets = [0, 64], sizes = [2, 32], strides = [1, 1]} : vector<2x96xf32> to vector<2x32xf32>
    %841 = arith.mulf %830, %840 : vector<2x32xf32>
    %842 = arith.addf %839, %841 : vector<2x32xf32>
    %843 = math.tanh %842 : vector<2x32xf32>
    %cst_212 = arith.constant 1.000000e+00 : f32
    %844 = vector.broadcast %cst_212 : f32 to vector<2x32xf32>
    %845 = arith.subf %844, %838 : vector<2x32xf32>
    %846 = arith.mulf %845, %843 : vector<2x32xf32>
    %847 = arith.mulf %838, %812 : vector<2x32xf32>
    %848 = arith.addf %846, %847 : vector<2x32xf32>
    %c0_213 = arith.constant 0 : index
    %c0_214 = arith.constant 0 : index
    %849 = vector.load %arg16[%c0_213, %c0_214] : memref<32x224xf32, #tpu.memory_space<vmem>>, vector<32x224xf32>
    %cst_215 = arith.constant dense<0.000000e+00> : vector<2x224xf32>
    %850 = tpu.matmul %848, %849, %cst_215 {dimension_numbers = #tpu.dot_dimension_numbers<[1], [0], [0], [1], [0, 0, 1, 1], [], []>} : vector<2x32xf32>, vector<32x224xf32>, vector<2x224xf32> -> vector<2x224xf32>
    %851 = vector.extract_strided_slice %850 {offsets = [0, 0], sizes = [2, 96], strides = [1, 1]} : vector<2x224xf32> to vector<2x96xf32>
    %c0_216 = arith.constant 0 : index
    %c0_217 = arith.constant 0 : index
    %852 = vector.load %arg19[%c0_216, %c0_217] : memref<1x96xf32, #tpu.memory_space<vmem>>, vector<1x96xf32>
    %853 = vector.broadcast %852 : vector<1x96xf32> to vector<2x96xf32>
    %854 = arith.addf %851, %853 : vector<2x96xf32>
    %855 = vector.extract_strided_slice %850 {offsets = [0, 128], sizes = [2, 96], strides = [1, 1]} : vector<2x224xf32> to vector<2x96xf32>
    %c0_218 = arith.constant 0 : index
    %c0_219 = arith.constant 0 : index
    %856 = vector.load %arg18[%c0_218, %c0_219] : memref<1x96xf32, #tpu.memory_space<vmem>>, vector<1x96xf32>
    %857 = vector.broadcast %856 : vector<1x96xf32> to vector<2x96xf32>
    %858 = arith.addf %855, %857 : vector<2x96xf32>
    %859 = vector.extract_strided_slice %858 {offsets = [0, 0], sizes = [2, 32], strides = [1, 1]} : vector<2x96xf32> to vector<2x32xf32>
    %860 = vector.extract_strided_slice %854 {offsets = [0, 0], sizes = [2, 32], strides = [1, 1]} : vector<2x96xf32> to vector<2x32xf32>
    %861 = arith.addf %859, %860 : vector<2x32xf32>
    %862 = arith.negf %861 : vector<2x32xf32>
    %863 = math.exp %862 : vector<2x32xf32>
    %cst_220 = arith.constant 1.000000e+00 : f32
    %864 = vector.broadcast %cst_220 : f32 to vector<2x32xf32>
    %865 = arith.addf %864, %863 : vector<2x32xf32>
    %866 = arith.divf %864, %865 : vector<2x32xf32>
    %867 = vector.extract_strided_slice %858 {offsets = [0, 32], sizes = [2, 32], strides = [1, 1]} : vector<2x96xf32> to vector<2x32xf32>
    %868 = vector.extract_strided_slice %854 {offsets = [0, 32], sizes = [2, 32], strides = [1, 1]} : vector<2x96xf32> to vector<2x32xf32>
    %869 = arith.addf %867, %868 : vector<2x32xf32>
    %870 = arith.negf %869 : vector<2x32xf32>
    %871 = math.exp %870 : vector<2x32xf32>
    %cst_221 = arith.constant 1.000000e+00 : f32
    %872 = vector.broadcast %cst_221 : f32 to vector<2x32xf32>
    %873 = arith.addf %872, %871 : vector<2x32xf32>
    %874 = arith.divf %872, %873 : vector<2x32xf32>
    %875 = vector.extract_strided_slice %858 {offsets = [0, 64], sizes = [2, 32], strides = [1, 1]} : vector<2x96xf32> to vector<2x32xf32>
    %876 = vector.extract_strided_slice %854 {offsets = [0, 64], sizes = [2, 32], strides = [1, 1]} : vector<2x96xf32> to vector<2x32xf32>
    %877 = arith.mulf %866, %876 : vector<2x32xf32>
    %878 = arith.addf %875, %877 : vector<2x32xf32>
    %879 = math.tanh %878 : vector<2x32xf32>
    %cst_222 = arith.constant 1.000000e+00 : f32
    %880 = vector.broadcast %cst_222 : f32 to vector<2x32xf32>
    %881 = arith.subf %880, %874 : vector<2x32xf32>
    %882 = arith.mulf %881, %879 : vector<2x32xf32>
    %883 = arith.mulf %874, %848 : vector<2x32xf32>
    %884 = arith.addf %882, %883 : vector<2x32xf32>
    %885 = tpu.concatenate %776, %812, %848, %884 in 1 : vector<2x32xf32>, vector<2x32xf32>, vector<2x32xf32>, vector<2x32xf32> -> vector<2x128xf32>
    %c0_223 = arith.constant 0 : index
    %c0_224 = arith.constant 0 : index
    %886 = vector.load %arg20[%c0_223, %c0_224] : memref<128x4xf32, #tpu.memory_space<vmem>>, vector<128x4xf32>
    %cst_225 = arith.constant dense<0.000000e+00> : vector<2x4xf32>
    %887 = tpu.matmul %885, %886, %cst_225 {dimension_numbers = #tpu.dot_dimension_numbers<[1], [0], [0], [1], [0, 0, 1, 1], [], []>} : vector<2x128xf32>, vector<128x4xf32>, vector<2x4xf32> -> vector<2x4xf32>
    %c0_226 = arith.constant 0 : index
    %c0_227 = arith.constant 0 : index
    %888 = vector.load %arg21[%c0_226, %c0_227] : memref<1x1xf32, #tpu.memory_space<vmem>>, vector<1x1xf32>
    %889 = vector.broadcast %888 : vector<1x1xf32> to vector<2x4xf32>
    %890 = arith.addf %887, %889 : vector<2x4xf32>
    %cst_228 = arith.constant 0.000000e+00 : f32
    %891 = vector.broadcast %cst_228 : f32 to vector<2x108xf32>
    %892 = tpu.concatenate %890, %334, %355, %891 in 1 : vector<2x4xf32>, vector<2x8xf32>, vector<2x8xf32>, vector<2x108xf32> -> vector<2x128xf32>
    %c0_229 = arith.constant 0 : index
    %c0_230 = arith.constant 0 : index
    %893 = vector.load %arg22[%c0_229, %c0_230] : memref<2x128xf32, #tpu.memory_space<vmem>>, vector<2x128xf32>
    tpu.vector_store %arg22[%c0_229, %c0_230], %892 {strides = array<i32>} : memref<2x128xf32, #tpu.memory_space<vmem>>, vector<2x128xf32>,
    return
  }
}

</mosaic_0001>

<llo_original>
// kernel: tpu_custom_call.1
$region0: #{tpu_custom_call.1}
  #allocation0 [shape = 'u32[]', space=smem, size = 0x4, offset = 0x4, fixed_abs, tag = 'smem constant byte address 0x4 - core index']
  #allocation1 [shape = 'u32[144,128]{1,0:T(1,128)}', space=vmem, size = 0x12000, scoped, tag = 'internal scratch']
  #allocation2 [shape = 'f32[1,1]{1,0:T(1,128)S(1)}', space=vmem, size = 0x200, scoped, tag = 'scoped memory for tpu_custom_call.1']
  %s0 = inlined_call_operand.vmem [shape: f32[16,4], index: 0, kind: input, shape index: {}]
  %s1 = inlined_call_operand.vmem [shape: f32[2,8], index: 1, kind: input, shape index: {}]
  %s2 = inlined_call_operand.vmem [shape: f32[16,1], index: 2, kind: input, shape index: {}]
  %s3 = inlined_call_operand.vmem [shape: f32[16,1], index: 3, kind: input, shape index: {}]
  %s4 = inlined_call_operand.vmem [shape: f32[4,96], index: 4, kind: input, shape index: {}]
  %s5 = inlined_call_operand.vmem [shape: f32[32,96], index: 5, kind: input, shape index: {}]
  %s6 = inlined_call_operand.vmem [shape: f32[1,96], index: 6, kind: input, shape index: {}]
  %s7 = inlined_call_operand.vmem [shape: f32[1,96], index: 7, kind: input, shape index: {}]
  %s8 = inlined_call_operand.hbm [shape: f32[256,256], index: 8, kind: input, shape index: {}]
  %s9 = inlined_call_operand.vmem [shape: f32[256,8], index: 9, kind: input, shape index: {}]
  %s10 = inlined_call_operand.vmem [shape: f32[1,96], index: 10, kind: input, shape index: {}]
  %s11 = inlined_call_operand.vmem [shape: f32[32,96], index: 11, kind: input, shape index: {}]
  %s12 = inlined_call_operand.vmem [shape: f32[1,96], index: 12, kind: input, shape index: {}]
  %s13 = inlined_call_operand.vmem [shape: f32[1,96], index: 13, kind: input, shape index: {}]
  %s14 = inlined_call_operand.vmem [shape: f32[1,32], index: 14, kind: input, shape index: {}]
  %s15 = inlined_call_operand.vmem [shape: f32[1,32], index: 15, kind: input, shape index: {}]
  %s16 = inlined_call_operand.vmem [shape: f32[32,224], index: 16, kind: input, shape index: {}]
  %s17 = inlined_call_operand.vmem [shape: f32[1,96], index: 17, kind: input, shape index: {}]
  %s18 = inlined_call_operand.vmem [shape: f32[1,96], index: 18, kind: input, shape index: {}]
  %s19 = inlined_call_operand.vmem [shape: f32[1,96], index: 19, kind: input, shape index: {}]
  %s20 = inlined_call_operand.vmem [shape: f32[128,4], index: 20, kind: input, shape index: {}]
  %s21 = inlined_call_operand.<no memory space> [shape: f32[1,1], index: 21, kind: input, shape index: {}]
  %s22 = inlined_call_operand.hbm [shape: f32[2,128], index: 22, kind: output, shape index: {}]
  %s23 = sld [smem:[#allocation0]]
  $region102: #{tpu_custom_call.1} parent=0
    _
  %s25 = ssub.s32 1, %s23
  %s26 = scalar_select 0, %s25, %s23
  %v27 = vstv %s21
  %28 = vst [vmem:[#allocation2] sm:$0x1] %v27
  $region1: #{tpu_custom_call.1} parent=0
    #allocation3 [shape = 'u8[262144]{0}', space=vmem, size = 0x40000, scoped, tag = 'input window, operand 8, single buffered']
    #allocation4 [shape = 's32[1]{0}', space=sflag, size = 0x4, scoped, tag = 'scoped memory for tpu_custom_call.1']
    #allocation5 [shape = 's32[1]{0}', space=sflag, size = 0x4, scoped, tag = 'scoped memory for tpu_custom_call.1']
    #allocation6 [shape = 'u8[1024]{0}', space=vmem, size = 0x400, scoped, tag = 'output window, operand 0, single buffered']
    %29 = vsyncpa [#allocation4], 0
    %30 = vsyncpa [#allocation5], 0
    // Predicated region
    $region2: #{tpu_custom_call.1} parent=1 // pred_check
      _
    $region3: #{tpu_custom_call.1} parent=1 // pred_check_branch
      %32 = sbr.rel (0) target = $region5
    $region4: #{tpu_custom_call.1} parent=1 // pred_region
      _
    $region5: #{tpu_custom_call.1} parent=1 // pred_fallthru
      _
    // Predicated region
    $region6: #{tpu_custom_call.1} parent=1 // pred_check
      _
    $region7: #{tpu_custom_call.1} parent=1 // pred_check_branch
      %34 = sbr.rel (0) target = $region9
    $region8: #{tpu_custom_call.1} parent=1 // pred_region
      _
    $region9: #{tpu_custom_call.1} parent=1 // pred_fallthru
      _
    // Predicated region
    $region10: #{tpu_custom_call.1} parent=1 // pred_check
      _
    $region11: #{tpu_custom_call.1} parent=1 // pred_check_branch
      %36 = sbr.rel (0) target = $region13
    $region12: #{tpu_custom_call.1} parent=1 // pred_region
      _
    $region13: #{tpu_custom_call.1} parent=1 // pred_fallthru
      _
    // Predicated region
    $region14: #{tpu_custom_call.1} parent=1 // pred_check
      _
    $region15: #{tpu_custom_call.1} parent=1 // pred_check_branch
      %38 = sbr.rel (0) target = $region17
    $region16: #{tpu_custom_call.1} parent=1 // pred_region
      _
    $region17: #{tpu_custom_call.1} parent=1 // pred_fallthru
      _
    // Predicated region
    $region18: #{tpu_custom_call.1} parent=1 // pred_check
      _
    $region19: #{tpu_custom_call.1} parent=1 // pred_check_branch
      %40 = sbr.rel (0) target = $region21
    $region20: #{tpu_custom_call.1} parent=1 // pred_region
      _
    $region21: #{tpu_custom_call.1} parent=1 // pred_fallthru
      _
    // Predicated region
    $region22: #{tpu_custom_call.1} parent=1 // pred_check
      _
    $region23: #{tpu_custom_call.1} parent=1 // pred_check_branch
      %42 = sbr.rel (0) target = $region25
    $region24: #{tpu_custom_call.1} parent=1 // pred_region
      _
    $region25: #{tpu_custom_call.1} parent=1 // pred_fallthru
      _
    // Predicated region
    $region26: #{tpu_custom_call.1} parent=1 // pred_check
      _
    $region27: #{tpu_custom_call.1} parent=1 // pred_check_branch
      %44 = sbr.rel (0) target = $region29
    $region28: #{tpu_custom_call.1} parent=1 // pred_region
      _
    $region29: #{tpu_custom_call.1} parent=1 // pred_fallthru
      _
    // Predicated region
    $region30: #{tpu_custom_call.1} parent=1 // pred_check
      _
    $region31: #{tpu_custom_call.1} parent=1 // pred_check_branch
      %46 = sbr.rel (0) target = $region33
    $region32: #{tpu_custom_call.1} parent=1 // pred_region
      _
    $region33: #{tpu_custom_call.1} parent=1 // pred_fallthru
      _
    // Predicated region
    $region34: #{tpu_custom_call.1} parent=1 // pred_check
      _
    $region35: #{tpu_custom_call.1} parent=1 // pred_check_branch
      %48 = sbr.rel (0) target = $region37
    $region36: #{tpu_custom_call.1} parent=1 // pred_region
      %s50 = ssub.s32 8192, 8192
      %51 = vsyncadd [#allocation4], %s50
      %s52 = sshll.u32 [#allocation3], 4
      %s53 = int_to_ptr.vmem [resolvable:$true] %s52
      %58 = dma.hbm_to_vmem [thread:$0]  %s8, 8192, %s53, [#allocation4], 256, 256, 16
    $region37: #{tpu_custom_call.1} parent=1 // pred_fallthru
      _
    // Predicated region
    $region38: #{tpu_custom_call.1} parent=1 // pred_check
      _
    $region39: #{tpu_custom_call.1} parent=1 // pred_check_branch
      %60 = sbr.rel (0) target = $region41
    $region40: #{tpu_custom_call.1} parent=1 // pred_region
      _
    $region41: #{tpu_custom_call.1} parent=1 // pred_fallthru
      _
    // Predicated region
    $region42: #{tpu_custom_call.1} parent=1 // pred_check
      _
    $region43: #{tpu_custom_call.1} parent=1 // pred_check_branch
      %62 = sbr.rel (0) target = $region45
    $region44: #{tpu_custom_call.1} parent=1 // pred_region
      _
    $region45: #{tpu_custom_call.1} parent=1 // pred_fallthru
      _
    // Predicated region
    $region46: #{tpu_custom_call.1} parent=1 // pred_check
      _
    $region47: #{tpu_custom_call.1} parent=1 // pred_check_branch
      %64 = sbr.rel (0) target = $region49
    $region48: #{tpu_custom_call.1} parent=1 // pred_region
      _
    $region49: #{tpu_custom_call.1} parent=1 // pred_fallthru
      _
    // Predicated region
    $region50: #{tpu_custom_call.1} parent=1 // pred_check
      _
    $region51: #{tpu_custom_call.1} parent=1 // pred_check_branch
      %66 = sbr.rel (0) target = $region53
    $region52: #{tpu_custom_call.1} parent=1 // pred_region
      _
    $region53: #{tpu_custom_call.1} parent=1 // pred_fallthru
      _
    // Predicated region
    $region54: #{tpu_custom_call.1} parent=1 // pred_check
      _
    $region55: #{tpu_custom_call.1} parent=1 // pred_check_branch
      %68 = sbr.rel (0) target = $region57
    $region56: #{tpu_custom_call.1} parent=1 // pred_region
      _
    $region57: #{tpu_custom_call.1} parent=1 // pred_fallthru
      _
    // Predicated region
    $region58: #{tpu_custom_call.1} parent=1 // pred_check
      _
    $region59: #{tpu_custom_call.1} parent=1 // pred_check_branch
      %70 = sbr.rel (0) target = $region61
    $region60: #{tpu_custom_call.1} parent=1 // pred_region
      _
    $region61: #{tpu_custom_call.1} parent=1 // pred_fallthru
      _
    // Predicated region
    $region62: #{tpu_custom_call.1} parent=1 // pred_check
      _
    $region63: #{tpu_custom_call.1} parent=1 // pred_check_branch
      %72 = sbr.rel (0) target = $region65
    $region64: #{tpu_custom_call.1} parent=1 // pred_region
      _
    $region65: #{tpu_custom_call.1} parent=1 // pred_fallthru
      _
    // Predicated region
    $region66: #{tpu_custom_call.1} parent=1 // pred_check
      _
    $region67: #{tpu_custom_call.1} parent=1 // pred_check_branch
      %74 = sbr.rel (0) target = $region69
    $region68: #{tpu_custom_call.1} parent=1 // pred_region
      _
    $region69: #{tpu_custom_call.1} parent=1 // pred_fallthru
      _
    // Predicated region
    $region70: #{tpu_custom_call.1} parent=1 // pred_check
      _
    $region71: #{tpu_custom_call.1} parent=1 // pred_check_branch
      %76 = sbr.rel (0) target = $region73
    $region72: #{tpu_custom_call.1} parent=1 // pred_region
      _
    $region73: #{tpu_custom_call.1} parent=1 // pred_fallthru
      _
    // Predicated region
    $region74: #{tpu_custom_call.1} parent=1 // pred_check
      _
    $region75: #{tpu_custom_call.1} parent=1 // pred_check_branch
      %78 = sbr.rel (0) target = $region77
    $region76: #{tpu_custom_call.1} parent=1 // pred_region
      _
    $region77: #{tpu_custom_call.1} parent=1 // pred_fallthru
      _
    // Predicated region
    $region78: #{tpu_custom_call.1} parent=1 // pred_check
      _
    $region79: #{tpu_custom_call.1} parent=1 // pred_check_branch
      %80 = sbr.rel (0) target = $region81
    $region80: #{tpu_custom_call.1} parent=1 // pred_region
      _
    $region81: #{tpu_custom_call.1} parent=1 // pred_fallthru
      _
    // Predicated region
    $region82: #{tpu_custom_call.1} parent=1 // pred_check
      _
    $region83: #{tpu_custom_call.1} parent=1 // pred_check_branch
      %82 = sbr.rel (0) target = $region85
    $region84: #{tpu_custom_call.1} parent=1 // pred_region
      _
    $region85: #{tpu_custom_call.1} parent=1 // pred_fallthru
      _
    // Predicated region
    $region86: #{tpu_custom_call.1} parent=1 // pred_check
      _
    $region87: #{tpu_custom_call.1} parent=1 // pred_check_branch
      %84 = sbr.rel (0) target = $region89
    $region88: #{tpu_custom_call.1} parent=1 // pred_region
      _
    $region89: #{tpu_custom_call.1} parent=1 // pred_fallthru
      _
    // Predicated region
    $region90: #{tpu_custom_call.1} parent=1 // pred_check
      _
    $region91: #{tpu_custom_call.1} parent=1 // pred_check_branch
      %86 = sbr.rel (0) target = $region93
    $region92: #{tpu_custom_call.1} parent=1 // pred_region
      %87 = dma.done [#allocation4], 8192
    $region93: #{tpu_custom_call.1} parent=1 // pred_fallthru
      _
    %v88 = vld [vmem:[%s1] sm:$0x3]
    %v89 = vld [vmem:[%s2] sm:$0xff]
    %v90 = vld [vmem:[%s2 + $0x8] sm:$0xff]
    %v91 = vld [vmem:[%s0] sm:$0xff]
    %v92 = vld [vmem:[%s0 + $0x8] sm:$0xff]
    %v93 = vld [vmem:[%s4] sm:$0xf]
    %v94 = vld [vmem:[%s6] sm:$0x1]
    %v96 = vlaneseq
    %v97 = vshrl.u32 %v96, 7
    %v98 = vsub.s32 0, %v97
    %v99 = vrot.slane %v94, %v98
    %vm101 = vcmask 31744
    %v103 = vsel %vm101, %v91, 0
    %v106 = vsel %vm101, %v92, 0
    %vm108 = vcmask 1043456
    %v110 = vsel %vm108, %v93, 0
    %112 = vmatprep.subr.mxu0 0.0
    %113 = vmatpush1.msra.mxu0 %v110
    %114 = vmatprep.subr.mxu0 0.0
    %115 = vmatpush1.msra.mxu0 0.0
    %116 = vmatprep.subr.mxu0 0.0
    %117 = vmatpush1.msra.mxu0 0.0
    %118 = vmatprep.subr.mxu0 0.0
    %119 = vmatpush1.msra.mxu0 0.0
    %120 = vmatprep.subr.mxu0 0.0
    %121 = vmatpush1.msra.mxu0 0.0
    %122 = vmatprep.subr.mxu0 0.0
    %123 = vmatpush1.msra.mxu0 0.0
    %124 = vmatprep.subr.mxu0 0.0
    %125 = vmatpush1.msra.mxu0 0.0
    %126 = vmatprep.subr.mxu0 0.0
    %127 = vmatpush1.msra.mxu0 0.0
    %128 = vmatprep.subr.mxu0 0.0
    %129 = vmatpush1.msra.mxu0 0.0
    %130 = vmatprep.subr.mxu0 0.0
    %131 = vmatpush1.msra.mxu0 0.0
    %132 = vmatprep.subr.mxu0 0.0
    %133 = vmatpush1.msra.mxu0 0.0
    %134 = vmatprep.subr.mxu0 0.0
    %135 = vmatpush1.msra.mxu0 0.0
    %136 = vmatprep.subr.mxu0 0.0
    %137 = vmatpush1.msra.mxu0 0.0
    %138 = vmatprep.subr.mxu0 0.0
    %139 = vmatpush1.msra.mxu0 0.0
    %140 = vmatprep.subr.mxu0 0.0
    %141 = vmatpush1.msra.mxu0 0.0
    %142 = vmatprep.subr.mxu0 0.0
    %143 = vmatpush1.msra.mxu0 0.0
    %144 = vmatprep.subr.mxu0 0.0
    %145 = vmatpush1.msra.mxu0 0.0
    %146 = vmatprep.subr.mxu0 0.0
    %147 = vmatpush1.msra.mxu0 0.0
    %148 = vmatprep.subr.mxu0 0.0
    %149 = vmatpush1.msra.mxu0 0.0
    %150 = vmatprep.subr.mxu0 0.0
    %151 = vmatpush1.msra.mxu0 0.0
    %152 = vmatprep.subr.mxu0 0.0
    %153 = vmatpush1.msra.mxu0 0.0
    %154 = vmatprep.subr.mxu0 0.0
    %155 = vmatpush1.msra.mxu0 0.0
    %156 = vmatprep.subr.mxu0 0.0
    %157 = vmatpush1.msra.mxu0 0.0
    %158 = vmatprep.subr.mxu0 0.0
    %159 = vmatpush1.msra.mxu0 0.0
    %160 = vmatprep.subr.mxu0 0.0
    %161 = vmatpush1.msra.mxu0 0.0
    %162 = vmatprep.subr.mxu0 0.0
    %163 = vmatpush1.msra.mxu0 0.0
    %164 = vmatprep.subr.mxu0 0.0
    %165 = vmatpush1.msra.mxu0 0.0
    %166 = vmatprep.subr.mxu0 0.0
    %167 = vmatpush1.msra.mxu0 0.0
    %168 = vmatprep.subr.mxu0 0.0
    %169 = vmatpush1.msra.mxu0 0.0
    %170 = vmatprep.subr.mxu0 0.0
    %171 = vmatpush1.msra.mxu0 0.0
    %172 = vmatprep.subr.mxu0 0.0
    %173 = vmatpush1.msra.mxu0 0.0
    %174 = vmatprep.subr.mxu0 0.0
    %175 = vmatpush1.msra.mxu0 0.0
    %176 = vmatprep.mubr.f32.mxu0 0.0
    %177 = vmatmul.mubr.f32.gmra.mrb[0].mxu0 %v103
    %v178 = vpop.f32.mrb[0].mxu0
    %v179 = vadd.f32 %v99, %v178
    %v180 = vpop.f32.mrb[0].mxu0
    %181 = vmatprep.mubr.f32.mxu0 0.0
    %182 = vmatmul.mubr.f32.gmra.mrb[0].mxu0 %v106
    %v183 = vpop.f32.mrb[0].mxu0
    %v184 = vadd.f32 %v99, %v183
    %v185 = vpop.f32.mrb[0].mxu0
    %186 = vdwg.mxu0
    %v187 = vld [vmem:[%s5] sm:$0xff]
    %v188 = vld [vmem:[%s5 + $0x8] sm:$0xff]
    %v189 = vld [vmem:[%s5 + $0x10] sm:$0xff]
    %v190 = vld [vmem:[%s5 + $0x18] sm:$0xff]
    %v191 = vld [vmem:[%s7] sm:$0x1]
    %v193 = vlaneseq
    %v194 = vshrl.u32 %v193, 7
    %v195 = vsub.s32 0, %v194
    %v196 = vrot.slane %v191, %v195
    %vm198 = vcmask 261120
    %v200 = vsel %vm198, 0.0, 0
    %202 = vmatprep.subr.mxu0 0.0
    %203 = vmatpush1.msra.mxu0 %v187
    %204 = vmatprep.subr.mxu0 0.0
    %205 = vmatpush1.msra.mxu0 %v188
    %206 = vmatprep.subr.mxu0 0.0
    %207 = vmatpush1.msra.mxu0 %v189
    %208 = vmatprep.subr.mxu0 0.0
    %209 = vmatpush1.msra.mxu0 %v190
    %210 = vmatprep.subr.mxu0 0.0
    %211 = vmatpush1.msra.mxu0 0.0
    %212 = vmatprep.subr.mxu0 0.0
    %213 = vmatpush1.msra.mxu0 0.0
    %214 = vmatprep.subr.mxu0 0.0
    %215 = vmatpush1.msra.mxu0 0.0
    %216 = vmatprep.subr.mxu0 0.0
    %217 = vmatpush1.msra.mxu0 0.0
    %218 = vmatprep.subr.mxu0 0.0
    %219 = vmatpush1.msra.mxu0 0.0
    %220 = vmatprep.subr.mxu0 0.0
    %221 = vmatpush1.msra.mxu0 0.0
    %222 = vmatprep.subr.mxu0 0.0
    %223 = vmatpush1.msra.mxu0 0.0
    %224 = vmatprep.subr.mxu0 0.0
    %225 = vmatpush1.msra.mxu0 0.0
    %226 = vmatprep.subr.mxu0 0.0
    %227 = vmatpush1.msra.mxu0 0.0
    %228 = vmatprep.subr.mxu0 0.0
    %229 = vmatpush1.msra.mxu0 0.0
    %230 = vmatprep.subr.mxu0 0.0
    %231 = vmatpush1.msra.mxu0 0.0
    %232 = vmatprep.subr.mxu0 0.0
    %233 = vmatpush1.msra.mxu0 0.0
    %234 = vmatprep.subr.mxu0 0.0
    %235 = vmatpush1.msra.mxu0 0.0
    %236 = vmatprep.subr.mxu0 0.0
    %237 = vmatpush1.msra.mxu0 0.0
    %238 = vmatprep.subr.mxu0 0.0
    %239 = vmatpush1.msra.mxu0 0.0
    %240 = vmatprep.subr.mxu0 0.0
    %241 = vmatpush1.msra.mxu0 0.0
    %242 = vmatprep.subr.mxu0 0.0
    %243 = vmatpush1.msra.mxu0 0.0
    %244 = vmatprep.subr.mxu0 0.0
    %245 = vmatpush1.msra.mxu0 0.0
    %246 = vmatprep.subr.mxu0 0.0
    %247 = vmatpush1.msra.mxu0 0.0
    %248 = vmatprep.subr.mxu0 0.0
    %249 = vmatpush1.msra.mxu0 0.0
    %250 = vmatprep.subr.mxu0 0.0
    %251 = vmatpush1.msra.mxu0 0.0
    %252 = vmatprep.subr.mxu0 0.0
    %253 = vmatpush1.msra.mxu0 0.0
    %254 = vmatprep.subr.mxu0 0.0
    %255 = vmatpush1.msra.mxu0 0.0
    %256 = vmatprep.subr.mxu0 0.0
    %257 = vmatpush1.msra.mxu0 0.0
    %258 = vmatprep.subr.mxu0 0.0
    %259 = vmatpush1.msra.mxu0 0.0
    %260 = vmatprep.subr.mxu0 0.0
    %261 = vmatpush1.msra.mxu0 0.0
    %262 = vmatprep.subr.mxu0 0.0
    %263 = vmatpush1.msra.mxu0 0.0
    %264 = vmatprep.subr.mxu0 0.0
    %265 = vmatpush1.msra.mxu0 0.0
    %266 = vmatprep.mubr.f32.mxu0 0.0
    %267 = vmatmul.mubr.f32.gmra.mrb[0].mxu0 %v200
    %v268 = vpop.f32.mrb[0].mxu0
    %v269 = vadd.f32 %v196, %v268
    %v270 = vpop.f32.mrb[0].mxu0
    %271 = vdwg.mxu0
    %v272 = vadd.f32 %v179, %v269
    %v273 = vxor.u32 %v272, 2147483648
    %v274 = vmul.f32 %v273, 1.442695
    %v275 = vpow.pop %v274
    %v276 = vadd.f32 %v275, 1.0
    %v277 = vrcp.pop %v276
    %v278 = vmul.f32 1.0, %v277
    %280 = vrot.lane.b32.xlu0 %v269, 64
    %v281 = vpop.permute.xlu0 %280
    %v283 = vmul.f32 %v278, %v281
    %285 = vrot.lane.b32.xlu0 %v283, 64
    %v286 = vpop.permute.xlu0 %285
    %v288 = vadd.f32 %v179, %v286
    %v289 = vtanh.pop %v288
    %v290 = vsub.f32 1.0, %v278
    %292 = vrot.lane.b32.xlu0 %v289, 96
    %v293 = vpop.permute.xlu0 %292
    %v295 = vmul.f32 %v290, %v293
    %v296 = vmul.f32 %v278, 0.0
    %v297 = vadd.f32 %v295, %v296
    %299 = vset.pattern.permute.xlu0 0
    %300 = vperm.xlu0 %299, %v89
    %v301 = vpop.permute.xlu0 %300
    %v303 = vmul.f32 %v301, %v297
    %v304 = vsub.f32 1.0, %v89
    %306 = vset.pattern.permute.xlu0 0
    %307 = vperm.xlu0 %306, %v304
    %v308 = vpop.permute.xlu0 %307
    %v310 = vmul.f32 %v308, 0.0
    %v311 = vadd.f32 %v303, %v310
    %313 = vrot.lane.b32.xlu0 %v311, 96
    %v314 = vpop.permute.xlu0 %313
    %v315 = vsel %vm198, %v314, 0
    %317 = vmatprep.subr.mxu0 0.0
    %318 = vmatpush1.msra.mxu0 %v187
    %319 = vmatprep.subr.mxu0 0.0
    %320 = vmatpush1.msra.mxu0 %v188
    %321 = vmatprep.subr.mxu0 0.0
    %322 = vmatpush1.msra.mxu0 %v189
    %323 = vmatprep.subr.mxu0 0.0
    %324 = vmatpush1.msra.mxu0 %v190
    %325 = vmatprep.subr.mxu0 0.0
    %326 = vmatpush1.msra.mxu0 0.0
    %327 = vmatprep.subr.mxu0 0.0
    %328 = vmatpush1.msra.mxu0 0.0
    %329 = vmatprep.subr.mxu0 0.0
    %330 = vmatpush1.msra.mxu0 0.0
    %331 = vmatprep.subr.mxu0 0.0
    %332 = vmatpush1.msra.mxu0 0.0
    %333 = vmatprep.subr.mxu0 0.0
    %334 = vmatpush1.msra.mxu0 0.0
    %335 = vmatprep.subr.mxu0 0.0
    %336 = vmatpush1.msra.mxu0 0.0
    %337 = vmatprep.subr.mxu0 0.0
    %338 = vmatpush1.msra.mxu0 0.0
    %339 = vmatprep.subr.mxu0 0.0
    %340 = vmatpush1.msra.mxu0 0.0
    %341 = vmatprep.subr.mxu0 0.0
    %342 = vmatpush1.msra.mxu0 0.0
    %343 = vmatprep.subr.mxu0 0.0
    %344 = vmatpush1.msra.mxu0 0.0
    %345 = vmatprep.subr.mxu0 0.0
    %346 = vmatpush1.msra.mxu0 0.0
    %347 = vmatprep.subr.mxu0 0.0
    %348 = vmatpush1.msra.mxu0 0.0
    %349 = vmatprep.subr.mxu0 0.0
    %350 = vmatpush1.msra.mxu0 0.0
    %351 = vmatprep.subr.mxu0 0.0
    %352 = vmatpush1.msra.mxu0 0.0
    %353 = vmatprep.subr.mxu0 0.0
    %354 = vmatpush1.msra.mxu0 0.0
    %355 = vmatprep.subr.mxu0 0.0
    %356 = vmatpush1.msra.mxu0 0.0
    %357 = vmatprep.subr.mxu0 0.0
    %358 = vmatpush1.msra.mxu0 0.0
    %359 = vmatprep.subr.mxu0 0.0
    %360 = vmatpush1.msra.mxu0 0.0
    %361 = vmatprep.subr.mxu0 0.0
    %362 = vmatpush1.msra.mxu0 0.0
    %363 = vmatprep.subr.mxu0 0.0
    %364 = vmatpush1.msra.mxu0 0.0
    %365 = vmatprep.subr.mxu0 0.0
    %366 = vmatpush1.msra.mxu0 0.0
    %367 = vmatprep.subr.mxu0 0.0
    %368 = vmatpush1.msra.mxu0 0.0
    %369 = vmatprep.subr.mxu0 0.0
    %370 = vmatpush1.msra.mxu0 0.0
    %371 = vmatprep.subr.mxu0 0.0
    %372 = vmatpush1.msra.mxu0 0.0
    %373 = vmatprep.subr.mxu0 0.0
    %374 = vmatpush1.msra.mxu0 0.0
    %375 = vmatprep.subr.mxu0 0.0
    %376 = vmatpush1.msra.mxu0 0.0
    %377 = vmatprep.subr.mxu0 0.0
    %378 = vmatpush1.msra.mxu0 0.0
    %379 = vmatprep.subr.mxu0 0.0
    %380 = vmatpush1.msra.mxu0 0.0
    %381 = vmatprep.mubr.f32.mxu0 0.0
    %382 = vmatmul.mubr.f32.gmra.mrb[0].mxu0 %v315
    %v383 = vpop.f32.mrb[0].mxu0
    %v384 = vadd.f32 %v196, %v383
    %v385 = vpop.f32.mrb[0].mxu0
    %386 = vdwg.mxu0
    %v388 = vrot.slane %v384, 6
    %v390 = vadd.f32 %v179, %v388
    %v391 = vxor.u32 %v390, 2147483648
    %v392 = vmul.f32 %v391, 1.442695
    %v393 = vpow.pop %v392
    %v394 = vadd.f32 %v393, 1.0
    %v395 = vrcp.pop %v394
    %v396 = vmul.f32 1.0, %v395
    %397 = vrot.lane.b32.xlu0 %v388, 64
    %v398 = vpop.permute.xlu0 %397
    %v400 = vmul.f32 %v396, %v398
    %402 = vrot.lane.b32.xlu0 %v400, 64
    %v403 = vpop.permute.xlu0 %402
    %v405 = vadd.f32 %v179, %v403
    %v406 = vtanh.pop %v405
    %v407 = vsub.f32 1.0, %v396
    %409 = vrot.lane.b32.xlu0 %v406, 96
    %v410 = vpop.permute.xlu0 %409
    %v412 = vmul.f32 %v407, %v410
    %v413 = vrot.slane %v311, 6
    %v415 = vmul.f32 %v396, %v413
    %v416 = vadd.f32 %v412, %v415
    %v417 = vmul.f32 %v301, %v416
    %418 = vrot.lane.b32.xlu0 %v413, 96
    %v419 = vpop.permute.xlu0 %418
    %v421 = vmul.f32 %v308, %v419
    %423 = vrot.lane.b32.xlu0 %v421, 32
    %v424 = vpop.permute.xlu0 %423
    %v426 = vadd.f32 %v417, %v424
    %v428 = vrot.slane %v426, 2
    %429 = vrot.lane.b32.xlu0 %v428, 96
    %v430 = vpop.permute.xlu0 %429
    %v431 = vsel %vm198, %v430, 0
    %433 = vmatprep.subr.mxu0 0.0
    %434 = vmatpush1.msra.mxu0 %v187
    %435 = vmatprep.subr.mxu0 0.0
    %436 = vmatpush1.msra.mxu0 %v188
    %437 = vmatprep.subr.mxu0 0.0
    %438 = vmatpush1.msra.mxu0 %v189
    %439 = vmatprep.subr.mxu0 0.0
    %440 = vmatpush1.msra.mxu0 %v190
    %441 = vmatprep.subr.mxu0 0.0
    %442 = vmatpush1.msra.mxu0 0.0
    %443 = vmatprep.subr.mxu0 0.0
    %444 = vmatpush1.msra.mxu0 0.0
    %445 = vmatprep.subr.mxu0 0.0
    %446 = vmatpush1.msra.mxu0 0.0
    %447 = vmatprep.subr.mxu0 0.0
    %448 = vmatpush1.msra.mxu0 0.0
    %449 = vmatprep.subr.mxu0 0.0
    %450 = vmatpush1.msra.mxu0 0.0
    %451 = vmatprep.subr.mxu0 0.0
    %452 = vmatpush1.msra.mxu0 0.0
    %453 = vmatprep.subr.mxu0 0.0
    %454 = vmatpush1.msra.mxu0 0.0
    %455 = vmatprep.subr.mxu0 0.0
    %456 = vmatpush1.msra.mxu0 0.0
    %457 = vmatprep.subr.mxu0 0.0
    %458 = vmatpush1.msra.mxu0 0.0
    %459 = vmatprep.subr.mxu0 0.0
    %460 = vmatpush1.msra.mxu0 0.0
    %461 = vmatprep.subr.mxu0 0.0
    %462 = vmatpush1.msra.mxu0 0.0
    %463 = vmatprep.subr.mxu0 0.0
    %464 = vmatpush1.msra.mxu0 0.0
    %465 = vmatprep.subr.mxu0 0.0
    %466 = vmatpush1.msra.mxu0 0.0
    %467 = vmatprep.subr.mxu0 0.0
    %468 = vmatpush1.msra.mxu0 0.0
    %469 = vmatprep.subr.mxu0 0.0
    %470 = vmatpush1.msra.mxu0 0.0
    %471 = vmatprep.subr.mxu0 0.0
    %472 = vmatpush1.msra.mxu0 0.0
    %473 = vmatprep.subr.mxu0 0.0
    %474 = vmatpush1.msra.mxu0 0.0
    %475 = vmatprep.subr.mxu0 0.0
    %476 = vmatpush1.msra.mxu0 0.0
    %477 = vmatprep.subr.mxu0 0.0
    %478 = vmatpush1.msra.mxu0 0.0
    %479 = vmatprep.subr.mxu0 0.0
    %480 = vmatpush1.msra.mxu0 0.0
    %481 = vmatprep.subr.mxu0 0.0
    %482 = vmatpush1.msra.mxu0 0.0
    %483 = vmatprep.subr.mxu0 0.0
    %484 = vmatpush1.msra.mxu0 0.0
    %485 = vmatprep.subr.mxu0 0.0
    %486 = vmatpush1.msra.mxu0 0.0
    %487 = vmatprep.subr.mxu0 0.0
    %488 = vmatpush1.msra.mxu0 0.0
    %489 = vmatprep.subr.mxu0 0.0
    %490 = vmatpush1.msra.mxu0 0.0
    %491 = vmatprep.subr.mxu0 0.0
    %492 = vmatpush1.msra.mxu0 0.0
    %493 = vmatprep.subr.mxu0 0.0
    %494 = vmatpush1.msra.mxu0 0.0
    %495 = vmatprep.subr.mxu0 0.0
    %496 = vmatpush1.msra.mxu0 0.0
    %497 = vmatprep.mubr.f32.mxu0 0.0
    %498 = vmatmul.mubr.f32.gmra.mrb[0].mxu0 %v431
    %v499 = vpop.f32.mrb[0].mxu0
    %v500 = vadd.f32 %v196, %v499
    %v501 = vpop.f32.mrb[0].mxu0
    %502 = vdwg.mxu0
    %v504 = vrot.slane %v500, 4
    %v506 = vadd.f32 %v179, %v504
    %v507 = vxor.u32 %v506, 2147483648
    %v508 = vmul.f32 %v507, 1.442695
    %v509 = vpow.pop %v508
    %v510 = vadd.f32 %v509, 1.0
    %v511 = vrcp.pop %v510
    %v512 = vmul.f32 1.0, %v511
    %513 = vrot.lane.b32.xlu0 %v504, 64
    %v514 = vpop.permute.xlu0 %513
    %v516 = vmul.f32 %v512, %v514
    %518 = vrot.lane.b32.xlu0 %v516, 64
    %v519 = vpop.permute.xlu0 %518
    %v521 = vadd.f32 %v179, %v519
    %v522 = vtanh.pop %v521
    %v523 = vsub.f32 1.0, %v512
    %525 = vrot.lane.b32.xlu0 %v522, 96
    %v526 = vpop.permute.xlu0 %525
    %v528 = vmul.f32 %v523, %v526
    %v529 = vrot.slane %v426, 6
    %v531 = vmul.f32 %v512, %v529
    %v532 = vadd.f32 %v528, %v531
    %v533 = vmul.f32 %v301, %v532
    %534 = vrot.lane.b32.xlu0 %v529, 96
    %v535 = vpop.permute.xlu0 %534
    %v537 = vmul.f32 %v308, %v535
    %539 = vrot.lane.b32.xlu0 %v537, 32
    %v540 = vpop.permute.xlu0 %539
    %v542 = vadd.f32 %v533, %v540
    %v544 = vrot.slane %v542, 4
    %545 = vrot.lane.b32.xlu0 %v544, 96
    %v546 = vpop.permute.xlu0 %545
    %v547 = vsel %vm198, %v546, 0
    %549 = vmatprep.subr.mxu0 0.0
    %550 = vmatpush1.msra.mxu0 %v187
    %551 = vmatprep.subr.mxu0 0.0
    %552 = vmatpush1.msra.mxu0 %v188
    %553 = vmatprep.subr.mxu0 0.0
    %554 = vmatpush1.msra.mxu0 %v189
    %555 = vmatprep.subr.mxu0 0.0
    %556 = vmatpush1.msra.mxu0 %v190
    %557 = vmatprep.subr.mxu0 0.0
    %558 = vmatpush1.msra.mxu0 0.0
    %559 = vmatprep.subr.mxu0 0.0
    %560 = vmatpush1.msra.mxu0 0.0
    %561 = vmatprep.subr.mxu0 0.0
    %562 = vmatpush1.msra.mxu0 0.0
    %563 = vmatprep.subr.mxu0 0.0
    %564 = vmatpush1.msra.mxu0 0.0
    %565 = vmatprep.subr.mxu0 0.0
    %566 = vmatpush1.msra.mxu0 0.0
    %567 = vmatprep.subr.mxu0 0.0
    %568 = vmatpush1.msra.mxu0 0.0
    %569 = vmatprep.subr.mxu0 0.0
    %570 = vmatpush1.msra.mxu0 0.0
    %571 = vmatprep.subr.mxu0 0.0
    %572 = vmatpush1.msra.mxu0 0.0
    %573 = vmatprep.subr.mxu0 0.0
    %574 = vmatpush1.msra.mxu0 0.0
    %575 = vmatprep.subr.mxu0 0.0
    %576 = vmatpush1.msra.mxu0 0.0
    %577 = vmatprep.subr.mxu0 0.0
    %578 = vmatpush1.msra.mxu0 0.0
    %579 = vmatprep.subr.mxu0 0.0
    %580 = vmatpush1.msra.mxu0 0.0
    %581 = vmatprep.subr.mxu0 0.0
    %582 = vmatpush1.msra.mxu0 0.0
    %583 = vmatprep.subr.mxu0 0.0
    %584 = vmatpush1.msra.mxu0 0.0
    %585 = vmatprep.subr.mxu0 0.0
    %586 = vmatpush1.msra.mxu0 0.0
    %587 = vmatprep.subr.mxu0 0.0
    %588 = vmatpush1.msra.mxu0 0.0
    %589 = vmatprep.subr.mxu0 0.0
    %590 = vmatpush1.msra.mxu0 0.0
    %591 = vmatprep.subr.mxu0 0.0
    %592 = vmatpush1.msra.mxu0 0.0
    %593 = vmatprep.subr.mxu0 0.0
    %594 = vmatpush1.msra.mxu0 0.0
    %595 = vmatprep.subr.mxu0 0.0
    %596 = vmatpush1.msra.mxu0 0.0
    %597 = vmatprep.subr.mxu0 0.0
    %598 = vmatpush1.msra.mxu0 0.0
    %599 = vmatprep.subr.mxu0 0.0
    %600 = vmatpush1.msra.mxu0 0.0
    %601 = vmatprep.subr.mxu0 0.0
    %602 = vmatpush1.msra.mxu0 0.0
    %603 = vmatprep.subr.mxu0 0.0
    %604 = vmatpush1.msra.mxu0 0.0
    %605 = vmatprep.subr.mxu0 0.0
    %606 = vmatpush1.msra.mxu0 0.0
    %607 = vmatprep.subr.mxu0 0.0
    %608 = vmatpush1.msra.mxu0 0.0
    %609 = vmatprep.subr.mxu0 0.0
    %610 = vmatpush1.msra.mxu0 0.0
    %611 = vmatprep.subr.mxu0 0.0
    %612 = vmatpush1.msra.mxu0 0.0
    %613 = vmatprep.mubr.f32.mxu0 0.0
    %614 = vmatmul.mubr.f32.gmra.mrb[0].mxu0 %v547
    %v615 = vpop.f32.mrb[0].mxu0
    %v616 = vadd.f32 %v196, %v615
    %v617 = vpop.f32.mrb[0].mxu0
    %618 = vdwg.mxu0
    %v620 = vrot.slane %v616, 2
    %v622 = vadd.f32 %v179, %v620
    %v623 = vxor.u32 %v622, 2147483648
    %v624 = vmul.f32 %v623, 1.442695
    %v625 = vpow.pop %v624
    %v626 = vadd.f32 %v625, 1.0
    %v627 = vrcp.pop %v626
    %v628 = vmul.f32 1.0, %v627
    %629 = vrot.lane.b32.xlu0 %v620, 64
    %v630 = vpop.permute.xlu0 %629
    %v632 = vmul.f32 %v628, %v630
    %634 = vrot.lane.b32.xlu0 %v632, 64
    %v635 = vpop.permute.xlu0 %634
    %v637 = vadd.f32 %v179, %v635
    %v638 = vtanh.pop %v637
    %v639 = vsub.f32 1.0, %v628
    %641 = vrot.lane.b32.xlu0 %v638, 96
    %v642 = vpop.permute.xlu0 %641
    %v644 = vmul.f32 %v639, %v642
    %v645 = vrot.slane %v542, 6
    %v647 = vmul.f32 %v628, %v645
    %v648 = vadd.f32 %v644, %v647
    %v649 = vmul.f32 %v301, %v648
    %650 = vrot.lane.b32.xlu0 %v645, 96
    %v651 = vpop.permute.xlu0 %650
    %v653 = vmul.f32 %v308, %v651
    %655 = vrot.lane.b32.xlu0 %v653, 32
    %v656 = vpop.permute.xlu0 %655
    %v658 = vadd.f32 %v649, %v656
    %v660 = vrot.slane %v658, 6
    %661 = vrot.lane.b32.xlu0 %v660, 96
    %v662 = vpop.permute.xlu0 %661
    %v663 = vsel %vm198, %v662, 0
    %665 = vmatprep.subr.mxu0 0.0
    %666 = vmatpush1.msra.mxu0 %v187
    %667 = vmatprep.subr.mxu0 0.0
    %668 = vmatpush1.msra.mxu0 %v188
    %669 = vmatprep.subr.mxu0 0.0
    %670 = vmatpush1.msra.mxu0 %v189
    %671 = vmatprep.subr.mxu0 0.0
    %672 = vmatpush1.msra.mxu0 %v190
    %673 = vmatprep.subr.mxu0 0.0
    %674 = vmatpush1.msra.mxu0 0.0
    %675 = vmatprep.subr.mxu0 0.0
    %676 = vmatpush1.msra.mxu0 0.0
    %677 = vmatprep.subr.mxu0 0.0
    %678 = vmatpush1.msra.mxu0 0.0
    %679 = vmatprep.subr.mxu0 0.0
    %680 = vmatpush1.msra.mxu0 0.0
    %681 = vmatprep.subr.mxu0 0.0
    %682 = vmatpush1.msra.mxu0 0.0
    %683 = vmatprep.subr.mxu0 0.0
    %684 = vmatpush1.msra.mxu0 0.0
    %685 = vmatprep.subr.mxu0 0.0
    %686 = vmatpush1.msra.mxu0 0.0
    %687 = vmatprep.subr.mxu0 0.0
    %688 = vmatpush1.msra.mxu0 0.0
    %689 = vmatprep.subr.mxu0 0.0
    %690 = vmatpush1.msra.mxu0 0.0
    %691 = vmatprep.subr.mxu0 0.0
    %692 = vmatpush1.msra.mxu0 0.0
    %693 = vmatprep.subr.mxu0 0.0
    %694 = vmatpush1.msra.mxu0 0.0
    %695 = vmatprep.subr.mxu0 0.0
    %696 = vmatpush1.msra.mxu0 0.0
    %697 = vmatprep.subr.mxu0 0.0
    %698 = vmatpush1.msra.mxu0 0.0
    %699 = vmatprep.subr.mxu0 0.0
    %700 = vmatpush1.msra.mxu0 0.0
    %701 = vmatprep.subr.mxu0 0.0
    %702 = vmatpush1.msra.mxu0 0.0
    %703 = vmatprep.subr.mxu0 0.0
    %704 = vmatpush1.msra.mxu0 0.0
    %705 = vmatprep.subr.mxu0 0.0
    %706 = vmatpush1.msra.mxu0 0.0
    %707 = vmatprep.subr.mxu0 0.0
    %708 = vmatpush1.msra.mxu0 0.0
    %709 = vmatprep.subr.mxu0 0.0
    %710 = vmatpush1.msra.mxu0 0.0
    %711 = vmatprep.subr.mxu0 0.0
    %712 = vmatpush1.msra.mxu0 0.0
    %713 = vmatprep.subr.mxu0 0.0
    %714 = vmatpush1.msra.mxu0 0.0
    %715 = vmatprep.subr.mxu0 0.0
    %716 = vmatpush1.msra.mxu0 0.0
    %717 = vmatprep.subr.mxu0 0.0
    %718 = vmatpush1.msra.mxu0 0.0
    %719 = vmatprep.subr.mxu0 0.0
    %720 = vmatpush1.msra.mxu0 0.0
    %721 = vmatprep.subr.mxu0 0.0
    %722 = vmatpush1.msra.mxu0 0.0
    %723 = vmatprep.subr.mxu0 0.0
    %724 = vmatpush1.msra.mxu0 0.0
    %725 = vmatprep.subr.mxu0 0.0
    %726 = vmatpush1.msra.mxu0 0.0
    %727 = vmatprep.subr.mxu0 0.0
    %728 = vmatpush1.msra.mxu0 0.0
    %729 = vmatprep.mubr.f32.mxu0 0.0
    %730 = vmatmul.mubr.f32.gmra.mrb[0].mxu0 %v663
    %v731 = vpop.f32.mrb[0].mxu0
    %v732 = vadd.f32 %v196, %v731
    %v733 = vpop.f32.mrb[0].mxu0
    %734 = vdwg.mxu0
    %v735 = vadd.f32 %v184, %v732
    %v736 = vxor.u32 %v735, 2147483648
    %v737 = vmul.f32 %v736, 1.442695
    %v738 = vpow.pop %v737
    %v739 = vadd.f32 %v738, 1.0
    %v740 = vrcp.pop %v739
    %v741 = vmul.f32 1.0, %v740
    %743 = vrot.lane.b32.xlu0 %v732, 64
    %v744 = vpop.permute.xlu0 %743
    %v746 = vmul.f32 %v741, %v744
    %748 = vrot.lane.b32.xlu0 %v746, 64
    %v749 = vpop.permute.xlu0 %748
    %v751 = vadd.f32 %v184, %v749
    %v752 = vtanh.pop %v751
    %v753 = vsub.f32 1.0, %v741
    %755 = vrot.lane.b32.xlu0 %v752, 96
    %v756 = vpop.permute.xlu0 %755
    %v758 = vmul.f32 %v753, %v756
    %v760 = vmul.f32 %v741, %v660
    %v761 = vadd.f32 %v758, %v760
    %763 = vset.pattern.permute.xlu0 0
    %764 = vperm.xlu0 %763, %v90
    %v765 = vpop.permute.xlu0 %764
    %v767 = vmul.f32 %v765, %v761
    %v768 = vsub.f32 1.0, %v90
    %770 = vset.pattern.permute.xlu0 0
    %771 = vperm.xlu0 %770, %v768
    %v772 = vpop.permute.xlu0 %771
    %v775 = vmul.f32 %v772, %v662
    %777 = vrot.lane.b32.xlu0 %v775, 32
    %v778 = vpop.permute.xlu0 %777
    %v780 = vadd.f32 %v767, %v778
    %782 = vrot.lane.b32.xlu0 %v780, 96
    %v783 = vpop.permute.xlu0 %782
    %v784 = vsel %vm198, %v783, 0
    %786 = vmatprep.subr.mxu0 0.0
    %787 = vmatpush1.msra.mxu0 %v187
    %788 = vmatprep.subr.mxu0 0.0
    %789 = vmatpush1.msra.mxu0 %v188
    %790 = vmatprep.subr.mxu0 0.0
    %791 = vmatpush1.msra.mxu0 %v189
    %792 = vmatprep.subr.mxu0 0.0
    %793 = vmatpush1.msra.mxu0 %v190
    %794 = vmatprep.subr.mxu0 0.0
    %795 = vmatpush1.msra.mxu0 0.0
    %796 = vmatprep.subr.mxu0 0.0
    %797 = vmatpush1.msra.mxu0 0.0
    %798 = vmatprep.subr.mxu0 0.0
    %799 = vmatpush1.msra.mxu0 0.0
    %800 = vmatprep.subr.mxu0 0.0
    %801 = vmatpush1.msra.mxu0 0.0
    %802 = vmatprep.subr.mxu0 0.0
    %803 = vmatpush1.msra.mxu0 0.0
    %804 = vmatprep.subr.mxu0 0.0
    %805 = vmatpush1.msra.mxu0 0.0
    %806 = vmatprep.subr.mxu0 0.0
    %807 = vmatpush1.msra.mxu0 0.0
    %808 = vmatprep.subr.mxu0 0.0
    %809 = vmatpush1.msra.mxu0 0.0
    %810 = vmatprep.subr.mxu0 0.0
    %811 = vmatpush1.msra.mxu0 0.0
    %812 = vmatprep.subr.mxu0 0.0
    %813 = vmatpush1.msra.mxu0 0.0
    %814 = vmatprep.subr.mxu0 0.0
    %815 = vmatpush1.msra.mxu0 0.0
    %816 = vmatprep.subr.mxu0 0.0
    %817 = vmatpush1.msra.mxu0 0.0
    %818 = vmatprep.subr.mxu0 0.0
    %819 = vmatpush1.msra.mxu0 0.0
    %820 = vmatprep.subr.mxu0 0.0
    %821 = vmatpush1.msra.mxu0 0.0
    %822 = vmatprep.subr.mxu0 0.0
    %823 = vmatpush1.msra.mxu0 0.0
    %824 = vmatprep.subr.mxu0 0.0
    %825 = vmatpush1.msra.mxu0 0.0
    %826 = vmatprep.subr.mxu0 0.0
    %827 = vmatpush1.msra.mxu0 0.0
    %828 = vmatprep.subr.mxu0 0.0
    %829 = vmatpush1.msra.mxu0 0.0
    %830 = vmatprep.subr.mxu0 0.0
    %831 = vmatpush1.msra.mxu0 0.0
    %832 = vmatprep.subr.mxu0 0.0
    %833 = vmatpush1.msra.mxu0 0.0
    %834 = vmatprep.subr.mxu0 0.0
    %835 = vmatpush1.msra.mxu0 0.0
    %836 = vmatprep.subr.mxu0 0.0
    %837 = vmatpush1.msra.mxu0 0.0
    %838 = vmatprep.subr.mxu0 0.0
    %839 = vmatpush1.msra.mxu0 0.0
    %840 = vmatprep.subr.mxu0 0.0
    %841 = vmatpush1.msra.mxu0 0.0
    %842 = vmatprep.subr.mxu0 0.0
    %843 = vmatpush1.msra.mxu0 0.0
    %844 = vmatprep.subr.mxu0 0.0
    %845 = vmatpush1.msra.mxu0 0.0
    %846 = vmatprep.subr.mxu0 0.0
    %847 = vmatpush1.msra.mxu0 0.0
    %848 = vmatprep.subr.mxu0 0.0
    %849 = vmatpush1.msra.mxu0 0.0
    %850 = vmatprep.mubr.f32.mxu0 0.0
    %851 = vmatmul.mubr.f32.gmra.mrb[0].mxu0 %v784
    %v852 = vpop.f32.mrb[0].mxu0
    %v853 = vadd.f32 %v196, %v852
    %v854 = vpop.f32.mrb[0].mxu0
    %855 = vdwg.mxu0
    %v857 = vrot.slane %v853, 6
    %v859 = vadd.f32 %v184, %v857
    %v860 = vxor.u32 %v859, 2147483648
    %v861 = vmul.f32 %v860, 1.442695
    %v862 = vpow.pop %v861
    %v863 = vadd.f32 %v862, 1.0
    %v864 = vrcp.pop %v863
    %v865 = vmul.f32 1.0, %v864
    %866 = vrot.lane.b32.xlu0 %v857, 64
    %v867 = vpop.permute.xlu0 %866
    %v869 = vmul.f32 %v865, %v867
    %871 = vrot.lane.b32.xlu0 %v869, 64
    %v872 = vpop.permute.xlu0 %871
    %v874 = vadd.f32 %v184, %v872
    %v875 = vtanh.pop %v874
    %v876 = vsub.f32 1.0, %v865
    %878 = vrot.lane.b32.xlu0 %v875, 96
    %v879 = vpop.permute.xlu0 %878
    %v881 = vmul.f32 %v876, %v879
    %v882 = vrot.slane %v780, 6
    %v884 = vmul.f32 %v865, %v882
    %v885 = vadd.f32 %v881, %v884
    %v886 = vmul.f32 %v765, %v885
    %887 = vrot.lane.b32.xlu0 %v882, 96
    %v888 = vpop.permute.xlu0 %887
    %v890 = vmul.f32 %v772, %v888
    %892 = vrot.lane.b32.xlu0 %v890, 32
    %v893 = vpop.permute.xlu0 %892
    %v895 = vadd.f32 %v886, %v893
    %v897 = vrot.slane %v895, 2
    %898 = vrot.lane.b32.xlu0 %v897, 96
    %v899 = vpop.permute.xlu0 %898
    %v900 = vsel %vm198, %v899, 0
    %902 = vmatprep.subr.mxu0 0.0
    %903 = vmatpush1.msra.mxu0 %v187
    %904 = vmatprep.subr.mxu0 0.0
    %905 = vmatpush1.msra.mxu0 %v188
    %906 = vmatprep.subr.mxu0 0.0
    %907 = vmatpush1.msra.mxu0 %v189
    %908 = vmatprep.subr.mxu0 0.0
    %909 = vmatpush1.msra.mxu0 %v190
    %910 = vmatprep.subr.mxu0 0.0
    %911 = vmatpush1.msra.mxu0 0.0
    %912 = vmatprep.subr.mxu0 0.0
    %913 = vmatpush1.msra.mxu0 0.0
    %914 = vmatprep.subr.mxu0 0.0
    %915 = vmatpush1.msra.mxu0 0.0
    %916 = vmatprep.subr.mxu0 0.0
    %917 = vmatpush1.msra.mxu0 0.0
    %918 = vmatprep.subr.mxu0 0.0
    %919 = vmatpush1.msra.mxu0 0.0
    %920 = vmatprep.subr.mxu0 0.0
    %921 = vmatpush1.msra.mxu0 0.0
    %922 = vmatprep.subr.mxu0 0.0
    %923 = vmatpush1.msra.mxu0 0.0
    %924 = vmatprep.subr.mxu0 0.0
    %925 = vmatpush1.msra.mxu0 0.0
    %926 = vmatprep.subr.mxu0 0.0
    %927 = vmatpush1.msra.mxu0 0.0
    %928 = vmatprep.subr.mxu0 0.0
    %929 = vmatpush1.msra.mxu0 0.0
    %930 = vmatprep.subr.mxu0 0.0
    %931 = vmatpush1.msra.mxu0 0.0
    %932 = vmatprep.subr.mxu0 0.0
    %933 = vmatpush1.msra.mxu0 0.0
    %934 = vmatprep.subr.mxu0 0.0
    %935 = vmatpush1.msra.mxu0 0.0
    %936 = vmatprep.subr.mxu0 0.0
    %937 = vmatpush1.msra.mxu0 0.0
    %938 = vmatprep.subr.mxu0 0.0
    %939 = vmatpush1.msra.mxu0 0.0
    %940 = vmatprep.subr.mxu0 0.0
    %941 = vmatpush1.msra.mxu0 0.0
    %942 = vmatprep.subr.mxu0 0.0
    %943 = vmatpush1.msra.mxu0 0.0
    %944 = vmatprep.subr.mxu0 0.0
    %945 = vmatpush1.msra.mxu0 0.0
    %946 = vmatprep.subr.mxu0 0.0
    %947 = vmatpush1.msra.mxu0 0.0
    %948 = vmatprep.subr.mxu0 0.0
    %949 = vmatpush1.msra.mxu0 0.0
    %950 = vmatprep.subr.mxu0 0.0
    %951 = vmatpush1.msra.mxu0 0.0
    %952 = vmatprep.subr.mxu0 0.0
    %953 = vmatpush1.msra.mxu0 0.0
    %954 = vmatprep.subr.mxu0 0.0
    %955 = vmatpush1.msra.mxu0 0.0
    %956 = vmatprep.subr.mxu0 0.0
    %957 = vmatpush1.msra.mxu0 0.0
    %958 = vmatprep.subr.mxu0 0.0
    %959 = vmatpush1.msra.mxu0 0.0
    %960 = vmatprep.subr.mxu0 0.0
    %961 = vmatpush1.msra.mxu0 0.0
    %962 = vmatprep.subr.mxu0 0.0
    %963 = vmatpush1.msra.mxu0 0.0
    %964 = vmatprep.subr.mxu0 0.0
    %965 = vmatpush1.msra.mxu0 0.0
    %966 = vmatprep.mubr.f32.mxu0 0.0
    %967 = vmatmul.mubr.f32.gmra.mrb[0].mxu0 %v900
    %v968 = vpop.f32.mrb[0].mxu0
    %v969 = vadd.f32 %v196, %v968
    %v970 = vpop.f32.mrb[0].mxu0
    %971 = vdwg.mxu0
    %v973 = vrot.slane %v969, 4
    %v975 = vadd.f32 %v184, %v973
    %v976 = vxor.u32 %v975, 2147483648
    %v977 = vmul.f32 %v976, 1.442695
    %v978 = vpow.pop %v977
    %v979 = vadd.f32 %v978, 1.0
    %v980 = vrcp.pop %v979
    %v981 = vmul.f32 1.0, %v980
    %982 = vrot.lane.b32.xlu0 %v973, 64
    %v983 = vpop.permute.xlu0 %982
    %v985 = vmul.f32 %v981, %v983
    %987 = vrot.lane.b32.xlu0 %v985, 64
    %v988 = vpop.permute.xlu0 %987
    %v990 = vadd.f32 %v184, %v988
    %v991 = vtanh.pop %v990
    %v992 = vsub.f32 1.0, %v981
    %994 = vrot.lane.b32.xlu0 %v991, 96
    %v995 = vpop.permute.xlu0 %994
    %v997 = vmul.f32 %v992, %v995
    %v998 = vrot.slane %v895, 6
    %v1000 = vmul.f32 %v981, %v998
    %v1001 = vadd.f32 %v997, %v1000
    %v1002 = vmul.f32 %v765, %v1001
    %1003 = vrot.lane.b32.xlu0 %v998, 96
    %v1004 = vpop.permute.xlu0 %1003
    %v1006 = vmul.f32 %v772, %v1004
    %1008 = vrot.lane.b32.xlu0 %v1006, 32
    %v1009 = vpop.permute.xlu0 %1008
    %v1011 = vadd.f32 %v1002, %v1009
    %v1013 = vrot.slane %v1011, 4
    %1014 = vrot.lane.b32.xlu0 %v1013, 96
    %v1015 = vpop.permute.xlu0 %1014
    %v1016 = vsel %vm198, %v1015, 0
    %1018 = vmatprep.subr.mxu0 0.0
    %1019 = vmatpush1.msra.mxu0 %v187
    %1020 = vmatprep.subr.mxu0 0.0
    %1021 = vmatpush1.msra.mxu0 %v188
    %1022 = vmatprep.subr.mxu0 0.0
    %1023 = vmatpush1.msra.mxu0 %v189
    %1024 = vmatprep.subr.mxu0 0.0
    %1025 = vmatpush1.msra.mxu0 %v190
    %1026 = vmatprep.subr.mxu0 0.0
    %1027 = vmatpush1.msra.mxu0 0.0
    %1028 = vmatprep.subr.mxu0 0.0
    %1029 = vmatpush1.msra.mxu0 0.0
    %1030 = vmatprep.subr.mxu0 0.0
    %1031 = vmatpush1.msra.mxu0 0.0
    %1032 = vmatprep.subr.mxu0 0.0
    %1033 = vmatpush1.msra.mxu0 0.0
    %1034 = vmatprep.subr.mxu0 0.0
    %1035 = vmatpush1.msra.mxu0 0.0
    %1036 = vmatprep.subr.mxu0 0.0
    %1037 = vmatpush1.msra.mxu0 0.0
    %1038 = vmatprep.subr.mxu0 0.0
    %1039 = vmatpush1.msra.mxu0 0.0
    %1040 = vmatprep.subr.mxu0 0.0
    %1041 = vmatpush1.msra.mxu0 0.0
    %1042 = vmatprep.subr.mxu0 0.0
    %1043 = vmatpush1.msra.mxu0 0.0
    %1044 = vmatprep.subr.mxu0 0.0
    %1045 = vmatpush1.msra.mxu0 0.0
    %1046 = vmatprep.subr.mxu0 0.0
    %1047 = vmatpush1.msra.mxu0 0.0
    %1048 = vmatprep.subr.mxu0 0.0
    %1049 = vmatpush1.msra.mxu0 0.0
    %1050 = vmatprep.subr.mxu0 0.0
    %1051 = vmatpush1.msra.mxu0 0.0
    %1052 = vmatprep.subr.mxu0 0.0
    %1053 = vmatpush1.msra.mxu0 0.0
    %1054 = vmatprep.subr.mxu0 0.0
    %1055 = vmatpush1.msra.mxu0 0.0
    %1056 = vmatprep.subr.mxu0 0.0
    %1057 = vmatpush1.msra.mxu0 0.0
    %1058 = vmatprep.subr.mxu0 0.0
    %1059 = vmatpush1.msra.mxu0 0.0
    %1060 = vmatprep.subr.mxu0 0.0
    %1061 = vmatpush1.msra.mxu0 0.0
    %1062 = vmatprep.subr.mxu0 0.0
    %1063 = vmatpush1.msra.mxu0 0.0
    %1064 = vmatprep.subr.mxu0 0.0
    %1065 = vmatpush1.msra.mxu0 0.0
    %1066 = vmatprep.subr.mxu0 0.0
    %1067 = vmatpush1.msra.mxu0 0.0
    %1068 = vmatprep.subr.mxu0 0.0
    %1069 = vmatpush1.msra.mxu0 0.0
    %1070 = vmatprep.subr.mxu0 0.0
    %1071 = vmatpush1.msra.mxu0 0.0
    %1072 = vmatprep.subr.mxu0 0.0
    %1073 = vmatpush1.msra.mxu0 0.0
    %1074 = vmatprep.subr.mxu0 0.0
    %1075 = vmatpush1.msra.mxu0 0.0
    %1076 = vmatprep.subr.mxu0 0.0
    %1077 = vmatpush1.msra.mxu0 0.0
    %1078 = vmatprep.subr.mxu0 0.0
    %1079 = vmatpush1.msra.mxu0 0.0
    %1080 = vmatprep.subr.mxu0 0.0
    %1081 = vmatpush1.msra.mxu0 0.0
    %1082 = vmatprep.mubr.f32.mxu0 0.0
    %1083 = vmatmul.mubr.f32.gmra.mrb[0].mxu0 %v1016
    %v1084 = vpop.f32.mrb[0].mxu0
    %v1085 = vadd.f32 %v196, %v1084
    %v1086 = vpop.f32.mrb[0].mxu0
    %1087 = vdwg.mxu0
    %v1089 = vrot.slane %v1085, 2
    %v1091 = vadd.f32 %v184, %v1089
    %v1092 = vxor.u32 %v1091, 2147483648
    %v1093 = vmul.f32 %v1092, 1.442695
    %v1094 = vpow.pop %v1093
    %v1095 = vadd.f32 %v1094, 1.0
    %v1096 = vrcp.pop %v1095
    %v1097 = vmul.f32 1.0, %v1096
    %1098 = vrot.lane.b32.xlu0 %v1089, 64
    %v1099 = vpop.permute.xlu0 %1098
    %v1101 = vmul.f32 %v1097, %v1099
    %1103 = vrot.lane.b32.xlu0 %v1101, 64
    %v1104 = vpop.permute.xlu0 %1103
    %v1106 = vadd.f32 %v184, %v1104
    %v1107 = vtanh.pop %v1106
    %v1108 = vsub.f32 1.0, %v1097
    %1110 = vrot.lane.b32.xlu0 %v1107, 96
    %v1111 = vpop.permute.xlu0 %1110
    %v1113 = vmul.f32 %v1108, %v1111
    %v1114 = vrot.slane %v1011, 6
    %v1116 = vmul.f32 %v1097, %v1114
    %v1117 = vadd.f32 %v1113, %v1116
    %v1118 = vmul.f32 %v765, %v1117
    %1119 = vrot.lane.b32.xlu0 %v1114, 96
    %v1120 = vpop.permute.xlu0 %1119
    %v1122 = vmul.f32 %v772, %v1120
    %1124 = vrot.lane.b32.xlu0 %v1122, 32
    %v1125 = vpop.permute.xlu0 %1124
    %v1127 = vadd.f32 %v1118, %v1125
    %1130 = vrot.lane.b32.xlu0 %v544, 32
    %v1131 = vpop.permute.xlu0 %1130
    %1133 = vrot.lane.b32.xlu0 %v660, 64
    %v1134 = vpop.permute.xlu0 %1133
    %1138 = vrot.lane.b32.xlu0 %v1013, 32
    %v1139 = vpop.permute.xlu0 %1138
    %v1142 = vrot.slane %v1127, 6
    %1143 = vrot.lane.b32.xlu0 %v1142, 64
    %v1144 = vpop.permute.xlu0 %1143
    %v1146 = vsel %vm198, %v314, %v428
    %vm1147 = vcmask 523264
    %v1148 = vsel %vm1147, %v1146, %v1131
    %vm1149 = vcmask 785408
    %v1150 = vsel %vm1149, %v1148, %v1134
    %v1151 = vsel %vm198, %v783, %v897
    %v1152 = vsel %vm1147, %v1151, %v1139
    %v1153 = vsel %vm1149, %v1152, %v1144
    %v1154 = vld [vmem:[#allocation3] sm:$0xff]
    %v1155 = vld [vmem:[#allocation3 + $0x8] sm:$0xff]
    %v1156 = vld [vmem:[#allocation3 + $0x10] sm:$0xff]
    %v1157 = vld [vmem:[#allocation3 + $0x18] sm:$0xff]
    %v1158 = vld [vmem:[#allocation3 + $0x20] sm:$0xff]
    %v1159 = vld [vmem:[#allocation3 + $0x28] sm:$0xff]
    %v1160 = vld [vmem:[#allocation3 + $0x30] sm:$0xff]
    %v1161 = vld [vmem:[#allocation3 + $0x38] sm:$0xff]
    %v1162 = vld [vmem:[#allocation3 + $0x40] sm:$0xff]
    %v1163 = vld [vmem:[#allocation3 + $0x48] sm:$0xff]
    %v1164 = vld [vmem:[#allocation3 + $0x50] sm:$0xff]
    %v1165 = vld [vmem:[#allocation3 + $0x58] sm:$0xff]
    %v1166 = vld [vmem:[#allocation3 + $0x60] sm:$0xff]
    %v1167 = vld [vmem:[#allocation3 + $0x68] sm:$0xff]
    %v1168 = vld [vmem:[#allocation3 + $0x70] sm:$0xff]
    %v1169 = vld [vmem:[#allocation3 + $0x78] sm:$0xff]
    %v1170 = vld [vmem:[#allocation3 + $0x80] sm:$0xff]
    %v1171 = vld [vmem:[#allocation3 + $0x88] sm:$0xff]
    %v1172 = vld [vmem:[#allocation3 + $0x90] sm:$0xff]
    %v1173 = vld [vmem:[#allocation3 + $0x98] sm:$0xff]
    %v1174 = vld [vmem:[#allocation3 + $0xa0] sm:$0xff]
    %v1175 = vld [vmem:[#allocation3 + $0xa8] sm:$0xff]
    %v1176 = vld [vmem:[#allocation3 + $0xb0] sm:$0xff]
    %v1177 = vld [vmem:[#allocation3 + $0xb8] sm:$0xff]
    %v1178 = vld [vmem:[#allocation3 + $0xc0] sm:$0xff]
    %v1179 = vld [vmem:[#allocation3 + $0xc8] sm:$0xff]
    %v1180 = vld [vmem:[#allocation3 + $0xd0] sm:$0xff]
    %v1181 = vld [vmem:[#allocation3 + $0xd8] sm:$0xff]
    %v1182 = vld [vmem:[#allocation3 + $0xe0] sm:$0xff]
    %v1183 = vld [vmem:[#allocation3 + $0xe8] sm:$0xff]
    %v1184 = vld [vmem:[#allocation3 + $0xf0] sm:$0xff]
    %v1185 = vld [vmem:[#allocation3 + $0xf8] sm:$0xff]
    %v1186 = vld [vmem:[#allocation3 + $0x100] sm:$0xff]
    %v1187 = vld [vmem:[#allocation3 + $0x108] sm:$0xff]
    %v1188 = vld [vmem:[#allocation3 + $0x110] sm:$0xff]
    %v1189 = vld [vmem:[#allocation3 + $0x118] sm:$0xff]
    %v1190 = vld [vmem:[#allocation3 + $0x120] sm:$0xff]
    %v1191 = vld [vmem:[#allocation3 + $0x128] sm:$0xff]
    %v1192 = vld [vmem:[#allocation3 + $0x130] sm:$0xff]
    %v1193 = vld [vmem:[#allocation3 + $0x138] sm:$0xff]
    %v1194 = vld [vmem:[#allocation3 + $0x140] sm:$0xff]
    %v1195 = vld [vmem:[#allocation3 + $0x148] sm:$0xff]
    %v1196 = vld [vmem:[#allocation3 + $0x150] sm:$0xff]
    %v1197 = vld [vmem:[#allocation3 + $0x158] sm:$0xff]
    %v1198 = vld [vmem:[#allocation3 + $0x160] sm:$0xff]
    %v1199 = vld [vmem:[#allocation3 + $0x168] sm:$0xff]
    %v1200 = vld [vmem:[#allocation3 + $0x170] sm:$0xff]
    %v1201 = vld [vmem:[#allocation3 + $0x178] sm:$0xff]
    %v1202 = vld [vmem:[#allocation3 + $0x180] sm:$0xff]
    %v1203 = vld [vmem:[#allocation3 + $0x188] sm:$0xff]
    %v1204 = vld [vmem:[#allocation3 + $0x190] sm:$0xff]
    %v1205 = vld [vmem:[#allocation3 + $0x198] sm:$0xff]
    %v1206 = vld [vmem:[#allocation3 + $0x1a0] sm:$0xff]
    %v1207 = vld [vmem:[#allocation3 + $0x1a8] sm:$0xff]
    %v1208 = vld [vmem:[#allocation3 + $0x1b0] sm:$0xff]
    %v1209 = vld [vmem:[#allocation3 + $0x1b8] sm:$0xff]
    %v1210 = vld [vmem:[#allocation3 + $0x1c0] sm:$0xff]
    %v1211 = vld [vmem:[#allocation3 + $0x1c8] sm:$0xff]
    %v1212 = vld [vmem:[#allocation3 + $0x1d0] sm:$0xff]
    %v1213 = vld [vmem:[#allocation3 + $0x1d8] sm:$0xff]
    %v1214 = vld [vmem:[#allocation3 + $0x1e0] sm:$0xff]
    %v1215 = vld [vmem:[#allocation3 + $0x1e8] sm:$0xff]
    %v1216 = vld [vmem:[#allocation3 + $0x1f0] sm:$0xff]
    %v1217 = vld [vmem:[#allocation3 + $0x1f8] sm:$0xff]
    %1218 = vmatprep.subr.mxu0 %v1155
    %1219 = vmatpush1.msra.mxu0 %v1154
    %1220 = vmatprep.subr.mxu0 %v1157
    %1221 = vmatpush1.msra.mxu0 %v1156
    %1222 = vmatprep.subr.mxu0 %v1159
    %1223 = vmatpush1.msra.mxu0 %v1158
    %1224 = vmatprep.subr.mxu0 %v1161
    %1225 = vmatpush1.msra.mxu0 %v1160
    %1226 = vmatprep.subr.mxu0 %v1163
    %1227 = vmatpush1.msra.mxu0 %v1162
    %1228 = vmatprep.subr.mxu0 %v1165
    %1229 = vmatpush1.msra.mxu0 %v1164
    %1230 = vmatprep.subr.mxu0 %v1167
    %1231 = vmatpush1.msra.mxu0 %v1166
    %1232 = vmatprep.subr.mxu0 %v1169
    %1233 = vmatpush1.msra.mxu0 %v1168
    %1234 = vmatprep.subr.mxu0 %v1171
    %1235 = vmatpush1.msra.mxu0 %v1170
    %1236 = vmatprep.subr.mxu0 %v1173
    %1237 = vmatpush1.msra.mxu0 %v1172
    %1238 = vmatprep.subr.mxu0 %v1175
    %1239 = vmatpush1.msra.mxu0 %v1174
    %1240 = vmatprep.subr.mxu0 %v1177
    %1241 = vmatpush1.msra.mxu0 %v1176
    %1242 = vmatprep.subr.mxu0 %v1179
    %1243 = vmatpush1.msra.mxu0 %v1178
    %1244 = vmatprep.subr.mxu0 %v1181
    %1245 = vmatpush1.msra.mxu0 %v1180
    %1246 = vmatprep.subr.mxu0 %v1183
    %1247 = vmatpush1.msra.mxu0 %v1182
    %1248 = vmatprep.subr.mxu0 %v1185
    %1249 = vmatpush1.msra.mxu0 %v1184
    %1250 = vmatprep.subr.mxu0 %v1187
    %1251 = vmatpush1.msra.mxu0 %v1186
    %1252 = vmatprep.subr.mxu0 %v1189
    %1253 = vmatpush1.msra.mxu0 %v1188
    %1254 = vmatprep.subr.mxu0 %v1191
    %1255 = vmatpush1.msra.mxu0 %v1190
    %1256 = vmatprep.subr.mxu0 %v1193
    %1257 = vmatpush1.msra.mxu0 %v1192
    %1258 = vmatprep.subr.mxu0 %v1195
    %1259 = vmatpush1.msra.mxu0 %v1194
    %1260 = vmatprep.subr.mxu0 %v1197
    %1261 = vmatpush1.msra.mxu0 %v1196
    %1262 = vmatprep.subr.mxu0 %v1199
    %1263 = vmatpush1.msra.mxu0 %v1198
    %1264 = vmatprep.subr.mxu0 %v1201
    %1265 = vmatpush1.msra.mxu0 %v1200
    %1266 = vmatprep.subr.mxu0 %v1203
    %1267 = vmatpush1.msra.mxu0 %v1202
    %1268 = vmatprep.subr.mxu0 %v1205
    %1269 = vmatpush1.msra.mxu0 %v1204
    %1270 = vmatprep.subr.mxu0 %v1207
    %1271 = vmatpush1.msra.mxu0 %v1206
    %1272 = vmatprep.subr.mxu0 %v1209
    %1273 = vmatpush1.msra.mxu0 %v1208
    %1274 = vmatprep.subr.mxu0 %v1211
    %1275 = vmatpush1.msra.mxu0 %v1210
    %1276 = vmatprep.subr.mxu0 %v1213
    %1277 = vmatpush1.msra.mxu0 %v1212
    %1278 = vmatprep.subr.mxu0 %v1215
    %1279 = vmatpush1.msra.mxu0 %v1214
    %1280 = vmatprep.subr.mxu0 %v1217
    %1281 = vmatpush1.msra.mxu0 %v1216
    %1282 = vmatprep.mubr.f32.mxu0 %v1153
    %1283 = vmatmul.mubr.f32.gmra.mrb[0].mxu0 %v1150
    %v1284 = vpop.f32.mrb[0].mxu0
    %v1285 = vadd.f32 0.0, %v1284
    %v1286 = vpop.f32.mrb[0].mxu0
    %v1287 = vadd.f32 0.0, %v1286
    %1288 = vdwg.mxu0
    %v1289 = vtanh.pop %v1285
    %v1290 = vtanh.pop %v1287
    %v1291 = vld [vmem:[%s9] sm:$0xff]
    %v1292 = vld [vmem:[%s9 + $0x8] sm:$0xff]
    %v1293 = vld [vmem:[%s9 + $0x10] sm:$0xff]
    %v1294 = vld [vmem:[%s9 + $0x18] sm:$0xff]
    %v1295 = vld [vmem:[%s9 + $0x20] sm:$0xff]
    %v1296 = vld [vmem:[%s9 + $0x28] sm:$0xff]
    %v1297 = vld [vmem:[%s9 + $0x30] sm:$0xff]
    %v1298 = vld [vmem:[%s9 + $0x38] sm:$0xff]
    %v1299 = vld [vmem:[%s9 + $0x40] sm:$0xff]
    %v1300 = vld [vmem:[%s9 + $0x48] sm:$0xff]
    %v1301 = vld [vmem:[%s9 + $0x50] sm:$0xff]
    %v1302 = vld [vmem:[%s9 + $0x58] sm:$0xff]
    %v1303 = vld [vmem:[%s9 + $0x60] sm:$0xff]
    %v1304 = vld [vmem:[%s9 + $0x68] sm:$0xff]
    %v1305 = vld [vmem:[%s9 + $0x70] sm:$0xff]
    %v1306 = vld [vmem:[%s9 + $0x78] sm:$0xff]
    %v1307 = vld [vmem:[%s9 + $0x80] sm:$0xff]
    %v1308 = vld [vmem:[%s9 + $0x88] sm:$0xff]
    %v1309 = vld [vmem:[%s9 + $0x90] sm:$0xff]
    %v1310 = vld [vmem:[%s9 + $0x98] sm:$0xff]
    %v1311 = vld [vmem:[%s9 + $0xa0] sm:$0xff]
    %v1312 = vld [vmem:[%s9 + $0xa8] sm:$0xff]
    %v1313 = vld [vmem:[%s9 + $0xb0] sm:$0xff]
    %v1314 = vld [vmem:[%s9 + $0xb8] sm:$0xff]
    %v1315 = vld [vmem:[%s9 + $0xc0] sm:$0xff]
    %v1316 = vld [vmem:[%s9 + $0xc8] sm:$0xff]
    %v1317 = vld [vmem:[%s9 + $0xd0] sm:$0xff]
    %v1318 = vld [vmem:[%s9 + $0xd8] sm:$0xff]
    %v1319 = vld [vmem:[%s9 + $0xe0] sm:$0xff]
    %v1320 = vld [vmem:[%s9 + $0xe8] sm:$0xff]
    %v1321 = vld [vmem:[%s9 + $0xf0] sm:$0xff]
    %v1322 = vld [vmem:[%s9 + $0xf8] sm:$0xff]
    %1323 = vmatprep.subr.mxu0 0.0
    %1324 = vmatpush1.msra.mxu0 %v1291
    %1325 = vmatprep.subr.mxu0 0.0
    %1326 = vmatpush1.msra.mxu0 %v1292
    %1327 = vmatprep.subr.mxu0 0.0
    %1328 = vmatpush1.msra.mxu0 %v1293
    %1329 = vmatprep.subr.mxu0 0.0
    %1330 = vmatpush1.msra.mxu0 %v1294
    %1331 = vmatprep.subr.mxu0 0.0
    %1332 = vmatpush1.msra.mxu0 %v1295
    %1333 = vmatprep.subr.mxu0 0.0
    %1334 = vmatpush1.msra.mxu0 %v1296
    %1335 = vmatprep.subr.mxu0 0.0
    %1336 = vmatpush1.msra.mxu0 %v1297
    %1337 = vmatprep.subr.mxu0 0.0
    %1338 = vmatpush1.msra.mxu0 %v1298
    %1339 = vmatprep.subr.mxu0 0.0
    %1340 = vmatpush1.msra.mxu0 %v1299
    %1341 = vmatprep.subr.mxu0 0.0
    %1342 = vmatpush1.msra.mxu0 %v1300
    %1343 = vmatprep.subr.mxu0 0.0
    %1344 = vmatpush1.msra.mxu0 %v1301
    %1345 = vmatprep.subr.mxu0 0.0
    %1346 = vmatpush1.msra.mxu0 %v1302
    %1347 = vmatprep.subr.mxu0 0.0
    %1348 = vmatpush1.msra.mxu0 %v1303
    %1349 = vmatprep.subr.mxu0 0.0
    %1350 = vmatpush1.msra.mxu0 %v1304
    %1351 = vmatprep.subr.mxu0 0.0
    %1352 = vmatpush1.msra.mxu0 %v1305
    %1353 = vmatprep.subr.mxu0 0.0
    %1354 = vmatpush1.msra.mxu0 %v1306
    %1355 = vmatprep.subr.mxu0 0.0
    %1356 = vmatpush1.msra.mxu0 %v1307
    %1357 = vmatprep.subr.mxu0 0.0
    %1358 = vmatpush1.msra.mxu0 %v1308
    %1359 = vmatprep.subr.mxu0 0.0
    %1360 = vmatpush1.msra.mxu0 %v1309
    %1361 = vmatprep.subr.mxu0 0.0
    %1362 = vmatpush1.msra.mxu0 %v1310
    %1363 = vmatprep.subr.mxu0 0.0
    %1364 = vmatpush1.msra.mxu0 %v1311
    %1365 = vmatprep.subr.mxu0 0.0
    %1366 = vmatpush1.msra.mxu0 %v1312
    %1367 = vmatprep.subr.mxu0 0.0
    %1368 = vmatpush1.msra.mxu0 %v1313
    %1369 = vmatprep.subr.mxu0 0.0
    %1370 = vmatpush1.msra.mxu0 %v1314
    %1371 = vmatprep.subr.mxu0 0.0
    %1372 = vmatpush1.msra.mxu0 %v1315
    %1373 = vmatprep.subr.mxu0 0.0
    %1374 = vmatpush1.msra.mxu0 %v1316
    %1375 = vmatprep.subr.mxu0 0.0
    %1376 = vmatpush1.msra.mxu0 %v1317
    %1377 = vmatprep.subr.mxu0 0.0
    %1378 = vmatpush1.msra.mxu0 %v1318
    %1379 = vmatprep.subr.mxu0 0.0
    %1380 = vmatpush1.msra.mxu0 %v1319
    %1381 = vmatprep.subr.mxu0 0.0
    %1382 = vmatpush1.msra.mxu0 %v1320
    %1383 = vmatprep.subr.mxu0 0.0
    %1384 = vmatpush1.msra.mxu0 %v1321
    %1385 = vmatprep.subr.mxu0 0.0
    %1386 = vmatpush1.msra.mxu0 %v1322
    %1387 = vmatprep.mubr.f32.mxu0 %v1290
    %1388 = vmatmul.mubr.f32.gmra.mrb[0].mxu0 %v1289
    %v1389 = vpop.f32.mrb[0].mxu0
    %v1390 = vadd.f32 0.0, %v1389
    %v1391 = vpop.f32.mrb[0].mxu0
    %1392 = vdwg.mxu0
    %vm1393 = vcmp.gt.f32.partialorder %v88, 0.0
    %v1394 = vsel %vm1393, 1, 0
    %v1395 = vcvt.s32.f32 %v1394
    %v1396 = vsel %vm1393, %v1390, -1e+30
    %vm1397 = vcmask 58368
    %v1398 = vsel %vm1397, %v1396, -inf
    %1399 = vmax.xlane.f32.xlu0 %v1398
    %v1400 = vpop.xlane.xlu0 %1399
    %v1401 = vsub.f32 %v1396, %v1400
    %v1402 = vmul.f32 %v1401, 1.442695
    %v1403 = vpow.pop %v1402
    %v1404 = vmul.f32 %v1403, %v1395
    %v1405 = vsel %vm1397, %v1404, 0.0
    %1406 = vadd.xlane.f32.xlu0 %v1405
    %v1407 = vpop.xlane.xlu0 %1406
    %v1408 = vmax.f32 %v1407, 1e-30
    %v1409 = vrcp.pop %v1408
    %v1410 = vmul.f32 %v1404, %v1409
    %1412 = vset.pattern.permute.xlu0 0
    %1413 = vperm.xlu0 %1412, %v1410
    %v1414 = vpop.permute.xlu0 %1413
    %v1416 = vmul.f32 %v1414, %v311
    %v1417 = vadd.f32 %v1416, 0.0
    %1418 = vset.pattern.permute.xlu0 1
    %1419 = vperm.xlu0 %1418, %v1410
    %v1420 = vpop.permute.xlu0 %1419
    %v1423 = vmul.f32 %v1420, %v430
    %1425 = vrot.lane.b32.xlu0 %v1423, 32
    %v1426 = vpop.permute.xlu0 %1425
    %v1428 = vadd.f32 %v1417, %v1426
    %1429 = vset.pattern.permute.xlu0 2
    %1430 = vperm.xlu0 %1429, %v1410
    %v1431 = vpop.permute.xlu0 %1430
    %v1434 = vmul.f32 %v1431, %v546
    %1436 = vrot.lane.b32.xlu0 %v1434, 32
    %v1437 = vpop.permute.xlu0 %1436
    %v1439 = vadd.f32 %v1428, %v1437
    %1440 = vset.pattern.permute.xlu0 3
    %1441 = vperm.xlu0 %1440, %v1410
    %v1442 = vpop.permute.xlu0 %1441
    %v1444 = vmul.f32 %v1442, %v662
    %1446 = vrot.lane.b32.xlu0 %v1444, 32
    %v1447 = vpop.permute.xlu0 %1446
    %v1449 = vadd.f32 %v1439, %v1447
    %1450 = vset.pattern.permute.xlu0 4
    %1451 = vperm.xlu0 %1450, %v1410
    %v1452 = vpop.permute.xlu0 %1451
    %v1454 = vmul.f32 %v1452, %v780
    %v1455 = vadd.f32 %v1449, %v1454
    %1456 = vset.pattern.permute.xlu0 5
    %1457 = vperm.xlu0 %1456, %v1410
    %v1458 = vpop.permute.xlu0 %1457
    %v1461 = vmul.f32 %v1458, %v899
    %1463 = vrot.lane.b32.xlu0 %v1461, 32
    %v1464 = vpop.permute.xlu0 %1463
    %v1466 = vadd.f32 %v1455, %v1464
    %1467 = vset.pattern.permute.xlu0 6
    %1468 = vperm.xlu0 %1467, %v1410
    %v1469 = vpop.permute.xlu0 %1468
    %v1472 = vmul.f32 %v1469, %v1015
    %1474 = vrot.lane.b32.xlu0 %v1472, 32
    %v1475 = vpop.permute.xlu0 %1474
    %v1477 = vadd.f32 %v1466, %v1475
    %1478 = vset.pattern.permute.xlu0 7
    %1479 = vperm.xlu0 %1478, %v1410
    %v1480 = vpop.permute.xlu0 %1479
    %1482 = vrot.lane.b32.xlu0 %v1142, 96
    %v1483 = vpop.permute.xlu0 %1482
    %v1485 = vmul.f32 %v1480, %v1483
    %1487 = vrot.lane.b32.xlu0 %v1485, 32
    %v1488 = vpop.permute.xlu0 %1487
    %v1490 = vadd.f32 %v1477, %v1488
    %v1491 = vld [vmem:[%s3] sm:$0xff]
    %v1492 = vld [vmem:[%s3 + $0x8] sm:$0xff]
    %v1493 = vld [vmem:[%s10] sm:$0x1]
    %1495 = vset.pattern.permute.xlu0 0
    %1496 = vperm.xlu0 %1495, %v1491
    %v1497 = vpop.permute.xlu0 %1496
    %1500 = vset.pattern.permute.xlu0 0
    %1501 = vperm.xlu0 %1500, %v1492
    %v1502 = vpop.permute.xlu0 %1501
    %v1505 = vlaneseq
    %v1506 = vshrl.u32 %v1505, 7
    %v1507 = vsub.s32 0, %v1506
    %v1508 = vrot.slane %v1493, %v1507
    %v1510 = vmul.f32 %v1497, %v1508
    %v1511 = vmul.f32 %v1502, %v1508
    %v1512 = vld [vmem:[%s12] sm:$0x1]
    %v1514 = vlaneseq
    %v1515 = vshrl.u32 %v1514, 7
    %v1516 = vsub.s32 0, %v1515
    %v1517 = vrot.slane %v1512, %v1516
    %v1519 = vadd.f32 %v1510, %v1517
    %v1520 = vadd.f32 %v1511, %v1517
    %v1521 = vld [vmem:[%s11] sm:$0xff]
    %v1522 = vld [vmem:[%s11 + $0x8] sm:$0xff]
    %v1523 = vld [vmem:[%s11 + $0x10] sm:$0xff]
    %v1524 = vld [vmem:[%s11 + $0x18] sm:$0xff]
    %v1525 = vld [vmem:[%s13] sm:$0x1]
    %v1527 = vlaneseq
    %v1528 = vshrl.u32 %v1527, 7
    %v1529 = vsub.s32 0, %v1528
    %v1530 = vrot.slane %v1525, %v1529
    %1532 = vmatprep.subr.mxu0 0.0
    %1533 = vmatpush1.msra.mxu0 %v1521
    %1534 = vmatprep.subr.mxu0 0.0
    %1535 = vmatpush1.msra.mxu0 %v1522
    %1536 = vmatprep.subr.mxu0 0.0
    %1537 = vmatpush1.msra.mxu0 %v1523
    %1538 = vmatprep.subr.mxu0 0.0
    %1539 = vmatpush1.msra.mxu0 %v1524
    %1540 = vmatprep.subr.mxu0 0.0
    %1541 = vmatpush1.msra.mxu0 0.0
    %1542 = vmatprep.subr.mxu0 0.0
    %1543 = vmatpush1.msra.mxu0 0.0
    %1544 = vmatprep.subr.mxu0 0.0
    %1545 = vmatpush1.msra.mxu0 0.0
    %1546 = vmatprep.subr.mxu0 0.0
    %1547 = vmatpush1.msra.mxu0 0.0
    %1548 = vmatprep.subr.mxu0 0.0
    %1549 = vmatpush1.msra.mxu0 0.0
    %1550 = vmatprep.subr.mxu0 0.0
    %1551 = vmatpush1.msra.mxu0 0.0
    %1552 = vmatprep.subr.mxu0 0.0
    %1553 = vmatpush1.msra.mxu0 0.0
    %1554 = vmatprep.subr.mxu0 0.0
    %1555 = vmatpush1.msra.mxu0 0.0
    %1556 = vmatprep.subr.mxu0 0.0
    %1557 = vmatpush1.msra.mxu0 0.0
    %1558 = vmatprep.subr.mxu0 0.0
    %1559 = vmatpush1.msra.mxu0 0.0
    %1560 = vmatprep.subr.mxu0 0.0
    %1561 = vmatpush1.msra.mxu0 0.0
    %1562 = vmatprep.subr.mxu0 0.0
    %1563 = vmatpush1.msra.mxu0 0.0
    %1564 = vmatprep.subr.mxu0 0.0
    %1565 = vmatpush1.msra.mxu0 0.0
    %1566 = vmatprep.subr.mxu0 0.0
    %1567 = vmatpush1.msra.mxu0 0.0
    %1568 = vmatprep.subr.mxu0 0.0
    %1569 = vmatpush1.msra.mxu0 0.0
    %1570 = vmatprep.subr.mxu0 0.0
    %1571 = vmatpush1.msra.mxu0 0.0
    %1572 = vmatprep.subr.mxu0 0.0
    %1573 = vmatpush1.msra.mxu0 0.0
    %1574 = vmatprep.subr.mxu0 0.0
    %1575 = vmatpush1.msra.mxu0 0.0
    %1576 = vmatprep.subr.mxu0 0.0
    %1577 = vmatpush1.msra.mxu0 0.0
    %1578 = vmatprep.subr.mxu0 0.0
    %1579 = vmatpush1.msra.mxu0 0.0
    %1580 = vmatprep.subr.mxu0 0.0
    %1581 = vmatpush1.msra.mxu0 0.0
    %1582 = vmatprep.subr.mxu0 0.0
    %1583 = vmatpush1.msra.mxu0 0.0
    %1584 = vmatprep.subr.mxu0 0.0
    %1585 = vmatpush1.msra.mxu0 0.0
    %1586 = vmatprep.subr.mxu0 0.0
    %1587 = vmatpush1.msra.mxu0 0.0
    %1588 = vmatprep.subr.mxu0 0.0
    %1589 = vmatpush1.msra.mxu0 0.0
    %1590 = vmatprep.subr.mxu0 0.0
    %1591 = vmatpush1.msra.mxu0 0.0
    %1592 = vmatprep.subr.mxu0 0.0
    %1593 = vmatpush1.msra.mxu0 0.0
    %1594 = vmatprep.subr.mxu0 0.0
    %1595 = vmatpush1.msra.mxu0 0.0
    %1596 = vmatprep.mubr.f32.mxu0 0.0
    %1597 = vmatmul.mubr.f32.gmra.mrb[0].mxu0 %v200
    %v1598 = vpop.f32.mrb[0].mxu0
    %v1599 = vadd.f32 %v1530, %v1598
    %v1600 = vpop.f32.mrb[0].mxu0
    %1601 = vdwg.mxu0
    %v1602 = vadd.f32 %v1519, %v1599
    %v1603 = vxor.u32 %v1602, 2147483648
    %v1604 = vmul.f32 %v1603, 1.442695
    %v1605 = vpow.pop %v1604
    %v1606 = vadd.f32 %v1605, 1.0
    %v1607 = vrcp.pop %v1606
    %v1608 = vmul.f32 1.0, %v1607
    %1610 = vrot.lane.b32.xlu0 %v1599, 64
    %v1611 = vpop.permute.xlu0 %1610
    %v1613 = vmul.f32 %v1608, %v1611
    %1615 = vrot.lane.b32.xlu0 %v1613, 64
    %v1616 = vpop.permute.xlu0 %1615
    %v1618 = vadd.f32 %v1519, %v1616
    %v1619 = vtanh.pop %v1618
    %v1620 = vsub.f32 1.0, %v1608
    %1622 = vrot.lane.b32.xlu0 %v1619, 96
    %v1623 = vpop.permute.xlu0 %1622
    %v1625 = vmul.f32 %v1620, %v1623
    %v1626 = vmul.f32 %v1608, 0.0
    %v1627 = vadd.f32 %v1625, %v1626
    %v1628 = vmul.f32 %v301, %v1627
    %v1629 = vadd.f32 %v1628, %v310
    %1631 = vrot.lane.b32.xlu0 %v1629, 96
    %v1632 = vpop.permute.xlu0 %1631
    %v1633 = vsel %vm198, %v1632, 0
    %1635 = vmatprep.subr.mxu0 0.0
    %1636 = vmatpush1.msra.mxu0 %v1521
    %1637 = vmatprep.subr.mxu0 0.0
    %1638 = vmatpush1.msra.mxu0 %v1522
    %1639 = vmatprep.subr.mxu0 0.0
    %1640 = vmatpush1.msra.mxu0 %v1523
    %1641 = vmatprep.subr.mxu0 0.0
    %1642 = vmatpush1.msra.mxu0 %v1524
    %1643 = vmatprep.subr.mxu0 0.0
    %1644 = vmatpush1.msra.mxu0 0.0
    %1645 = vmatprep.subr.mxu0 0.0
    %1646 = vmatpush1.msra.mxu0 0.0
    %1647 = vmatprep.subr.mxu0 0.0
    %1648 = vmatpush1.msra.mxu0 0.0
    %1649 = vmatprep.subr.mxu0 0.0
    %1650 = vmatpush1.msra.mxu0 0.0
    %1651 = vmatprep.subr.mxu0 0.0
    %1652 = vmatpush1.msra.mxu0 0.0
    %1653 = vmatprep.subr.mxu0 0.0
    %1654 = vmatpush1.msra.mxu0 0.0
    %1655 = vmatprep.subr.mxu0 0.0
    %1656 = vmatpush1.msra.mxu0 0.0
    %1657 = vmatprep.subr.mxu0 0.0
    %1658 = vmatpush1.msra.mxu0 0.0
    %1659 = vmatprep.subr.mxu0 0.0
    %1660 = vmatpush1.msra.mxu0 0.0
    %1661 = vmatprep.subr.mxu0 0.0
    %1662 = vmatpush1.msra.mxu0 0.0
    %1663 = vmatprep.subr.mxu0 0.0
    %1664 = vmatpush1.msra.mxu0 0.0
    %1665 = vmatprep.subr.mxu0 0.0
    %1666 = vmatpush1.msra.mxu0 0.0
    %1667 = vmatprep.subr.mxu0 0.0
    %1668 = vmatpush1.msra.mxu0 0.0
    %1669 = vmatprep.subr.mxu0 0.0
    %1670 = vmatpush1.msra.mxu0 0.0
    %1671 = vmatprep.subr.mxu0 0.0
    %1672 = vmatpush1.msra.mxu0 0.0
    %1673 = vmatprep.subr.mxu0 0.0
    %1674 = vmatpush1.msra.mxu0 0.0
    %1675 = vmatprep.subr.mxu0 0.0
    %1676 = vmatpush1.msra.mxu0 0.0
    %1677 = vmatprep.subr.mxu0 0.0
    %1678 = vmatpush1.msra.mxu0 0.0
    %1679 = vmatprep.subr.mxu0 0.0
    %1680 = vmatpush1.msra.mxu0 0.0
    %1681 = vmatprep.subr.mxu0 0.0
    %1682 = vmatpush1.msra.mxu0 0.0
    %1683 = vmatprep.subr.mxu0 0.0
    %1684 = vmatpush1.msra.mxu0 0.0
    %1685 = vmatprep.subr.mxu0 0.0
    %1686 = vmatpush1.msra.mxu0 0.0
    %1687 = vmatprep.subr.mxu0 0.0
    %1688 = vmatpush1.msra.mxu0 0.0
    %1689 = vmatprep.subr.mxu0 0.0
    %1690 = vmatpush1.msra.mxu0 0.0
    %1691 = vmatprep.subr.mxu0 0.0
    %1692 = vmatpush1.msra.mxu0 0.0
    %1693 = vmatprep.subr.mxu0 0.0
    %1694 = vmatpush1.msra.mxu0 0.0
    %1695 = vmatprep.subr.mxu0 0.0
    %1696 = vmatpush1.msra.mxu0 0.0
    %1697 = vmatprep.subr.mxu0 0.0
    %1698 = vmatpush1.msra.mxu0 0.0
    %1699 = vmatprep.mubr.f32.mxu0 0.0
    %1700 = vmatmul.mubr.f32.gmra.mrb[0].mxu0 %v1633
    %v1701 = vpop.f32.mrb[0].mxu0
    %v1702 = vadd.f32 %v1530, %v1701
    %v1703 = vpop.f32.mrb[0].mxu0
    %1704 = vdwg.mxu0
    %v1706 = vrot.slane %v1702, 6
    %v1708 = vadd.f32 %v1519, %v1706
    %v1709 = vxor.u32 %v1708, 2147483648
    %v1710 = vmul.f32 %v1709, 1.442695
    %v1711 = vpow.pop %v1710
    %v1712 = vadd.f32 %v1711, 1.0
    %v1713 = vrcp.pop %v1712
    %v1714 = vmul.f32 1.0, %v1713
    %1715 = vrot.lane.b32.xlu0 %v1706, 64
    %v1716 = vpop.permute.xlu0 %1715
    %v1718 = vmul.f32 %v1714, %v1716
    %1720 = vrot.lane.b32.xlu0 %v1718, 64
    %v1721 = vpop.permute.xlu0 %1720
    %v1723 = vadd.f32 %v1519, %v1721
    %v1724 = vtanh.pop %v1723
    %v1725 = vsub.f32 1.0, %v1714
    %1727 = vrot.lane.b32.xlu0 %v1724, 96
    %v1728 = vpop.permute.xlu0 %1727
    %v1730 = vmul.f32 %v1725, %v1728
    %v1731 = vrot.slane %v1629, 6
    %v1733 = vmul.f32 %v1714, %v1731
    %v1734 = vadd.f32 %v1730, %v1733
    %v1735 = vmul.f32 %v301, %v1734
    %1736 = vrot.lane.b32.xlu0 %v1731, 96
    %v1737 = vpop.permute.xlu0 %1736
    %v1739 = vmul.f32 %v308, %v1737
    %1741 = vrot.lane.b32.xlu0 %v1739, 32
    %v1742 = vpop.permute.xlu0 %1741
    %v1744 = vadd.f32 %v1735, %v1742
    %v1746 = vrot.slane %v1744, 2
    %1747 = vrot.lane.b32.xlu0 %v1746, 96
    %v1748 = vpop.permute.xlu0 %1747
    %v1749 = vsel %vm198, %v1748, 0
    %1751 = vmatprep.subr.mxu0 0.0
    %1752 = vmatpush1.msra.mxu0 %v1521
    %1753 = vmatprep.subr.mxu0 0.0
    %1754 = vmatpush1.msra.mxu0 %v1522
    %1755 = vmatprep.subr.mxu0 0.0
    %1756 = vmatpush1.msra.mxu0 %v1523
    %1757 = vmatprep.subr.mxu0 0.0
    %1758 = vmatpush1.msra.mxu0 %v1524
    %1759 = vmatprep.subr.mxu0 0.0
    %1760 = vmatpush1.msra.mxu0 0.0
    %1761 = vmatprep.subr.mxu0 0.0
    %1762 = vmatpush1.msra.mxu0 0.0
    %1763 = vmatprep.subr.mxu0 0.0
    %1764 = vmatpush1.msra.mxu0 0.0
    %1765 = vmatprep.subr.mxu0 0.0
    %1766 = vmatpush1.msra.mxu0 0.0
    %1767 = vmatprep.subr.mxu0 0.0
    %1768 = vmatpush1.msra.mxu0 0.0
    %1769 = vmatprep.subr.mxu0 0.0
    %1770 = vmatpush1.msra.mxu0 0.0
    %1771 = vmatprep.subr.mxu0 0.0
    %1772 = vmatpush1.msra.mxu0 0.0
    %1773 = vmatprep.subr.mxu0 0.0
    %1774 = vmatpush1.msra.mxu0 0.0
    %1775 = vmatprep.subr.mxu0 0.0
    %1776 = vmatpush1.msra.mxu0 0.0
    %1777 = vmatprep.subr.mxu0 0.0
    %1778 = vmatpush1.msra.mxu0 0.0
    %1779 = vmatprep.subr.mxu0 0.0
    %1780 = vmatpush1.msra.mxu0 0.0
    %1781 = vmatprep.subr.mxu0 0.0
    %1782 = vmatpush1.msra.mxu0 0.0
    %1783 = vmatprep.subr.mxu0 0.0
    %1784 = vmatpush1.msra.mxu0 0.0
    %1785 = vmatprep.subr.mxu0 0.0
    %1786 = vmatpush1.msra.mxu0 0.0
    %1787 = vmatprep.subr.mxu0 0.0
    %1788 = vmatpush1.msra.mxu0 0.0
    %1789 = vmatprep.subr.mxu0 0.0
    %1790 = vmatpush1.msra.mxu0 0.0
    %1791 = vmatprep.subr.mxu0 0.0
    %1792 = vmatpush1.msra.mxu0 0.0
    %1793 = vmatprep.subr.mxu0 0.0
    %1794 = vmatpush1.msra.mxu0 0.0
    %1795 = vmatprep.subr.mxu0 0.0
    %1796 = vmatpush1.msra.mxu0 0.0
    %1797 = vmatprep.subr.mxu0 0.0
    %1798 = vmatpush1.msra.mxu0 0.0
    %1799 = vmatprep.subr.mxu0 0.0
    %1800 = vmatpush1.msra.mxu0 0.0
    %1801 = vmatprep.subr.mxu0 0.0
    %1802 = vmatpush1.msra.mxu0 0.0
    %1803 = vmatprep.subr.mxu0 0.0
    %1804 = vmatpush1.msra.mxu0 0.0
    %1805 = vmatprep.subr.mxu0 0.0
    %1806 = vmatpush1.msra.mxu0 0.0
    %1807 = vmatprep.subr.mxu0 0.0
    %1808 = vmatpush1.msra.mxu0 0.0
    %1809 = vmatprep.subr.mxu0 0.0
    %1810 = vmatpush1.msra.mxu0 0.0
    %1811 = vmatprep.subr.mxu0 0.0
    %1812 = vmatpush1.msra.mxu0 0.0
    %1813 = vmatprep.subr.mxu0 0.0
    %1814 = vmatpush1.msra.mxu0 0.0
    %1815 = vmatprep.mubr.f32.mxu0 0.0
    %1816 = vmatmul.mubr.f32.gmra.mrb[0].mxu0 %v1749
    %v1817 = vpop.f32.mrb[0].mxu0
    %v1818 = vadd.f32 %v1530, %v1817
    %v1819 = vpop.f32.mrb[0].mxu0
    %1820 = vdwg.mxu0
    %v1822 = vrot.slane %v1818, 4
    %v1824 = vadd.f32 %v1519, %v1822
    %v1825 = vxor.u32 %v1824, 2147483648
    %v1826 = vmul.f32 %v1825, 1.442695
    %v1827 = vpow.pop %v1826
    %v1828 = vadd.f32 %v1827, 1.0
    %v1829 = vrcp.pop %v1828
    %v1830 = vmul.f32 1.0, %v1829
    %1831 = vrot.lane.b32.xlu0 %v1822, 64
    %v1832 = vpop.permute.xlu0 %1831
    %v1834 = vmul.f32 %v1830, %v1832
    %1836 = vrot.lane.b32.xlu0 %v1834, 64
    %v1837 = vpop.permute.xlu0 %1836
    %v1839 = vadd.f32 %v1519, %v1837
    %v1840 = vtanh.pop %v1839
    %v1841 = vsub.f32 1.0, %v1830
    %1843 = vrot.lane.b32.xlu0 %v1840, 96
    %v1844 = vpop.permute.xlu0 %1843
    %v1846 = vmul.f32 %v1841, %v1844
    %v1847 = vrot.slane %v1744, 6
    %v1849 = vmul.f32 %v1830, %v1847
    %v1850 = vadd.f32 %v1846, %v1849
    %v1851 = vmul.f32 %v301, %v1850
    %1852 = vrot.lane.b32.xlu0 %v1847, 96
    %v1853 = vpop.permute.xlu0 %1852
    %v1855 = vmul.f32 %v308, %v1853
    %1857 = vrot.lane.b32.xlu0 %v1855, 32
    %v1858 = vpop.permute.xlu0 %1857
    %v1860 = vadd.f32 %v1851, %v1858
    %v1862 = vrot.slane %v1860, 4
    %1863 = vrot.lane.b32.xlu0 %v1862, 96
    %v1864 = vpop.permute.xlu0 %1863
    %v1865 = vsel %vm198, %v1864, 0
    %1867 = vmatprep.subr.mxu0 0.0
    %1868 = vmatpush1.msra.mxu0 %v1521
    %1869 = vmatprep.subr.mxu0 0.0
    %1870 = vmatpush1.msra.mxu0 %v1522
    %1871 = vmatprep.subr.mxu0 0.0
    %1872 = vmatpush1.msra.mxu0 %v1523
    %1873 = vmatprep.subr.mxu0 0.0
    %1874 = vmatpush1.msra.mxu0 %v1524
    %1875 = vmatprep.subr.mxu0 0.0
    %1876 = vmatpush1.msra.mxu0 0.0
    %1877 = vmatprep.subr.mxu0 0.0
    %1878 = vmatpush1.msra.mxu0 0.0
    %1879 = vmatprep.subr.mxu0 0.0
    %1880 = vmatpush1.msra.mxu0 0.0
    %1881 = vmatprep.subr.mxu0 0.0
    %1882 = vmatpush1.msra.mxu0 0.0
    %1883 = vmatprep.subr.mxu0 0.0
    %1884 = vmatpush1.msra.mxu0 0.0
    %1885 = vmatprep.subr.mxu0 0.0
    %1886 = vmatpush1.msra.mxu0 0.0
    %1887 = vmatprep.subr.mxu0 0.0
    %1888 = vmatpush1.msra.mxu0 0.0
    %1889 = vmatprep.subr.mxu0 0.0
    %1890 = vmatpush1.msra.mxu0 0.0
    %1891 = vmatprep.subr.mxu0 0.0
    %1892 = vmatpush1.msra.mxu0 0.0
    %1893 = vmatprep.subr.mxu0 0.0
    %1894 = vmatpush1.msra.mxu0 0.0
    %1895 = vmatprep.subr.mxu0 0.0
    %1896 = vmatpush1.msra.mxu0 0.0
    %1897 = vmatprep.subr.mxu0 0.0
    %1898 = vmatpush1.msra.mxu0 0.0
    %1899 = vmatprep.subr.mxu0 0.0
    %1900 = vmatpush1.msra.mxu0 0.0
    %1901 = vmatprep.subr.mxu0 0.0
    %1902 = vmatpush1.msra.mxu0 0.0
    %1903 = vmatprep.subr.mxu0 0.0
    %1904 = vmatpush1.msra.mxu0 0.0
    %1905 = vmatprep.subr.mxu0 0.0
    %1906 = vmatpush1.msra.mxu0 0.0
    %1907 = vmatprep.subr.mxu0 0.0
    %1908 = vmatpush1.msra.mxu0 0.0
    %1909 = vmatprep.subr.mxu0 0.0
    %1910 = vmatpush1.msra.mxu0 0.0
    %1911 = vmatprep.subr.mxu0 0.0
    %1912 = vmatpush1.msra.mxu0 0.0
    %1913 = vmatprep.subr.mxu0 0.0
    %1914 = vmatpush1.msra.mxu0 0.0
    %1915 = vmatprep.subr.mxu0 0.0
    %1916 = vmatpush1.msra.mxu0 0.0
    %1917 = vmatprep.subr.mxu0 0.0
    %1918 = vmatpush1.msra.mxu0 0.0
    %1919 = vmatprep.subr.mxu0 0.0
    %1920 = vmatpush1.msra.mxu0 0.0
    %1921 = vmatprep.subr.mxu0 0.0
    %1922 = vmatpush1.msra.mxu0 0.0
    %1923 = vmatprep.subr.mxu0 0.0
    %1924 = vmatpush1.msra.mxu0 0.0
    %1925 = vmatprep.subr.mxu0 0.0
    %1926 = vmatpush1.msra.mxu0 0.0
    %1927 = vmatprep.subr.mxu0 0.0
    %1928 = vmatpush1.msra.mxu0 0.0
    %1929 = vmatprep.subr.mxu0 0.0
    %1930 = vmatpush1.msra.mxu0 0.0
    %1931 = vmatprep.mubr.f32.mxu0 0.0
    %1932 = vmatmul.mubr.f32.gmra.mrb[0].mxu0 %v1865
    %v1933 = vpop.f32.mrb[0].mxu0
    %v1934 = vadd.f32 %v1530, %v1933
    %v1935 = vpop.f32.mrb[0].mxu0
    %1936 = vdwg.mxu0
    %v1938 = vrot.slane %v1934, 2
    %v1940 = vadd.f32 %v1519, %v1938
    %v1941 = vxor.u32 %v1940, 2147483648
    %v1942 = vmul.f32 %v1941, 1.442695
    %v1943 = vpow.pop %v1942
    %v1944 = vadd.f32 %v1943, 1.0
    %v1945 = vrcp.pop %v1944
    %v1946 = vmul.f32 1.0, %v1945
    %1947 = vrot.lane.b32.xlu0 %v1938, 64
    %v1948 = vpop.permute.xlu0 %1947
    %v1950 = vmul.f32 %v1946, %v1948
    %1952 = vrot.lane.b32.xlu0 %v1950, 64
    %v1953 = vpop.permute.xlu0 %1952
    %v1955 = vadd.f32 %v1519, %v1953
    %v1956 = vtanh.pop %v1955
    %v1957 = vsub.f32 1.0, %v1946
    %1959 = vrot.lane.b32.xlu0 %v1956, 96
    %v1960 = vpop.permute.xlu0 %1959
    %v1962 = vmul.f32 %v1957, %v1960
    %v1963 = vrot.slane %v1860, 6
    %v1965 = vmul.f32 %v1946, %v1963
    %v1966 = vadd.f32 %v1962, %v1965
    %v1967 = vmul.f32 %v301, %v1966
    %1968 = vrot.lane.b32.xlu0 %v1963, 96
    %v1969 = vpop.permute.xlu0 %1968
    %v1971 = vmul.f32 %v308, %v1969
    %1973 = vrot.lane.b32.xlu0 %v1971, 32
    %v1974 = vpop.permute.xlu0 %1973
    %v1976 = vadd.f32 %v1967, %v1974
    %v1978 = vrot.slane %v1976, 6
    %1979 = vrot.lane.b32.xlu0 %v1978, 96
    %v1980 = vpop.permute.xlu0 %1979
    %v1981 = vsel %vm198, %v1980, 0
    %1983 = vmatprep.subr.mxu0 0.0
    %1984 = vmatpush1.msra.mxu0 %v1521
    %1985 = vmatprep.subr.mxu0 0.0
    %1986 = vmatpush1.msra.mxu0 %v1522
    %1987 = vmatprep.subr.mxu0 0.0
    %1988 = vmatpush1.msra.mxu0 %v1523
    %1989 = vmatprep.subr.mxu0 0.0
    %1990 = vmatpush1.msra.mxu0 %v1524
    %1991 = vmatprep.subr.mxu0 0.0
    %1992 = vmatpush1.msra.mxu0 0.0
    %1993 = vmatprep.subr.mxu0 0.0
    %1994 = vmatpush1.msra.mxu0 0.0
    %1995 = vmatprep.subr.mxu0 0.0
    %1996 = vmatpush1.msra.mxu0 0.0
    %1997 = vmatprep.subr.mxu0 0.0
    %1998 = vmatpush1.msra.mxu0 0.0
    %1999 = vmatprep.subr.mxu0 0.0
    %2000 = vmatpush1.msra.mxu0 0.0
    %2001 = vmatprep.subr.mxu0 0.0
    %2002 = vmatpush1.msra.mxu0 0.0
    %2003 = vmatprep.subr.mxu0 0.0
    %2004 = vmatpush1.msra.mxu0 0.0
    %2005 = vmatprep.subr.mxu0 0.0
    %2006 = vmatpush1.msra.mxu0 0.0
    %2007 = vmatprep.subr.mxu0 0.0
    %2008 = vmatpush1.msra.mxu0 0.0
    %2009 = vmatprep.subr.mxu0 0.0
    %2010 = vmatpush1.msra.mxu0 0.0
    %2011 = vmatprep.subr.mxu0 0.0
    %2012 = vmatpush1.msra.mxu0 0.0
    %2013 = vmatprep.subr.mxu0 0.0
    %2014 = vmatpush1.msra.mxu0 0.0
    %2015 = vmatprep.subr.mxu0 0.0
    %2016 = vmatpush1.msra.mxu0 0.0
    %2017 = vmatprep.subr.mxu0 0.0
    %2018 = vmatpush1.msra.mxu0 0.0
    %2019 = vmatprep.subr.mxu0 0.0
    %2020 = vmatpush1.msra.mxu0 0.0
    %2021 = vmatprep.subr.mxu0 0.0
    %2022 = vmatpush1.msra.mxu0 0.0
    %2023 = vmatprep.subr.mxu0 0.0
    %2024 = vmatpush1.msra.mxu0 0.0
    %2025 = vmatprep.subr.mxu0 0.0
    %2026 = vmatpush1.msra.mxu0 0.0
    %2027 = vmatprep.subr.mxu0 0.0
    %2028 = vmatpush1.msra.mxu0 0.0
    %2029 = vmatprep.subr.mxu0 0.0
    %2030 = vmatpush1.msra.mxu0 0.0
    %2031 = vmatprep.subr.mxu0 0.0
    %2032 = vmatpush1.msra.mxu0 0.0
    %2033 = vmatprep.subr.mxu0 0.0
    %2034 = vmatpush1.msra.mxu0 0.0
    %2035 = vmatprep.subr.mxu0 0.0
    %2036 = vmatpush1.msra.mxu0 0.0
    %2037 = vmatprep.subr.mxu0 0.0
    %2038 = vmatpush1.msra.mxu0 0.0
    %2039 = vmatprep.subr.mxu0 0.0
    %2040 = vmatpush1.msra.mxu0 0.0
    %2041 = vmatprep.subr.mxu0 0.0
    %2042 = vmatpush1.msra.mxu0 0.0
    %2043 = vmatprep.subr.mxu0 0.0
    %2044 = vmatpush1.msra.mxu0 0.0
    %2045 = vmatprep.subr.mxu0 0.0
    %2046 = vmatpush1.msra.mxu0 0.0
    %2047 = vmatprep.mubr.f32.mxu0 0.0
    %2048 = vmatmul.mubr.f32.gmra.mrb[0].mxu0 %v1981
    %v2049 = vpop.f32.mrb[0].mxu0
    %v2050 = vadd.f32 %v1530, %v2049
    %v2051 = vpop.f32.mrb[0].mxu0
    %2052 = vdwg.mxu0
    %v2053 = vadd.f32 %v1520, %v2050
    %v2054 = vxor.u32 %v2053, 2147483648
    %v2055 = vmul.f32 %v2054, 1.442695
    %v2056 = vpow.pop %v2055
    %v2057 = vadd.f32 %v2056, 1.0
    %v2058 = vrcp.pop %v2057
    %v2059 = vmul.f32 1.0, %v2058
    %2061 = vrot.lane.b32.xlu0 %v2050, 64
    %v2062 = vpop.permute.xlu0 %2061
    %v2064 = vmul.f32 %v2059, %v2062
    %2066 = vrot.lane.b32.xlu0 %v2064, 64
    %v2067 = vpop.permute.xlu0 %2066
    %v2069 = vadd.f32 %v1520, %v2067
    %v2070 = vtanh.pop %v2069
    %v2071 = vsub.f32 1.0, %v2059
    %2073 = vrot.lane.b32.xlu0 %v2070, 96
    %v2074 = vpop.permute.xlu0 %2073
    %v2076 = vmul.f32 %v2071, %v2074
    %v2078 = vmul.f32 %v2059, %v1978
    %v2079 = vadd.f32 %v2076, %v2078
    %v2080 = vmul.f32 %v765, %v2079
    %v2082 = vmul.f32 %v772, %v1980
    %2084 = vrot.lane.b32.xlu0 %v2082, 32
    %v2085 = vpop.permute.xlu0 %2084
    %v2087 = vadd.f32 %v2080, %v2085
    %2089 = vrot.lane.b32.xlu0 %v2087, 96
    %v2090 = vpop.permute.xlu0 %2089
    %v2091 = vsel %vm198, %v2090, 0
    %2093 = vmatprep.subr.mxu0 0.0
    %2094 = vmatpush1.msra.mxu0 %v1521
    %2095 = vmatprep.subr.mxu0 0.0
    %2096 = vmatpush1.msra.mxu0 %v1522
    %2097 = vmatprep.subr.mxu0 0.0
    %2098 = vmatpush1.msra.mxu0 %v1523
    %2099 = vmatprep.subr.mxu0 0.0
    %2100 = vmatpush1.msra.mxu0 %v1524
    %2101 = vmatprep.subr.mxu0 0.0
    %2102 = vmatpush1.msra.mxu0 0.0
    %2103 = vmatprep.subr.mxu0 0.0
    %2104 = vmatpush1.msra.mxu0 0.0
    %2105 = vmatprep.subr.mxu0 0.0
    %2106 = vmatpush1.msra.mxu0 0.0
    %2107 = vmatprep.subr.mxu0 0.0
    %2108 = vmatpush1.msra.mxu0 0.0
    %2109 = vmatprep.subr.mxu0 0.0
    %2110 = vmatpush1.msra.mxu0 0.0
    %2111 = vmatprep.subr.mxu0 0.0
    %2112 = vmatpush1.msra.mxu0 0.0
    %2113 = vmatprep.subr.mxu0 0.0
    %2114 = vmatpush1.msra.mxu0 0.0
    %2115 = vmatprep.subr.mxu0 0.0
    %2116 = vmatpush1.msra.mxu0 0.0
    %2117 = vmatprep.subr.mxu0 0.0
    %2118 = vmatpush1.msra.mxu0 0.0
    %2119 = vmatprep.subr.mxu0 0.0
    %2120 = vmatpush1.msra.mxu0 0.0
    %2121 = vmatprep.subr.mxu0 0.0
    %2122 = vmatpush1.msra.mxu0 0.0
    %2123 = vmatprep.subr.mxu0 0.0
    %2124 = vmatpush1.msra.mxu0 0.0
    %2125 = vmatprep.subr.mxu0 0.0
    %2126 = vmatpush1.msra.mxu0 0.0
    %2127 = vmatprep.subr.mxu0 0.0
    %2128 = vmatpush1.msra.mxu0 0.0
    %2129 = vmatprep.subr.mxu0 0.0
    %2130 = vmatpush1.msra.mxu0 0.0
    %2131 = vmatprep.subr.mxu0 0.0
    %2132 = vmatpush1.msra.mxu0 0.0
    %2133 = vmatprep.subr.mxu0 0.0
    %2134 = vmatpush1.msra.mxu0 0.0
    %2135 = vmatprep.subr.mxu0 0.0
    %2136 = vmatpush1.msra.mxu0 0.0
    %2137 = vmatprep.subr.mxu0 0.0
    %2138 = vmatpush1.msra.mxu0 0.0
    %2139 = vmatprep.subr.mxu0 0.0
    %2140 = vmatpush1.msra.mxu0 0.0
    %2141 = vmatprep.subr.mxu0 0.0
    %2142 = vmatpush1.msra.mxu0 0.0
    %2143 = vmatprep.subr.mxu0 0.0
    %2144 = vmatpush1.msra.mxu0 0.0
    %2145 = vmatprep.subr.mxu0 0.0
    %2146 = vmatpush1.msra.mxu0 0.0
    %2147 = vmatprep.subr.mxu0 0.0
    %2148 = vmatpush1.msra.mxu0 0.0
    %2149 = vmatprep.subr.mxu0 0.0
    %2150 = vmatpush1.msra.mxu0 0.0
    %2151 = vmatprep.subr.mxu0 0.0
    %2152 = vmatpush1.msra.mxu0 0.0
    %2153 = vmatprep.subr.mxu0 0.0
    %2154 = vmatpush1.msra.mxu0 0.0
    %2155 = vmatprep.subr.mxu0 0.0
    %2156 = vmatpush1.msra.mxu0 0.0
    %2157 = vmatprep.mubr.f32.mxu0 0.0
    %2158 = vmatmul.mubr.f32.gmra.mrb[0].mxu0 %v2091
    %v2159 = vpop.f32.mrb[0].mxu0
    %v2160 = vadd.f32 %v1530, %v2159
    %v2161 = vpop.f32.mrb[0].mxu0
    %2162 = vdwg.mxu0
    %v2164 = vrot.slane %v2160, 6
    %v2166 = vadd.f32 %v1520, %v2164
    %v2167 = vxor.u32 %v2166, 2147483648
    %v2168 = vmul.f32 %v2167, 1.442695
    %v2169 = vpow.pop %v2168
    %v2170 = vadd.f32 %v2169, 1.0
    %v2171 = vrcp.pop %v2170
    %v2172 = vmul.f32 1.0, %v2171
    %2173 = vrot.lane.b32.xlu0 %v2164, 64
    %v2174 = vpop.permute.xlu0 %2173
    %v2176 = vmul.f32 %v2172, %v2174
    %2178 = vrot.lane.b32.xlu0 %v2176, 64
    %v2179 = vpop.permute.xlu0 %2178
    %v2181 = vadd.f32 %v1520, %v2179
    %v2182 = vtanh.pop %v2181
    %v2183 = vsub.f32 1.0, %v2172
    %2185 = vrot.lane.b32.xlu0 %v2182, 96
    %v2186 = vpop.permute.xlu0 %2185
    %v2188 = vmul.f32 %v2183, %v2186
    %v2189 = vrot.slane %v2087, 6
    %v2191 = vmul.f32 %v2172, %v2189
    %v2192 = vadd.f32 %v2188, %v2191
    %v2193 = vmul.f32 %v765, %v2192
    %2194 = vrot.lane.b32.xlu0 %v2189, 96
    %v2195 = vpop.permute.xlu0 %2194
    %v2197 = vmul.f32 %v772, %v2195
    %2199 = vrot.lane.b32.xlu0 %v2197, 32
    %v2200 = vpop.permute.xlu0 %2199
    %v2202 = vadd.f32 %v2193, %v2200
    %v2204 = vrot.slane %v2202, 2
    %2205 = vrot.lane.b32.xlu0 %v2204, 96
    %v2206 = vpop.permute.xlu0 %2205
    %v2207 = vsel %vm198, %v2206, 0
    %2209 = vmatprep.subr.mxu0 0.0
    %2210 = vmatpush1.msra.mxu0 %v1521
    %2211 = vmatprep.subr.mxu0 0.0
    %2212 = vmatpush1.msra.mxu0 %v1522
    %2213 = vmatprep.subr.mxu0 0.0
    %2214 = vmatpush1.msra.mxu0 %v1523
    %2215 = vmatprep.subr.mxu0 0.0
    %2216 = vmatpush1.msra.mxu0 %v1524
    %2217 = vmatprep.subr.mxu0 0.0
    %2218 = vmatpush1.msra.mxu0 0.0
    %2219 = vmatprep.subr.mxu0 0.0
    %2220 = vmatpush1.msra.mxu0 0.0
    %2221 = vmatprep.subr.mxu0 0.0
    %2222 = vmatpush1.msra.mxu0 0.0
    %2223 = vmatprep.subr.mxu0 0.0
    %2224 = vmatpush1.msra.mxu0 0.0
    %2225 = vmatprep.subr.mxu0 0.0
    %2226 = vmatpush1.msra.mxu0 0.0
    %2227 = vmatprep.subr.mxu0 0.0
    %2228 = vmatpush1.msra.mxu0 0.0
    %2229 = vmatprep.subr.mxu0 0.0
    %2230 = vmatpush1.msra.mxu0 0.0
    %2231 = vmatprep.subr.mxu0 0.0
    %2232 = vmatpush1.msra.mxu0 0.0
    %2233 = vmatprep.subr.mxu0 0.0
    %2234 = vmatpush1.msra.mxu0 0.0
    %2235 = vmatprep.subr.mxu0 0.0
    %2236 = vmatpush1.msra.mxu0 0.0
    %2237 = vmatprep.subr.mxu0 0.0
    %2238 = vmatpush1.msra.mxu0 0.0
    %2239 = vmatprep.subr.mxu0 0.0
    %2240 = vmatpush1.msra.mxu0 0.0
    %2241 = vmatprep.subr.mxu0 0.0
    %2242 = vmatpush1.msra.mxu0 0.0
    %2243 = vmatprep.subr.mxu0 0.0
    %2244 = vmatpush1.msra.mxu0 0.0
    %2245 = vmatprep.subr.mxu0 0.0
    %2246 = vmatpush1.msra.mxu0 0.0
    %2247 = vmatprep.subr.mxu0 0.0
    %2248 = vmatpush1.msra.mxu0 0.0
    %2249 = vmatprep.subr.mxu0 0.0
    %2250 = vmatpush1.msra.mxu0 0.0
    %2251 = vmatprep.subr.mxu0 0.0
    %2252 = vmatpush1.msra.mxu0 0.0
    %2253 = vmatprep.subr.mxu0 0.0
    %2254 = vmatpush1.msra.mxu0 0.0
    %2255 = vmatprep.subr.mxu0 0.0
    %2256 = vmatpush1.msra.mxu0 0.0
    %2257 = vmatprep.subr.mxu0 0.0
    %2258 = vmatpush1.msra.mxu0 0.0
    %2259 = vmatprep.subr.mxu0 0.0
    %2260 = vmatpush1.msra.mxu0 0.0
    %2261 = vmatprep.subr.mxu0 0.0
    %2262 = vmatpush1.msra.mxu0 0.0
    %2263 = vmatprep.subr.mxu0 0.0
    %2264 = vmatpush1.msra.mxu0 0.0
    %2265 = vmatprep.subr.mxu0 0.0
    %2266 = vmatpush1.msra.mxu0 0.0
    %2267 = vmatprep.subr.mxu0 0.0
    %2268 = vmatpush1.msra.mxu0 0.0
    %2269 = vmatprep.subr.mxu0 0.0
    %2270 = vmatpush1.msra.mxu0 0.0
    %2271 = vmatprep.subr.mxu0 0.0
    %2272 = vmatpush1.msra.mxu0 0.0
    %2273 = vmatprep.mubr.f32.mxu0 0.0
    %2274 = vmatmul.mubr.f32.gmra.mrb[0].mxu0 %v2207
    %v2275 = vpop.f32.mrb[0].mxu0
    %v2276 = vadd.f32 %v1530, %v2275
    %v2277 = vpop.f32.mrb[0].mxu0
    %2278 = vdwg.mxu0
    %v2280 = vrot.slane %v2276, 4
    %v2282 = vadd.f32 %v1520, %v2280
    %v2283 = vxor.u32 %v2282, 2147483648
    %v2284 = vmul.f32 %v2283, 1.442695
    %v2285 = vpow.pop %v2284
    %v2286 = vadd.f32 %v2285, 1.0
    %v2287 = vrcp.pop %v2286
    %v2288 = vmul.f32 1.0, %v2287
    %2289 = vrot.lane.b32.xlu0 %v2280, 64
    %v2290 = vpop.permute.xlu0 %2289
    %v2292 = vmul.f32 %v2288, %v2290
    %2294 = vrot.lane.b32.xlu0 %v2292, 64
    %v2295 = vpop.permute.xlu0 %2294
    %v2297 = vadd.f32 %v1520, %v2295
    %v2298 = vtanh.pop %v2297
    %v2299 = vsub.f32 1.0, %v2288
    %2301 = vrot.lane.b32.xlu0 %v2298, 96
    %v2302 = vpop.permute.xlu0 %2301
    %v2304 = vmul.f32 %v2299, %v2302
    %v2305 = vrot.slane %v2202, 6
    %v2307 = vmul.f32 %v2288, %v2305
    %v2308 = vadd.f32 %v2304, %v2307
    %v2309 = vmul.f32 %v765, %v2308
    %2310 = vrot.lane.b32.xlu0 %v2305, 96
    %v2311 = vpop.permute.xlu0 %2310
    %v2313 = vmul.f32 %v772, %v2311
    %2315 = vrot.lane.b32.xlu0 %v2313, 32
    %v2316 = vpop.permute.xlu0 %2315
    %v2318 = vadd.f32 %v2309, %v2316
    %v2320 = vrot.slane %v2318, 4
    %2321 = vrot.lane.b32.xlu0 %v2320, 96
    %v2322 = vpop.permute.xlu0 %2321
    %v2323 = vsel %vm198, %v2322, 0
    %2325 = vmatprep.subr.mxu0 0.0
    %2326 = vmatpush1.msra.mxu0 %v1521
    %2327 = vmatprep.subr.mxu0 0.0
    %2328 = vmatpush1.msra.mxu0 %v1522
    %2329 = vmatprep.subr.mxu0 0.0
    %2330 = vmatpush1.msra.mxu0 %v1523
    %2331 = vmatprep.subr.mxu0 0.0
    %2332 = vmatpush1.msra.mxu0 %v1524
    %2333 = vmatprep.subr.mxu0 0.0
    %2334 = vmatpush1.msra.mxu0 0.0
    %2335 = vmatprep.subr.mxu0 0.0
    %2336 = vmatpush1.msra.mxu0 0.0
    %2337 = vmatprep.subr.mxu0 0.0
    %2338 = vmatpush1.msra.mxu0 0.0
    %2339 = vmatprep.subr.mxu0 0.0
    %2340 = vmatpush1.msra.mxu0 0.0
    %2341 = vmatprep.subr.mxu0 0.0
    %2342 = vmatpush1.msra.mxu0 0.0
    %2343 = vmatprep.subr.mxu0 0.0
    %2344 = vmatpush1.msra.mxu0 0.0
    %2345 = vmatprep.subr.mxu0 0.0
    %2346 = vmatpush1.msra.mxu0 0.0
    %2347 = vmatprep.subr.mxu0 0.0
    %2348 = vmatpush1.msra.mxu0 0.0
    %2349 = vmatprep.subr.mxu0 0.0
    %2350 = vmatpush1.msra.mxu0 0.0
    %2351 = vmatprep.subr.mxu0 0.0
    %2352 = vmatpush1.msra.mxu0 0.0
    %2353 = vmatprep.subr.mxu0 0.0
    %2354 = vmatpush1.msra.mxu0 0.0
    %2355 = vmatprep.subr.mxu0 0.0
    %2356 = vmatpush1.msra.mxu0 0.0
    %2357 = vmatprep.subr.mxu0 0.0
    %2358 = vmatpush1.msra.mxu0 0.0
    %2359 = vmatprep.subr.mxu0 0.0
    %2360 = vmatpush1.msra.mxu0 0.0
    %2361 = vmatprep.subr.mxu0 0.0
    %2362 = vmatpush1.msra.mxu0 0.0
    %2363 = vmatprep.subr.mxu0 0.0
    %2364 = vmatpush1.msra.mxu0 0.0
    %2365 = vmatprep.subr.mxu0 0.0
    %2366 = vmatpush1.msra.mxu0 0.0
    %2367 = vmatprep.subr.mxu0 0.0
    %2368 = vmatpush1.msra.mxu0 0.0
    %2369 = vmatprep.subr.mxu0 0.0
    %2370 = vmatpush1.msra.mxu0 0.0
    %2371 = vmatprep.subr.mxu0 0.0
    %2372 = vmatpush1.msra.mxu0 0.0
    %2373 = vmatprep.subr.mxu0 0.0
    %2374 = vmatpush1.msra.mxu0 0.0
    %2375 = vmatprep.subr.mxu0 0.0
    %2376 = vmatpush1.msra.mxu0 0.0
    %2377 = vmatprep.subr.mxu0 0.0
    %2378 = vmatpush1.msra.mxu0 0.0
    %2379 = vmatprep.subr.mxu0 0.0
    %2380 = vmatpush1.msra.mxu0 0.0
    %2381 = vmatprep.subr.mxu0 0.0
    %2382 = vmatpush1.msra.mxu0 0.0
    %2383 = vmatprep.subr.mxu0 0.0
    %2384 = vmatpush1.msra.mxu0 0.0
    %2385 = vmatprep.subr.mxu0 0.0
    %2386 = vmatpush1.msra.mxu0 0.0
    %2387 = vmatprep.subr.mxu0 0.0
    %2388 = vmatpush1.msra.mxu0 0.0
    %2389 = vmatprep.mubr.f32.mxu0 0.0
    %2390 = vmatmul.mubr.f32.gmra.mrb[0].mxu0 %v2323
    %v2391 = vpop.f32.mrb[0].mxu0
    %v2392 = vadd.f32 %v1530, %v2391
    %v2393 = vpop.f32.mrb[0].mxu0
    %2394 = vdwg.mxu0
    %v2396 = vrot.slane %v2392, 2
    %v2398 = vadd.f32 %v1520, %v2396
    %v2399 = vxor.u32 %v2398, 2147483648
    %v2400 = vmul.f32 %v2399, 1.442695
    %v2401 = vpow.pop %v2400
    %v2402 = vadd.f32 %v2401, 1.0
    %v2403 = vrcp.pop %v2402
    %v2404 = vmul.f32 1.0, %v2403
    %2405 = vrot.lane.b32.xlu0 %v2396, 64
    %v2406 = vpop.permute.xlu0 %2405
    %v2408 = vmul.f32 %v2404, %v2406
    %2410 = vrot.lane.b32.xlu0 %v2408, 64
    %v2411 = vpop.permute.xlu0 %2410
    %v2413 = vadd.f32 %v1520, %v2411
    %v2414 = vtanh.pop %v2413
    %v2415 = vsub.f32 1.0, %v2404
    %2417 = vrot.lane.b32.xlu0 %v2414, 96
    %v2418 = vpop.permute.xlu0 %2417
    %v2420 = vmul.f32 %v2415, %v2418
    %v2421 = vrot.slane %v2318, 6
    %v2423 = vmul.f32 %v2404, %v2421
    %v2424 = vadd.f32 %v2420, %v2423
    %v2425 = vmul.f32 %v765, %v2424
    %2426 = vrot.lane.b32.xlu0 %v2421, 96
    %v2427 = vpop.permute.xlu0 %2426
    %v2429 = vmul.f32 %v772, %v2427
    %2431 = vrot.lane.b32.xlu0 %v2429, 32
    %v2432 = vpop.permute.xlu0 %2431
    %v2434 = vadd.f32 %v2425, %v2432
    %v2436 = vrot.slane %v2434, 6
    %v2438 = vadd.f32 %v1490, %v2436
    %vm2439 = vcmask 517376
    %v2440 = vsel %vm2439, %v2438, 0.0
    %v2441 = vrot.slane %v2440, 4
    %v2442 = vadd.f32 %v2440, %v2441
    %v2443 = vrot.slane %v2442, 2
    %v2444 = vadd.f32 %v2442, %v2443
    %v2445 = vrot.slane %v2444, 1
    %v2446 = vadd.f32 %v2444, %v2445
    %v2447 = vrcp.pop 2.0
    %v2448 = vmul.f32 %v2446, %v2447
    %v2449 = vsub.f32 %v2438, %v2448
    %v2450 = vmul.f32 %v2449, %v2449
    %v2451 = vsel %vm2439, %v2450, 0.0
    %v2452 = vrot.slane %v2451, 4
    %v2453 = vadd.f32 %v2451, %v2452
    %v2454 = vrot.slane %v2453, 2
    %v2455 = vadd.f32 %v2453, %v2454
    %v2456 = vrot.slane %v2455, 1
    %v2457 = vadd.f32 %v2455, %v2456
    %v2458 = vmul.f32 %v2457, %v2447
    %v2459 = vadd.f32 %v2458, 1e-05
    %v2460 = vrsqrt.pop %v2459
    %v2461 = vmul.f32 %v2449, %v2460
    %v2462 = vld [vmem:[%s14] sm:$0x1]
    %v2464 = vlaneseq
    %v2465 = vshrl.u32 %v2464, 7
    %v2466 = vsub.s32 0, %v2465
    %v2467 = vrot.slane %v2462, %v2466
    %2468 = vrot.lane.b32.xlu0 %v2467, 32
    %v2469 = vpop.permute.xlu0 %2468
    %v2471 = vmul.f32 %v2461, %v2469
    %v2472 = vld [vmem:[%s15] sm:$0x1]
    %v2474 = vlaneseq
    %v2475 = vshrl.u32 %v2474, 7
    %v2476 = vsub.s32 0, %v2475
    %v2477 = vrot.slane %v2472, %v2476
    %2478 = vrot.lane.b32.xlu0 %v2477, 32
    %v2479 = vpop.permute.xlu0 %2478
    %v2481 = vadd.f32 %v2471, %v2479
    %v2482 = vld [vmem:[%s16] sm:$0xff]
    %v2483 = vld [vmem:[%s16 + $0x8] sm:$0xff]
    %v2484 = vld [vmem:[%s16 + $0x10] sm:$0xff]
    %v2485 = vld [vmem:[%s16 + $0x18] sm:$0xff]
    %v2486 = vld [vmem:[%s16 + $0x20] sm:$0xff]
    %v2487 = vld [vmem:[%s16 + $0x28] sm:$0xff]
    %v2488 = vld [vmem:[%s16 + $0x30] sm:$0xff]
    %v2489 = vld [vmem:[%s16 + $0x38] sm:$0xff]
    %2491 = vrot.lane.b32.xlu0 %v2481, 96
    %v2492 = vpop.permute.xlu0 %2491
    %v2493 = vsel %vm198, %v2492, 0
    %2495 = vmatprep.subr.mxu0 %v2483
    %2496 = vmatpush1.msra.mxu0 %v2482
    %2497 = vmatprep.subr.mxu0 %v2485
    %2498 = vmatpush1.msra.mxu0 %v2484
    %2499 = vmatprep.subr.mxu0 %v2487
    %2500 = vmatpush1.msra.mxu0 %v2486
    %2501 = vmatprep.subr.mxu0 %v2489
    %2502 = vmatpush1.msra.mxu0 %v2488
    %2503 = vmatprep.subr.mxu0 0.0
    %2504 = vmatpush1.msra.mxu0 0.0
    %2505 = vmatprep.subr.mxu0 0.0
    %2506 = vmatpush1.msra.mxu0 0.0
    %2507 = vmatprep.subr.mxu0 0.0
    %2508 = vmatpush1.msra.mxu0 0.0
    %2509 = vmatprep.subr.mxu0 0.0
    %2510 = vmatpush1.msra.mxu0 0.0
    %2511 = vmatprep.subr.mxu0 0.0
    %2512 = vmatpush1.msra.mxu0 0.0
    %2513 = vmatprep.subr.mxu0 0.0
    %2514 = vmatpush1.msra.mxu0 0.0
    %2515 = vmatprep.subr.mxu0 0.0
    %2516 = vmatpush1.msra.mxu0 0.0
    %2517 = vmatprep.subr.mxu0 0.0
    %2518 = vmatpush1.msra.mxu0 0.0
    %2519 = vmatprep.subr.mxu0 0.0
    %2520 = vmatpush1.msra.mxu0 0.0
    %2521 = vmatprep.subr.mxu0 0.0
    %2522 = vmatpush1.msra.mxu0 0.0
    %2523 = vmatprep.subr.mxu0 0.0
    %2524 = vmatpush1.msra.mxu0 0.0
    %2525 = vmatprep.subr.mxu0 0.0
    %2526 = vmatpush1.msra.mxu0 0.0
    %2527 = vmatprep.subr.mxu0 0.0
    %2528 = vmatpush1.msra.mxu0 0.0
    %2529 = vmatprep.subr.mxu0 0.0
    %2530 = vmatpush1.msra.mxu0 0.0
    %2531 = vmatprep.subr.mxu0 0.0
    %2532 = vmatpush1.msra.mxu0 0.0
    %2533 = vmatprep.subr.mxu0 0.0
    %2534 = vmatpush1.msra.mxu0 0.0
    %2535 = vmatprep.subr.mxu0 0.0
    %2536 = vmatpush1.msra.mxu0 0.0
    %2537 = vmatprep.subr.mxu0 0.0
    %2538 = vmatpush1.msra.mxu0 0.0
    %2539 = vmatprep.subr.mxu0 0.0
    %2540 = vmatpush1.msra.mxu0 0.0
    %2541 = vmatprep.subr.mxu0 0.0
    %2542 = vmatpush1.msra.mxu0 0.0
    %2543 = vmatprep.subr.mxu0 0.0
    %2544 = vmatpush1.msra.mxu0 0.0
    %2545 = vmatprep.subr.mxu0 0.0
    %2546 = vmatpush1.msra.mxu0 0.0
    %2547 = vmatprep.subr.mxu0 0.0
    %2548 = vmatpush1.msra.mxu0 0.0
    %2549 = vmatprep.subr.mxu0 0.0
    %2550 = vmatpush1.msra.mxu0 0.0
    %2551 = vmatprep.subr.mxu0 0.0
    %2552 = vmatpush1.msra.mxu0 0.0
    %2553 = vmatprep.subr.mxu0 0.0
    %2554 = vmatpush1.msra.mxu0 0.0
    %2555 = vmatprep.subr.mxu0 0.0
    %2556 = vmatpush1.msra.mxu0 0.0
    %2557 = vmatprep.subr.mxu0 0.0
    %2558 = vmatpush1.msra.mxu0 0.0
    %2559 = vmatprep.mubr.f32.mxu0 0.0
    %2560 = vmatmul.mubr.f32.gmra.mrb[0].mxu0 %v2493
    %v2561 = vpop.f32.mrb[0].mxu0
    %v2562 = vadd.f32 0.0, %v2561
    %v2563 = vpop.f32.mrb[0].mxu0
    %2564 = vdwg.mxu0
    %v2565 = vld [vmem:[%s19] sm:$0x1]
    %v2567 = vlaneseq
    %v2568 = vshrl.u32 %v2567, 7
    %v2569 = vsub.s32 0, %v2568
    %v2570 = vrot.slane %v2565, %v2569
    %v2572 = vadd.f32 %v2562, %v2570
    %v2573 = vld [vmem:[%s17] sm:$0x1]
    %v2575 = vlaneseq
    %v2576 = vshrl.u32 %v2575, 7
    %v2577 = vsub.s32 0, %v2576
    %v2578 = vrot.slane %v2573, %v2577
    %v2580 = vadd.f32 %v2578, %v2572
    %v2581 = vxor.u32 %v2580, 2147483648
    %v2582 = vmul.f32 %v2581, 1.442695
    %v2583 = vpow.pop %v2582
    %v2584 = vadd.f32 %v2583, 1.0
    %v2585 = vrcp.pop %v2584
    %v2586 = vmul.f32 1.0, %v2585
    %2588 = vrot.lane.b32.xlu0 %v2572, 64
    %v2589 = vpop.permute.xlu0 %2588
    %v2591 = vmul.f32 %v2586, %v2589
    %2593 = vrot.lane.b32.xlu0 %v2591, 64
    %v2594 = vpop.permute.xlu0 %2593
    %v2596 = vadd.f32 %v2578, %v2594
    %v2597 = vtanh.pop %v2596
    %v2598 = vsub.f32 1.0, %v2586
    %2600 = vrot.lane.b32.xlu0 %v2597, 96
    %v2601 = vpop.permute.xlu0 %2600
    %v2603 = vmul.f32 %v2598, %v2601
    %v2604 = vmul.f32 %v2586, %v2481
    %v2605 = vadd.f32 %v2603, %v2604
    %2607 = vrot.lane.b32.xlu0 %v2605, 96
    %v2608 = vpop.permute.xlu0 %2607
    %v2609 = vsel %vm198, %v2608, 0
    %2611 = vmatprep.subr.mxu0 %v2483
    %2612 = vmatpush1.msra.mxu0 %v2482
    %2613 = vmatprep.subr.mxu0 %v2485
    %2614 = vmatpush1.msra.mxu0 %v2484
    %2615 = vmatprep.subr.mxu0 %v2487
    %2616 = vmatpush1.msra.mxu0 %v2486
    %2617 = vmatprep.subr.mxu0 %v2489
    %2618 = vmatpush1.msra.mxu0 %v2488
    %2619 = vmatprep.subr.mxu0 0.0
    %2620 = vmatpush1.msra.mxu0 0.0
    %2621 = vmatprep.subr.mxu0 0.0
    %2622 = vmatpush1.msra.mxu0 0.0
    %2623 = vmatprep.subr.mxu0 0.0
    %2624 = vmatpush1.msra.mxu0 0.0
    %2625 = vmatprep.subr.mxu0 0.0
    %2626 = vmatpush1.msra.mxu0 0.0
    %2627 = vmatprep.subr.mxu0 0.0
    %2628 = vmatpush1.msra.mxu0 0.0
    %2629 = vmatprep.subr.mxu0 0.0
    %2630 = vmatpush1.msra.mxu0 0.0
    %2631 = vmatprep.subr.mxu0 0.0
    %2632 = vmatpush1.msra.mxu0 0.0
    %2633 = vmatprep.subr.mxu0 0.0
    %2634 = vmatpush1.msra.mxu0 0.0
    %2635 = vmatprep.subr.mxu0 0.0
    %2636 = vmatpush1.msra.mxu0 0.0
    %2637 = vmatprep.subr.mxu0 0.0
    %2638 = vmatpush1.msra.mxu0 0.0
    %2639 = vmatprep.subr.mxu0 0.0
    %2640 = vmatpush1.msra.mxu0 0.0
    %2641 = vmatprep.subr.mxu0 0.0
    %2642 = vmatpush1.msra.mxu0 0.0
    %2643 = vmatprep.subr.mxu0 0.0
    %2644 = vmatpush1.msra.mxu0 0.0
    %2645 = vmatprep.subr.mxu0 0.0
    %2646 = vmatpush1.msra.mxu0 0.0
    %2647 = vmatprep.subr.mxu0 0.0
    %2648 = vmatpush1.msra.mxu0 0.0
    %2649 = vmatprep.subr.mxu0 0.0
    %2650 = vmatpush1.msra.mxu0 0.0
    %2651 = vmatprep.subr.mxu0 0.0
    %2652 = vmatpush1.msra.mxu0 0.0
    %2653 = vmatprep.subr.mxu0 0.0
    %2654 = vmatpush1.msra.mxu0 0.0
    %2655 = vmatprep.subr.mxu0 0.0
    %2656 = vmatpush1.msra.mxu0 0.0
    %2657 = vmatprep.subr.mxu0 0.0
    %2658 = vmatpush1.msra.mxu0 0.0
    %2659 = vmatprep.subr.mxu0 0.0
    %2660 = vmatpush1.msra.mxu0 0.0
    %2661 = vmatprep.subr.mxu0 0.0
    %2662 = vmatpush1.msra.mxu0 0.0
    %2663 = vmatprep.subr.mxu0 0.0
    %2664 = vmatpush1.msra.mxu0 0.0
    %2665 = vmatprep.subr.mxu0 0.0
    %2666 = vmatpush1.msra.mxu0 0.0
    %2667 = vmatprep.subr.mxu0 0.0
    %2668 = vmatpush1.msra.mxu0 0.0
    %2669 = vmatprep.subr.mxu0 0.0
    %2670 = vmatpush1.msra.mxu0 0.0
    %2671 = vmatprep.subr.mxu0 0.0
    %2672 = vmatpush1.msra.mxu0 0.0
    %2673 = vmatprep.subr.mxu0 0.0
    %2674 = vmatpush1.msra.mxu0 0.0
    %2675 = vmatprep.mubr.f32.mxu0 0.0
    %2676 = vmatmul.mubr.f32.gmra.mrb[0].mxu0 %v2609
    %v2677 = vpop.f32.mrb[0].mxu0
    %v2678 = vadd.f32 0.0, %v2677
    %v2679 = vpop.f32.mrb[0].mxu0
    %v2680 = vadd.f32 0.0, %v2679
    %2681 = vdwg.mxu0
    %v2682 = vadd.f32 %v2678, %v2570
    %v2683 = vld [vmem:[%s18] sm:$0x1]
    %v2685 = vlaneseq
    %v2686 = vshrl.u32 %v2685, 7
    %v2687 = vsub.s32 0, %v2686
    %v2688 = vrot.slane %v2683, %v2687
    %v2690 = vadd.f32 %v2680, %v2688
    %v2691 = vadd.f32 %v2690, %v2682
    %v2692 = vxor.u32 %v2691, 2147483648
    %v2693 = vmul.f32 %v2692, 1.442695
    %v2694 = vpow.pop %v2693
    %v2695 = vadd.f32 %v2694, 1.0
    %v2696 = vrcp.pop %v2695
    %v2697 = vmul.f32 1.0, %v2696
    %2699 = vrot.lane.b32.xlu0 %v2682, 64
    %v2700 = vpop.permute.xlu0 %2699
    %v2702 = vmul.f32 %v2697, %v2700
    %2704 = vrot.lane.b32.xlu0 %v2702, 64
    %v2705 = vpop.permute.xlu0 %2704
    %v2707 = vadd.f32 %v2690, %v2705
    %v2708 = vtanh.pop %v2707
    %v2709 = vsub.f32 1.0, %v2697
    %2711 = vrot.lane.b32.xlu0 %v2708, 96
    %v2712 = vpop.permute.xlu0 %2711
    %v2714 = vmul.f32 %v2709, %v2712
    %v2715 = vmul.f32 %v2697, %v2605
    %v2716 = vadd.f32 %v2714, %v2715
    %2718 = vrot.lane.b32.xlu0 %v2716, 96
    %v2719 = vpop.permute.xlu0 %2718
    %v2720 = vsel %vm198, %v2719, 0
    %2722 = vmatprep.subr.mxu0 %v2483
    %2723 = vmatpush1.msra.mxu0 %v2482
    %2724 = vmatprep.subr.mxu0 %v2485
    %2725 = vmatpush1.msra.mxu0 %v2484
    %2726 = vmatprep.subr.mxu0 %v2487
    %2727 = vmatpush1.msra.mxu0 %v2486
    %2728 = vmatprep.subr.mxu0 %v2489
    %2729 = vmatpush1.msra.mxu0 %v2488
    %2730 = vmatprep.subr.mxu0 0.0
    %2731 = vmatpush1.msra.mxu0 0.0
    %2732 = vmatprep.subr.mxu0 0.0
    %2733 = vmatpush1.msra.mxu0 0.0
    %2734 = vmatprep.subr.mxu0 0.0
    %2735 = vmatpush1.msra.mxu0 0.0
    %2736 = vmatprep.subr.mxu0 0.0
    %2737 = vmatpush1.msra.mxu0 0.0
    %2738 = vmatprep.subr.mxu0 0.0
    %2739 = vmatpush1.msra.mxu0 0.0
    %2740 = vmatprep.subr.mxu0 0.0
    %2741 = vmatpush1.msra.mxu0 0.0
    %2742 = vmatprep.subr.mxu0 0.0
    %2743 = vmatpush1.msra.mxu0 0.0
    %2744 = vmatprep.subr.mxu0 0.0
    %2745 = vmatpush1.msra.mxu0 0.0
    %2746 = vmatprep.subr.mxu0 0.0
    %2747 = vmatpush1.msra.mxu0 0.0
    %2748 = vmatprep.subr.mxu0 0.0
    %2749 = vmatpush1.msra.mxu0 0.0
    %2750 = vmatprep.subr.mxu0 0.0
    %2751 = vmatpush1.msra.mxu0 0.0
    %2752 = vmatprep.subr.mxu0 0.0
    %2753 = vmatpush1.msra.mxu0 0.0
    %2754 = vmatprep.subr.mxu0 0.0
    %2755 = vmatpush1.msra.mxu0 0.0
    %2756 = vmatprep.subr.mxu0 0.0
    %2757 = vmatpush1.msra.mxu0 0.0
    %2758 = vmatprep.subr.mxu0 0.0
    %2759 = vmatpush1.msra.mxu0 0.0
    %2760 = vmatprep.subr.mxu0 0.0
    %2761 = vmatpush1.msra.mxu0 0.0
    %2762 = vmatprep.subr.mxu0 0.0
    %2763 = vmatpush1.msra.mxu0 0.0
    %2764 = vmatprep.subr.mxu0 0.0
    %2765 = vmatpush1.msra.mxu0 0.0
    %2766 = vmatprep.subr.mxu0 0.0
    %2767 = vmatpush1.msra.mxu0 0.0
    %2768 = vmatprep.subr.mxu0 0.0
    %2769 = vmatpush1.msra.mxu0 0.0
    %2770 = vmatprep.subr.mxu0 0.0
    %2771 = vmatpush1.msra.mxu0 0.0
    %2772 = vmatprep.subr.mxu0 0.0
    %2773 = vmatpush1.msra.mxu0 0.0
    %2774 = vmatprep.subr.mxu0 0.0
    %2775 = vmatpush1.msra.mxu0 0.0
    %2776 = vmatprep.subr.mxu0 0.0
    %2777 = vmatpush1.msra.mxu0 0.0
    %2778 = vmatprep.subr.mxu0 0.0
    %2779 = vmatpush1.msra.mxu0 0.0
    %2780 = vmatprep.subr.mxu0 0.0
    %2781 = vmatpush1.msra.mxu0 0.0
    %2782 = vmatprep.subr.mxu0 0.0
    %2783 = vmatpush1.msra.mxu0 0.0
    %2784 = vmatprep.subr.mxu0 0.0
    %2785 = vmatpush1.msra.mxu0 0.0
    %2786 = vmatprep.mubr.f32.mxu0 0.0
    %2787 = vmatmul.mubr.f32.gmra.mrb[0].mxu0 %v2720
    %v2788 = vpop.f32.mrb[0].mxu0
    %v2789 = vadd.f32 0.0, %v2788
    %v2790 = vpop.f32.mrb[0].mxu0
    %v2791 = vadd.f32 0.0, %v2790
    %2792 = vdwg.mxu0
    %v2793 = vadd.f32 %v2789, %v2570
    %v2794 = vadd.f32 %v2791, %v2688
    %v2795 = vadd.f32 %v2794, %v2793
    %v2796 = vxor.u32 %v2795, 2147483648
    %v2797 = vmul.f32 %v2796, 1.442695
    %v2798 = vpow.pop %v2797
    %v2799 = vadd.f32 %v2798, 1.0
    %v2800 = vrcp.pop %v2799
    %v2801 = vmul.f32 1.0, %v2800
    %2803 = vrot.lane.b32.xlu0 %v2793, 64
    %v2804 = vpop.permute.xlu0 %2803
    %v2806 = vmul.f32 %v2801, %v2804
    %2808 = vrot.lane.b32.xlu0 %v2806, 64
    %v2809 = vpop.permute.xlu0 %2808
    %v2811 = vadd.f32 %v2794, %v2809
    %v2812 = vtanh.pop %v2811
    %v2813 = vsub.f32 1.0, %v2801
    %2815 = vrot.lane.b32.xlu0 %v2812, 96
    %v2816 = vpop.permute.xlu0 %2815
    %v2818 = vmul.f32 %v2813, %v2816
    %v2819 = vmul.f32 %v2801, %v2716
    %v2820 = vadd.f32 %v2818, %v2819
    %2822 = vrot.lane.b32.xlu0 %v2820, 96
    %v2823 = vpop.permute.xlu0 %2822
    %v2824 = vsel %vm198, %v2823, 0
    %2826 = vmatprep.subr.mxu0 %v2483
    %2827 = vmatpush1.msra.mxu0 %v2482
    %2828 = vmatprep.subr.mxu0 %v2485
    %2829 = vmatpush1.msra.mxu0 %v2484
    %2830 = vmatprep.subr.mxu0 %v2487
    %2831 = vmatpush1.msra.mxu0 %v2486
    %2832 = vmatprep.subr.mxu0 %v2489
    %2833 = vmatpush1.msra.mxu0 %v2488
    %2834 = vmatprep.subr.mxu0 0.0
    %2835 = vmatpush1.msra.mxu0 0.0
    %2836 = vmatprep.subr.mxu0 0.0
    %2837 = vmatpush1.msra.mxu0 0.0
    %2838 = vmatprep.subr.mxu0 0.0
    %2839 = vmatpush1.msra.mxu0 0.0
    %2840 = vmatprep.subr.mxu0 0.0
    %2841 = vmatpush1.msra.mxu0 0.0
    %2842 = vmatprep.subr.mxu0 0.0
    %2843 = vmatpush1.msra.mxu0 0.0
    %2844 = vmatprep.subr.mxu0 0.0
    %2845 = vmatpush1.msra.mxu0 0.0
    %2846 = vmatprep.subr.mxu0 0.0
    %2847 = vmatpush1.msra.mxu0 0.0
    %2848 = vmatprep.subr.mxu0 0.0
    %2849 = vmatpush1.msra.mxu0 0.0
    %2850 = vmatprep.subr.mxu0 0.0
    %2851 = vmatpush1.msra.mxu0 0.0
    %2852 = vmatprep.subr.mxu0 0.0
    %2853 = vmatpush1.msra.mxu0 0.0
    %2854 = vmatprep.subr.mxu0 0.0
    %2855 = vmatpush1.msra.mxu0 0.0
    %2856 = vmatprep.subr.mxu0 0.0
    %2857 = vmatpush1.msra.mxu0 0.0
    %2858 = vmatprep.subr.mxu0 0.0
    %2859 = vmatpush1.msra.mxu0 0.0
    %2860 = vmatprep.subr.mxu0 0.0
    %2861 = vmatpush1.msra.mxu0 0.0
    %2862 = vmatprep.subr.mxu0 0.0
    %2863 = vmatpush1.msra.mxu0 0.0
    %2864 = vmatprep.subr.mxu0 0.0
    %2865 = vmatpush1.msra.mxu0 0.0
    %2866 = vmatprep.subr.mxu0 0.0
    %2867 = vmatpush1.msra.mxu0 0.0
    %2868 = vmatprep.subr.mxu0 0.0
    %2869 = vmatpush1.msra.mxu0 0.0
    %2870 = vmatprep.subr.mxu0 0.0
    %2871 = vmatpush1.msra.mxu0 0.0
    %2872 = vmatprep.subr.mxu0 0.0
    %2873 = vmatpush1.msra.mxu0 0.0
    %2874 = vmatprep.subr.mxu0 0.0
    %2875 = vmatpush1.msra.mxu0 0.0
    %2876 = vmatprep.subr.mxu0 0.0
    %2877 = vmatpush1.msra.mxu0 0.0
    %2878 = vmatprep.subr.mxu0 0.0
    %2879 = vmatpush1.msra.mxu0 0.0
    %2880 = vmatprep.subr.mxu0 0.0
    %2881 = vmatpush1.msra.mxu0 0.0
    %2882 = vmatprep.subr.mxu0 0.0
    %2883 = vmatpush1.msra.mxu0 0.0
    %2884 = vmatprep.subr.mxu0 0.0
    %2885 = vmatpush1.msra.mxu0 0.0
    %2886 = vmatprep.subr.mxu0 0.0
    %2887 = vmatpush1.msra.mxu0 0.0
    %2888 = vmatprep.subr.mxu0 0.0
    %2889 = vmatpush1.msra.mxu0 0.0
    %2890 = vmatprep.mubr.f32.mxu0 0.0
    %2891 = vmatmul.mubr.f32.gmra.mrb[0].mxu0 %v2824
    %v2892 = vpop.f32.mrb[0].mxu0
    %v2893 = vadd.f32 0.0, %v2892
    %v2894 = vpop.f32.mrb[0].mxu0
    %v2895 = vadd.f32 0.0, %v2894
    %2896 = vdwg.mxu0
    %v2897 = vadd.f32 %v2893, %v2570
    %v2898 = vadd.f32 %v2895, %v2688
    %v2899 = vadd.f32 %v2898, %v2897
    %v2900 = vxor.u32 %v2899, 2147483648
    %v2901 = vmul.f32 %v2900, 1.442695
    %v2902 = vpow.pop %v2901
    %v2903 = vadd.f32 %v2902, 1.0
    %v2904 = vrcp.pop %v2903
    %v2905 = vmul.f32 1.0, %v2904
    %2907 = vrot.lane.b32.xlu0 %v2897, 64
    %v2908 = vpop.permute.xlu0 %2907
    %v2910 = vmul.f32 %v2905, %v2908
    %2912 = vrot.lane.b32.xlu0 %v2910, 64
    %v2913 = vpop.permute.xlu0 %2912
    %v2915 = vadd.f32 %v2898, %v2913
    %v2916 = vtanh.pop %v2915
    %v2917 = vsub.f32 1.0, %v2905
    %2919 = vrot.lane.b32.xlu0 %v2916, 96
    %v2920 = vpop.permute.xlu0 %2919
    %v2922 = vmul.f32 %v2917, %v2920
    %v2923 = vmul.f32 %v2905, %v2820
    %v2924 = vadd.f32 %v2922, %v2923
    %2926 = vrot.lane.b32.xlu0 %v2820, 32
    %v2927 = vpop.permute.xlu0 %2926
    %2930 = vrot.lane.b32.xlu0 %v2924, 64
    %v2931 = vpop.permute.xlu0 %2930
    %v2933 = vsel %vm198, %v2608, %v2716
    %v2934 = vsel %vm1147, %v2933, %v2927
    %v2935 = vsel %vm1149, %v2934, %v2931
    %v2936 = vld [vmem:[%s20] sm:$0xff]
    %v2937 = vld [vmem:[%s20 + $0x8] sm:$0xff]
    %v2938 = vld [vmem:[%s20 + $0x10] sm:$0xff]
    %v2939 = vld [vmem:[%s20 + $0x18] sm:$0xff]
    %v2940 = vld [vmem:[%s20 + $0x20] sm:$0xff]
    %v2941 = vld [vmem:[%s20 + $0x28] sm:$0xff]
    %v2942 = vld [vmem:[%s20 + $0x30] sm:$0xff]
    %v2943 = vld [vmem:[%s20 + $0x38] sm:$0xff]
    %v2944 = vld [vmem:[%s20 + $0x40] sm:$0xff]
    %v2945 = vld [vmem:[%s20 + $0x48] sm:$0xff]
    %v2946 = vld [vmem:[%s20 + $0x50] sm:$0xff]
    %v2947 = vld [vmem:[%s20 + $0x58] sm:$0xff]
    %v2948 = vld [vmem:[%s20 + $0x60] sm:$0xff]
    %v2949 = vld [vmem:[%s20 + $0x68] sm:$0xff]
    %v2950 = vld [vmem:[%s20 + $0x70] sm:$0xff]
    %v2951 = vld [vmem:[%s20 + $0x78] sm:$0xff]
    %v2952 = vld [vmem:[#allocation2] sm:$0x1]
    %v2954 = vlaneseq
    %v2955 = vshrl.u32 %v2954, 7
    %v2956 = vsub.s32 0, %v2955
    %v2957 = vrot.slane %v2952, %v2956
    %2958 = vset.pattern.permute.xlu0 0
    %2959 = vperm.xlu0 %2958, %v2957
    %v2960 = vpop.permute.xlu0 %2959
    %2962 = vmatprep.subr.mxu0 0.0
    %2963 = vmatpush1.msra.mxu0 %v2936
    %2964 = vmatprep.subr.mxu0 0.0
    %2965 = vmatpush1.msra.mxu0 %v2937
    %2966 = vmatprep.subr.mxu0 0.0
    %2967 = vmatpush1.msra.mxu0 %v2938
    %2968 = vmatprep.subr.mxu0 0.0
    %2969 = vmatpush1.msra.mxu0 %v2939
    %2970 = vmatprep.subr.mxu0 0.0
    %2971 = vmatpush1.msra.mxu0 %v2940
    %2972 = vmatprep.subr.mxu0 0.0
    %2973 = vmatpush1.msra.mxu0 %v2941
    %2974 = vmatprep.subr.mxu0 0.0
    %2975 = vmatpush1.msra.mxu0 %v2942
    %2976 = vmatprep.subr.mxu0 0.0
    %2977 = vmatpush1.msra.mxu0 %v2943
    %2978 = vmatprep.subr.mxu0 0.0
    %2979 = vmatpush1.msra.mxu0 %v2944
    %2980 = vmatprep.subr.mxu0 0.0
    %2981 = vmatpush1.msra.mxu0 %v2945
    %2982 = vmatprep.subr.mxu0 0.0
    %2983 = vmatpush1.msra.mxu0 %v2946
    %2984 = vmatprep.subr.mxu0 0.0
    %2985 = vmatpush1.msra.mxu0 %v2947
    %2986 = vmatprep.subr.mxu0 0.0
    %2987 = vmatpush1.msra.mxu0 %v2948
    %2988 = vmatprep.subr.mxu0 0.0
    %2989 = vmatpush1.msra.mxu0 %v2949
    %2990 = vmatprep.subr.mxu0 0.0
    %2991 = vmatpush1.msra.mxu0 %v2950
    %2992 = vmatprep.subr.mxu0 0.0
    %2993 = vmatpush1.msra.mxu0 %v2951
    %2994 = vmatprep.subr.mxu0 0.0
    %2995 = vmatpush1.msra.mxu0 0.0
    %2996 = vmatprep.subr.mxu0 0.0
    %2997 = vmatpush1.msra.mxu0 0.0
    %2998 = vmatprep.subr.mxu0 0.0
    %2999 = vmatpush1.msra.mxu0 0.0
    %3000 = vmatprep.subr.mxu0 0.0
    %3001 = vmatpush1.msra.mxu0 0.0
    %3002 = vmatprep.subr.mxu0 0.0
    %3003 = vmatpush1.msra.mxu0 0.0
    %3004 = vmatprep.subr.mxu0 0.0
    %3005 = vmatpush1.msra.mxu0 0.0
    %3006 = vmatprep.subr.mxu0 0.0
    %3007 = vmatpush1.msra.mxu0 0.0
    %3008 = vmatprep.subr.mxu0 0.0
    %3009 = vmatpush1.msra.mxu0 0.0
    %3010 = vmatprep.subr.mxu0 0.0
    %3011 = vmatpush1.msra.mxu0 0.0
    %3012 = vmatprep.subr.mxu0 0.0
    %3013 = vmatpush1.msra.mxu0 0.0
    %3014 = vmatprep.subr.mxu0 0.0
    %3015 = vmatpush1.msra.mxu0 0.0
    %3016 = vmatprep.subr.mxu0 0.0
    %3017 = vmatpush1.msra.mxu0 0.0
    %3018 = vmatprep.subr.mxu0 0.0
    %3019 = vmatpush1.msra.mxu0 0.0
    %3020 = vmatprep.subr.mxu0 0.0
    %3021 = vmatpush1.msra.mxu0 0.0
    %3022 = vmatprep.subr.mxu0 0.0
    %3023 = vmatpush1.msra.mxu0 0.0
    %3024 = vmatprep.subr.mxu0 0.0
    %3025 = vmatpush1.msra.mxu0 0.0
    %3026 = vmatprep.mubr.f32.mxu0 0.0
    %3027 = vmatmul.mubr.f32.gmra.mrb[0].mxu0 %v2935
    %v3028 = vpop.f32.mrb[0].mxu0
    %v3029 = vadd.f32 %v2960, %v3028
    %v3030 = vpop.f32.mrb[0].mxu0
    %3031 = vdwg.mxu0
    %3033 = vrot.lane.b32.xlu0 %v1390, 4
    %v3034 = vpop.permute.xlu0 %3033
    %3036 = vrot.lane.b32.xlu0 %v1410, 12
    %v3037 = vpop.permute.xlu0 %3036
    %v3039 = vsel %vm101, %v3029, %v3034
    %vm3040 = vcmask 97280
    %v3041 = vsel %vm3040, %v3039, %v3037
    %vm3042 = vcmask 162816
    %v3043 = vsel %vm3042, %v3041, 0.0
    %3044 = vst [vmem:[#allocation6] sm:$0x3] %v3043
    // Predicated region
    $region94: #{tpu_custom_call.1} parent=1 // pred_check
      _
    $region95: #{tpu_custom_call.1} parent=1 // pred_check_branch
      %3046 = sbr.rel (0) target = $region97
    $region96: #{tpu_custom_call.1} parent=1 // pred_region
      %s3048 = ssub.s32 32, 32
      %3049 = vsyncadd [#allocation5], %s3048
      %s3051 = sshll.u32 [#allocation6], 4
      %s3052 = int_to_ptr.vmem [resolvable:$true] %s3051
      %3054 = dma.vmem_to_hbm [thread:$0]  %s3052, 32, %s22, [#allocation5]
    $region97: #{tpu_custom_call.1} parent=1 // pred_fallthru
      _
    // Predicated region
    $region98: #{tpu_custom_call.1} parent=1 // pred_check
      _
    $region99: #{tpu_custom_call.1} parent=1 // pred_check_branch
      %3056 = sbr.rel (0) target = $region101
    $region100: #{tpu_custom_call.1} parent=1 // pred_region
      %3057 = dma.done [#allocation5], 32
    $region101: #{tpu_custom_call.1} parent=1 // pred_fallthru
      _
    %3058 = vsyncpa [#allocation4], 1
    %3059 = vsyncpa [#allocation5], 1

</llo_original>
